<compile_context>
chip_gen: v7x
topology: tpu7x:2x2x1
jax: 0.10.0
libtpu: 0.0.40
codegen_flags: <defaults>
</compile_context>

<pallas_src>
import math

import jax
import jax.numpy as jnp
from jax.experimental import pallas as pl
from jax.experimental.pallas import tpu as pltpu

# ----------------------------- config ---------------------------------------
n_embd = 64
block_size = 32
n_head = 4
n_layer = 4
vocab_size = 65              # len(sorted(set(text))) — synthetic choice
head_size = n_embd // n_head
LN_EPS = 1e-5                # torch.nn.LayerNorm default
VOCAB_PAD = 128              # lane-dense lm_head output width
MATMUL_DTYPE = jnp.bfloat16  # MXU operand dtype (f32 accumulation everywhere)


# --------------------------- kernel helpers ----------------------------------
def _layernorm(x, gamma, beta):
    # x: (T, C) f32 ; gamma/beta: (1, C) f32
    mu = jnp.mean(x, axis=-1, keepdims=True)
    xc = x - mu
    var = jnp.mean(xc * xc, axis=-1, keepdims=True)
    return xc * jax.lax.rsqrt(var + LN_EPS) * gamma + beta


# --------------------------- fused GPT kernel ---------------------------------
def gpt_kernel(x_ref,
               ln1g_ref, ln1b_ref, wqkv_ref, wp_ref, bp_ref,
               ln2g_ref, ln2b_ref, w1_ref, b1_ref, w2_ref, b2_ref,
               lnfg_ref, lnfb_ref, lmw_ref, lmb_ref,
               out_ref, heads_scr):
    x = x_ref[...]                                   # (T, C) f32, one sample
    T = x.shape[0]

    # Additive causal mask, built in-kernel (cheap iota/compare on the VPU).
    row = jax.lax.broadcasted_iota(jnp.int32, (T, T), 0)
    col = jax.lax.broadcasted_iota(jnp.int32, (T, T), 1)
    mask = jnp.where(row >= col, 0.0, -jnp.inf).astype(jnp.float32)

    scale = 1.0 / math.sqrt(n_embd)                  # reference scales by sqrt(C)

    for l in range(n_layer):                         # static unroll; weights resident
        # ---- x = x + MultiHeadAttention(LayerNorm(x)) ----
        h = _layernorm(x, ln1g_ref[l], ln1b_ref[l])
        qkv = jnp.dot(h.astype(MATMUL_DTYPE), wqkv_ref[l],
                      preferred_element_type=jnp.float32)          # (T, 3C)

        for hi in range(n_head):                     # static per-head loop
            q = qkv[:, hi * head_size:(hi + 1) * head_size]
            k = qkv[:, n_embd + hi * head_size:n_embd + (hi + 1) * head_size]
            v = qkv[:, 2 * n_embd + hi * head_size:2 * n_embd + (hi + 1) * head_size]
            # QK^T with the transpose absorbed into the contraction, bf16 operands
            s = jax.lax.dot_general(
                q.astype(MATMUL_DTYPE), k.astype(MATMUL_DTYPE),
                (((1,), (1,)), ((), ())),
                preferred_element_type=jnp.float32)                 # (T, T)
            s = s * scale + mask
            s = s - jnp.max(s, axis=-1, keepdims=True)
            p = jnp.exp(s)
            p = p * pl.reciprocal(jnp.sum(p, axis=-1, keepdims=True), approx=True)
            o = jnp.dot(p.astype(MATMUL_DTYPE), v.astype(MATMUL_DTYPE),
                        preferred_element_type=jnp.float32)         # (T, hs)
            # assemble head output at static lane offsets (no concatenate,
            # no skinny K=16 accumulate matmuls)
            heads_scr[:, hi * head_size:(hi + 1) * head_size] = o

        att = jnp.dot(heads_scr[...].astype(MATMUL_DTYPE), wp_ref[l],
                      preferred_element_type=jnp.float32) + bp_ref[l]
        x = x + att

        # ---- x = x + FeedForward(LayerNorm(x)) ----
        h2 = _layernorm(x, ln2g_ref[l], ln2b_ref[l])
        ff = jnp.dot(h2.astype(MATMUL_DTYPE), w1_ref[l],
                     preferred_element_type=jnp.float32) + b1_ref[l]
        ff = jnp.maximum(ff, 0.0)                    # ReLU
        ff = jnp.dot(ff.astype(MATMUL_DTYPE), w2_ref[l],
                     preferred_element_type=jnp.float32) + b2_ref[l]
        x = x + ff

    # ---- final LayerNorm + lm_head (lane-padded to 128) ----
    hf = _layernorm(x, lnfg_ref[...], lnfb_ref[...])
    logits = jnp.dot(hf.astype(MATMUL_DTYPE), lmw_ref[...],
                     preferred_element_type=jnp.float32) + lmb_ref[...]
    out_ref[...] = logits.astype(out_ref.dtype)      # (T, VOCAB_PAD) lane-dense


# --------------------------- pallas_call wrapper -------------------------------
def run_gpt(x, params):
    # x: (B, T, C) f32 embedded inputs
    B, T, C = x.shape
    VP = params["lm_w_p"].shape[1]

    def const_spec(shape):
        # fully resident block, constant across the batch grid axis
        nd = len(shape)
        return pl.BlockSpec(tuple(shape), lambda b, _nd=nd: (0,) * _nd)

    in_specs = [
        pl.BlockSpec((None, T, C), lambda b: (b, 0, 0)),          # x (per sample)
        const_spec(params["ln1_g"].shape), const_spec(params["ln1_b"].shape),
        const_spec(params["wqkv"].shape), const_spec(params["wp"].shape),
        const_spec(params["bp"].shape),
        const_spec(params["ln2_g"].shape), const_spec(params["ln2_b"].shape),
        const_spec(params["w1"].shape), const_spec(params["b1"].shape),
        const_spec(params["w2"].shape), const_spec(params["b2"].shape),
        const_spec(params["lnf_g"].shape), const_spec(params["lnf_b"].shape),
        const_spec(params["lm_w_p"].shape), const_spec(params["lm_b_p"].shape),
    ]

    return pl.pallas_call(
        gpt_kernel,
        out_shape=jax.ShapeDtypeStruct((B, T, VP), jnp.float32),
        grid_spec=pltpu.PrefetchScalarGridSpec(
            num_scalar_prefetch=0,
            grid=(B,),                               # batch axis, parallel (v7x 2 TCs)
            in_specs=in_specs,
            out_specs=pl.BlockSpec((None, T, VP), lambda b: (b, 0, 0)),
            scratch_shapes=[pltpu.VMEM((T, C), jnp.float32)],     # head assembly
        ),
        compiler_params=pltpu.CompilerParams(
            dimension_semantics=("parallel",)),
    )(x,
      params["ln1_g"], params["ln1_b"], params["wqkv"], params["wp"],
      params["bp"], params["ln2_g"], params["ln2_b"], params["w1"],
      params["b1"], params["w2"], params["b2"], params["lnf_g"],
      params["lnf_b"], params["lm_w_p"], params["lm_b_p"])


# --------------------------- parameter init -----------------------------------
def init_params(key):
    ks = iter(jax.random.split(key, 16))

    def rnd(shape, scale=0.02, dtype=jnp.float32):
        return (scale * jax.random.normal(next(ks), shape)).astype(dtype)

    L, C, H4, V = n_layer, n_embd, 4 * n_embd, vocab_size
    params = {
        "tok_emb": rnd((V, C)),
        "pos_emb": rnd((block_size, C)),
        # per-layer params stacked along a leading (n_layer, ...) axis;
        # fused QKV weight: columns [0:C]=Q, [C:2C]=K, [2C:3C]=V
        "ln1_g": jnp.ones((L, 1, C), jnp.float32),
        "ln1_b": jnp.zeros((L, 1, C), jnp.float32),
        "wqkv": rnd((L, C, 3 * C), dtype=MATMUL_DTYPE),
        "wp": rnd((L, C, C), dtype=MATMUL_DTYPE),
        "bp": jnp.zeros((L, 1, C), jnp.float32),
        "ln2_g": jnp.ones((L, 1, C), jnp.float32),
        "ln2_b": jnp.zeros((L, 1, C), jnp.float32),
        "w1": rnd((L, C, H4), dtype=MATMUL_DTYPE),
        "b1": jnp.zeros((L, 1, H4), jnp.float32),
        "w2": rnd((L, H4, C), dtype=MATMUL_DTYPE),
        "b2": jnp.zeros((L, 1, C), jnp.float32),
        "lnf_g": jnp.ones((1, C), jnp.float32),
        "lnf_b": jnp.zeros((1, C), jnp.float32),
    }
    # lm_head padded to 128 lanes (lane-dense store); sliced back outside.
    lm_w = rnd((C, V), dtype=MATMUL_DTYPE)
    params["lm_w_p"] = jnp.zeros((C, VOCAB_PAD), MATMUL_DTYPE).at[:, :V].set(lm_w)
    params["lm_b_p"] = jnp.zeros((1, VOCAB_PAD), jnp.float32)
    return params


# --------------------------- full forward -------------------------------------
def gpt_forward(params, idx):
    # idx: (B, T) int32 token ids, T <= block_size
    B, T = idx.shape
    # embedding gather + positional add: pure table lookup, stays in JAX glue
    tok = jnp.take(params["tok_emb"], idx, axis=0)            # (B, T, C)
    pos = params["pos_emb"][:T][None, :, :]                   # (1, T, C)
    x = (tok + pos).astype(jnp.float32)                       # (B, T, C)

    logits_p = run_gpt(x, params)                             # (B, T, 128)
    logits = logits_p[:, :, :vocab_size]
    loss = None                                               # targets=None path
    # TODO(synk): cross-entropy loss path (targets != None) not implemented.
    return logits, loss


# --------------------------- main ---------------------------------------------
if __name__ == "__main__":
    key = jax.random.PRNGKey(0)
    pkey, ikey = jax.random.split(key)
    params = init_params(pkey)

    B, T = 2, 8
    idx = jax.random.randint(ikey, (B, T), 0, vocab_size, dtype=jnp.int32)

    logits, loss = gpt_forward(params, idx)
    logits = jax.block_until_ready(logits)

    assert logits.shape == (B, T, vocab_size)
    assert bool(jnp.all(jnp.isfinite(logits)))
    print("KERNEL_OK")
</pallas_src>

<mosaic_0001>
module attributes {stable_mosaic.version = 11 : i64} {
  func.func @gpt_kernel(%arg0: i32, %arg1: memref<1x8x64xf32, #tpu.memory_space<vmem>>, %arg2: memref<4x1x64xf32, #tpu.memory_space<vmem>>, %arg3: memref<4x1x64xf32, #tpu.memory_space<vmem>>, %arg4: memref<4x64x192xbf16, #tpu.memory_space<vmem>>, %arg5: memref<4x64x64xbf16, #tpu.memory_space<vmem>>, %arg6: memref<4x1x64xf32, #tpu.memory_space<vmem>>, %arg7: memref<4x1x64xf32, #tpu.memory_space<vmem>>, %arg8: memref<4x1x64xf32, #tpu.memory_space<vmem>>, %arg9: memref<4x64x256xbf16, #tpu.memory_space<vmem>>, %arg10: memref<4x1x256xf32, #tpu.memory_space<vmem>>, %arg11: memref<4x256x64xbf16, #tpu.memory_space<vmem>>, %arg12: memref<4x1x64xf32, #tpu.memory_space<vmem>>, %arg13: memref<1x64xf32, #tpu.memory_space<vmem>>, %arg14: memref<1x64xf32, #tpu.memory_space<vmem>>, %arg15: memref<64x128xbf16, #tpu.memory_space<vmem>>, %arg16: memref<1x128xf32, #tpu.memory_space<vmem>>, %arg17: memref<1x8x128xf32, #tpu.memory_space<vmem>>, %arg18: memref<8x64xf32, #tpu.memory_space<vmem>>) attributes {dimension_semantics = [#tpu.dimension_semantics<parallel>], iteration_bounds = array<i64: 2>, scalar_prefetch = 0 : i64, scratch_operands = 1 : i64, tpu.core_type = #tpu.core_type<tc>, window_params = [{transform_indices = @transform_0, window_bounds = array<i64: 1, 8, 64>}, {pipeline_mode = #tpu.pipeline_mode<synchronous>, transform_indices = @transform_1, window_bounds = array<i64: 4, 1, 64>}, {pipeline_mode = #tpu.pipeline_mode<synchronous>, transform_indices = @transform_2, window_bounds = array<i64: 4, 1, 64>}, {pipeline_mode = #tpu.pipeline_mode<synchronous>, transform_indices = @transform_3, window_bounds = array<i64: 4, 64, 192>}, {pipeline_mode = #tpu.pipeline_mode<synchronous>, transform_indices = @transform_4, window_bounds = array<i64: 4, 64, 64>}, {pipeline_mode = #tpu.pipeline_mode<synchronous>, transform_indices = @transform_5, window_bounds = array<i64: 4, 1, 64>}, {pipeline_mode = #tpu.pipeline_mode<synchronous>, transform_indices = @transform_6, window_bounds = array<i64: 4, 1, 64>}, {pipeline_mode = #tpu.pipeline_mode<synchronous>, transform_indices = @transform_7, window_bounds = array<i64: 4, 1, 64>}, {pipeline_mode = #tpu.pipeline_mode<synchronous>, transform_indices = @transform_8, window_bounds = array<i64: 4, 64, 256>}, {pipeline_mode = #tpu.pipeline_mode<synchronous>, transform_indices = @transform_9, window_bounds = array<i64: 4, 1, 256>}, {pipeline_mode = #tpu.pipeline_mode<synchronous>, transform_indices = @transform_10, window_bounds = array<i64: 4, 256, 64>}, {pipeline_mode = #tpu.pipeline_mode<synchronous>, transform_indices = @transform_11, window_bounds = array<i64: 4, 1, 64>}, {pipeline_mode = #tpu.pipeline_mode<synchronous>, transform_indices = @transform_12, window_bounds = array<i64: 1, 64>}, {pipeline_mode = #tpu.pipeline_mode<synchronous>, transform_indices = @transform_13, window_bounds = array<i64: 1, 64>}, {pipeline_mode = #tpu.pipeline_mode<synchronous>, transform_indices = @transform_14, window_bounds = array<i64: 64, 128>}, {pipeline_mode = #tpu.pipeline_mode<synchronous>, transform_indices = @transform_15, window_bounds = array<i64: 1, 128>}, {transform_indices = @transform_16, window_bounds = array<i64: 1, 8, 128>}]} {
    %c0 = arith.constant 0 : index
    %c0_0 = arith.constant 0 : index
    %c0_1 = arith.constant 0 : index
    %0 = vector.load %arg1[%c0, %c0_0, %c0_1] : memref<1x8x64xf32, #tpu.memory_space<vmem>>, vector<1x8x64xf32>
    %1 = vector.shape_cast %0 : vector<1x8x64xf32> to vector<8x64xf32>
    %2 = tpu.iota {dimensions = array<i32: 0>} : vector<8x8xi32>
    %3 = tpu.iota {dimensions = array<i32: 1>} : vector<8x8xi32>
    %4 = arith.cmpi sge, %2, %3 : vector<8x8xi32>
    %cst = arith.constant 0.000000e+00 : f32
    %cst_2 = arith.constant 0xFF800000 : f32
    %5 = vector.broadcast %cst : f32 to vector<8x8xf32>
    %6 = vector.broadcast %cst_2 : f32 to vector<8x8xf32>
    %7 = arith.select %4, %5, %6 : vector<8x8xi1>, vector<8x8xf32>
    %c0_3 = arith.constant 0 : index
    %c0_4 = arith.constant 0 : index
    %c0_5 = arith.constant 0 : index
    %8 = vector.load %arg2[%c0_3, %c0_4, %c0_5] : memref<4x1x64xf32, #tpu.memory_space<vmem>>, vector<1x1x64xf32>
    %9 = vector.shape_cast %8 : vector<1x1x64xf32> to vector<1x64xf32>
    %c0_6 = arith.constant 0 : index
    %c0_7 = arith.constant 0 : index
    %c0_8 = arith.constant 0 : index
    %10 = vector.load %arg3[%c0_6, %c0_7, %c0_8] : memref<4x1x64xf32, #tpu.memory_space<vmem>>, vector<1x1x64xf32>
    %11 = vector.shape_cast %10 : vector<1x1x64xf32> to vector<1x64xf32>
    %cst_9 = arith.constant dense<0.000000e+00> : vector<8xf32>
    %12 = vector.multi_reduction <add>, %1, %cst_9 [1] : vector<8x64xf32> to vector<8xf32>
    %13 = vector.shape_cast %12 : vector<8xf32> to vector<8x1xf32>
    %cst_10 = arith.constant 6.400000e+01 : f32
    %14 = vector.broadcast %cst_10 : f32 to vector<8x1xf32>
    %15 = arith.divf %13, %14 : vector<8x1xf32>
    %16 = vector.broadcast %15 : vector<8x1xf32> to vector<8x64xf32>
    %17 = arith.subf %1, %16 : vector<8x64xf32>
    %18 = arith.mulf %17, %17 : vector<8x64xf32>
    %cst_11 = arith.constant dense<0.000000e+00> : vector<8xf32>
    %19 = vector.multi_reduction <add>, %18, %cst_11 [1] : vector<8x64xf32> to vector<8xf32>
    %20 = vector.shape_cast %19 : vector<8xf32> to vector<8x1xf32>
    %cst_12 = arith.constant 6.400000e+01 : f32
    %21 = vector.broadcast %cst_12 : f32 to vector<8x1xf32>
    %22 = arith.divf %20, %21 : vector<8x1xf32>
    %cst_13 = arith.constant 9.99999974E-6 : f32
    %23 = vector.broadcast %cst_13 : f32 to vector<8x1xf32>
    %24 = arith.addf %22, %23 : vector<8x1xf32>
    %25 = math.rsqrt %24 : vector<8x1xf32>
    %26 = vector.broadcast %25 : vector<8x1xf32> to vector<8x64xf32>
    %27 = arith.mulf %17, %26 : vector<8x64xf32>
    %28 = vector.broadcast %9 : vector<1x64xf32> to vector<8x64xf32>
    %29 = arith.mulf %27, %28 : vector<8x64xf32>
    %30 = vector.broadcast %11 : vector<1x64xf32> to vector<8x64xf32>
    %31 = arith.addf %29, %30 : vector<8x64xf32>
    %32 = arith.truncf %31 : vector<8x64xf32> to vector<8x64xbf16>
    %c0_14 = arith.constant 0 : index
    %c0_15 = arith.constant 0 : index
    %c0_16 = arith.constant 0 : index
    %33 = vector.load %arg4[%c0_14, %c0_15, %c0_16] : memref<4x64x192xbf16, #tpu.memory_space<vmem>>, vector<1x64x192xbf16>
    %34 = vector.shape_cast %33 : vector<1x64x192xbf16> to vector<64x192xbf16>
    %cst_17 = arith.constant dense<0.000000e+00> : vector<8x192xf32>
    %35 = tpu.matmul %32, %34, %cst_17 {dimension_numbers = #tpu.dot_dimension_numbers<[1], [0], [0], [1], [0, 0, 1, 1], [], []>} : vector<8x64xbf16>, vector<64x192xbf16>, vector<8x192xf32> -> vector<8x192xf32>
    %36 = vector.extract_strided_slice %35 {offsets = [0, 0], sizes = [8, 16], strides = [1, 1]} : vector<8x192xf32> to vector<8x16xf32>
    %37 = vector.extract_strided_slice %35 {offsets = [0, 64], sizes = [8, 16], strides = [1, 1]} : vector<8x192xf32> to vector<8x16xf32>
    %38 = vector.extract_strided_slice %35 {offsets = [0, 128], sizes = [8, 16], strides = [1, 1]} : vector<8x192xf32> to vector<8x16xf32>
    %39 = arith.truncf %36 : vector<8x16xf32> to vector<8x16xbf16>
    %40 = arith.truncf %37 : vector<8x16xf32> to vector<8x16xbf16>
    %cst_18 = arith.constant dense<0.000000e+00> : vector<8x8xf32>
    %41 = tpu.matmul %39, %40, %cst_18 {dimension_numbers = #tpu.dot_dimension_numbers<[1], [1], [0], [0], [0, 0, 1, 0], [], []>} : vector<8x16xbf16>, vector<8x16xbf16>, vector<8x8xf32> -> vector<8x8xf32>
    %cst_19 = arith.constant 1.250000e-01 : f32
    %42 = vector.broadcast %cst_19 : f32 to vector<8x8xf32>
    %43 = arith.mulf %41, %42 : vector<8x8xf32>
    %44 = arith.addf %43, %7 : vector<8x8xf32>
    %cst_20 = arith.constant dense<0xFF800000> : vector<8xf32>
    %45 = vector.multi_reduction <maximumf>, %44, %cst_20 [1] : vector<8x8xf32> to vector<8xf32>
    %46 = vector.shape_cast %45 : vector<8xf32> to vector<8x1xf32>
    %47 = vector.broadcast %46 : vector<8x1xf32> to vector<8x8xf32>
    %48 = arith.subf %44, %47 : vector<8x8xf32>
    %49 = math.exp %48 : vector<8x8xf32>
    %cst_21 = arith.constant dense<0.000000e+00> : vector<8xf32>
    %50 = vector.multi_reduction <add>, %49, %cst_21 [1] : vector<8x8xf32> to vector<8xf32>
    %51 = vector.shape_cast %50 : vector<8xf32> to vector<8x1xf32>
    %52 = tpu.reciprocal %51 {approx = true} : vector<8x1xf32> -> vector<8x1xf32>
    %53 = vector.broadcast %52 : vector<8x1xf32> to vector<8x8xf32>
    %54 = arith.mulf %49, %53 : vector<8x8xf32>
    %55 = arith.truncf %54 : vector<8x8xf32> to vector<8x8xbf16>
    %56 = arith.truncf %38 : vector<8x16xf32> to vector<8x16xbf16>
    %cst_22 = arith.constant dense<0.000000e+00> : vector<8x16xf32>
    %57 = tpu.matmul %55, %56, %cst_22 {dimension_numbers = #tpu.dot_dimension_numbers<[1], [0], [0], [1], [0, 0, 1, 1], [], []>} : vector<8x8xbf16>, vector<8x16xbf16>, vector<8x16xf32> -> vector<8x16xf32>
    %c0_23 = arith.constant 0 : index
    %c0_24 = arith.constant 0 : index
    %58 = vector.load %arg18[%c0_23, %c0_24] : memref<8x64xf32, #tpu.memory_space<vmem>>, vector<8x16xf32>
    tpu.vector_store %arg18[%c0_23, %c0_24], %57 {strides = array<i32>} : memref<8x64xf32, #tpu.memory_space<vmem>>, vector<8x16xf32>,
    %59 = vector.extract_strided_slice %35 {offsets = [0, 16], sizes = [8, 16], strides = [1, 1]} : vector<8x192xf32> to vector<8x16xf32>
    %60 = vector.extract_strided_slice %35 {offsets = [0, 80], sizes = [8, 16], strides = [1, 1]} : vector<8x192xf32> to vector<8x16xf32>
    %61 = vector.extract_strided_slice %35 {offsets = [0, 144], sizes = [8, 16], strides = [1, 1]} : vector<8x192xf32> to vector<8x16xf32>
    %62 = arith.truncf %59 : vector<8x16xf32> to vector<8x16xbf16>
    %63 = arith.truncf %60 : vector<8x16xf32> to vector<8x16xbf16>
    %cst_25 = arith.constant dense<0.000000e+00> : vector<8x8xf32>
    %64 = tpu.matmul %62, %63, %cst_25 {dimension_numbers = #tpu.dot_dimension_numbers<[1], [1], [0], [0], [0, 0, 1, 0], [], []>} : vector<8x16xbf16>, vector<8x16xbf16>, vector<8x8xf32> -> vector<8x8xf32>
    %cst_26 = arith.constant 1.250000e-01 : f32
    %65 = vector.broadcast %cst_26 : f32 to vector<8x8xf32>
    %66 = arith.mulf %64, %65 : vector<8x8xf32>
    %67 = arith.addf %66, %7 : vector<8x8xf32>
    %cst_27 = arith.constant dense<0xFF800000> : vector<8xf32>
    %68 = vector.multi_reduction <maximumf>, %67, %cst_27 [1] : vector<8x8xf32> to vector<8xf32>
    %69 = vector.shape_cast %68 : vector<8xf32> to vector<8x1xf32>
    %70 = vector.broadcast %69 : vector<8x1xf32> to vector<8x8xf32>
    %71 = arith.subf %67, %70 : vector<8x8xf32>
    %72 = math.exp %71 : vector<8x8xf32>
    %cst_28 = arith.constant dense<0.000000e+00> : vector<8xf32>
    %73 = vector.multi_reduction <add>, %72, %cst_28 [1] : vector<8x8xf32> to vector<8xf32>
    %74 = vector.shape_cast %73 : vector<8xf32> to vector<8x1xf32>
    %75 = tpu.reciprocal %74 {approx = true} : vector<8x1xf32> -> vector<8x1xf32>
    %76 = vector.broadcast %75 : vector<8x1xf32> to vector<8x8xf32>
    %77 = arith.mulf %72, %76 : vector<8x8xf32>
    %78 = arith.truncf %77 : vector<8x8xf32> to vector<8x8xbf16>
    %79 = arith.truncf %61 : vector<8x16xf32> to vector<8x16xbf16>
    %cst_29 = arith.constant dense<0.000000e+00> : vector<8x16xf32>
    %80 = tpu.matmul %78, %79, %cst_29 {dimension_numbers = #tpu.dot_dimension_numbers<[1], [0], [0], [1], [0, 0, 1, 1], [], []>} : vector<8x8xbf16>, vector<8x16xbf16>, vector<8x16xf32> -> vector<8x16xf32>
    %c0_30 = arith.constant 0 : index
    %c16 = arith.constant 16 : index
    %81 = vector.load %arg18[%c0_30, %c16] : memref<8x64xf32, #tpu.memory_space<vmem>>, vector<8x16xf32>
    tpu.vector_store %arg18[%c0_30, %c16], %80 {strides = array<i32>} : memref<8x64xf32, #tpu.memory_space<vmem>>, vector<8x16xf32>,
    %82 = vector.extract_strided_slice %35 {offsets = [0, 32], sizes = [8, 16], strides = [1, 1]} : vector<8x192xf32> to vector<8x16xf32>
    %83 = vector.extract_strided_slice %35 {offsets = [0, 96], sizes = [8, 16], strides = [1, 1]} : vector<8x192xf32> to vector<8x16xf32>
    %84 = vector.extract_strided_slice %35 {offsets = [0, 160], sizes = [8, 16], strides = [1, 1]} : vector<8x192xf32> to vector<8x16xf32>
    %85 = arith.truncf %82 : vector<8x16xf32> to vector<8x16xbf16>
    %86 = arith.truncf %83 : vector<8x16xf32> to vector<8x16xbf16>
    %cst_31 = arith.constant dense<0.000000e+00> : vector<8x8xf32>
    %87 = tpu.matmul %85, %86, %cst_31 {dimension_numbers = #tpu.dot_dimension_numbers<[1], [1], [0], [0], [0, 0, 1, 0], [], []>} : vector<8x16xbf16>, vector<8x16xbf16>, vector<8x8xf32> -> vector<8x8xf32>
    %cst_32 = arith.constant 1.250000e-01 : f32
    %88 = vector.broadcast %cst_32 : f32 to vector<8x8xf32>
    %89 = arith.mulf %87, %88 : vector<8x8xf32>
    %90 = arith.addf %89, %7 : vector<8x8xf32>
    %cst_33 = arith.constant dense<0xFF800000> : vector<8xf32>
    %91 = vector.multi_reduction <maximumf>, %90, %cst_33 [1] : vector<8x8xf32> to vector<8xf32>
    %92 = vector.shape_cast %91 : vector<8xf32> to vector<8x1xf32>
    %93 = vector.broadcast %92 : vector<8x1xf32> to vector<8x8xf32>
    %94 = arith.subf %90, %93 : vector<8x8xf32>
    %95 = math.exp %94 : vector<8x8xf32>
    %cst_34 = arith.constant dense<0.000000e+00> : vector<8xf32>
    %96 = vector.multi_reduction <add>, %95, %cst_34 [1] : vector<8x8xf32> to vector<8xf32>
    %97 = vector.shape_cast %96 : vector<8xf32> to vector<8x1xf32>
    %98 = tpu.reciprocal %97 {approx = true} : vector<8x1xf32> -> vector<8x1xf32>
    %99 = vector.broadcast %98 : vector<8x1xf32> to vector<8x8xf32>
    %100 = arith.mulf %95, %99 : vector<8x8xf32>
    %101 = arith.truncf %100 : vector<8x8xf32> to vector<8x8xbf16>
    %102 = arith.truncf %84 : vector<8x16xf32> to vector<8x16xbf16>
    %cst_35 = arith.constant dense<0.000000e+00> : vector<8x16xf32>
    %103 = tpu.matmul %101, %102, %cst_35 {dimension_numbers = #tpu.dot_dimension_numbers<[1], [0], [0], [1], [0, 0, 1, 1], [], []>} : vector<8x8xbf16>, vector<8x16xbf16>, vector<8x16xf32> -> vector<8x16xf32>
    %c0_36 = arith.constant 0 : index
    %c32 = arith.constant 32 : index
    %104 = vector.load %arg18[%c0_36, %c32] : memref<8x64xf32, #tpu.memory_space<vmem>>, vector<8x16xf32>
    tpu.vector_store %arg18[%c0_36, %c32], %103 {strides = array<i32>} : memref<8x64xf32, #tpu.memory_space<vmem>>, vector<8x16xf32>,
    %105 = vector.extract_strided_slice %35 {offsets = [0, 48], sizes = [8, 16], strides = [1, 1]} : vector<8x192xf32> to vector<8x16xf32>
    %106 = vector.extract_strided_slice %35 {offsets = [0, 112], sizes = [8, 16], strides = [1, 1]} : vector<8x192xf32> to vector<8x16xf32>
    %107 = vector.extract_strided_slice %35 {offsets = [0, 176], sizes = [8, 16], strides = [1, 1]} : vector<8x192xf32> to vector<8x16xf32>
    %108 = arith.truncf %105 : vector<8x16xf32> to vector<8x16xbf16>
    %109 = arith.truncf %106 : vector<8x16xf32> to vector<8x16xbf16>
    %cst_37 = arith.constant dense<0.000000e+00> : vector<8x8xf32>
    %110 = tpu.matmul %108, %109, %cst_37 {dimension_numbers = #tpu.dot_dimension_numbers<[1], [1], [0], [0], [0, 0, 1, 0], [], []>} : vector<8x16xbf16>, vector<8x16xbf16>, vector<8x8xf32> -> vector<8x8xf32>
    %cst_38 = arith.constant 1.250000e-01 : f32
    %111 = vector.broadcast %cst_38 : f32 to vector<8x8xf32>
    %112 = arith.mulf %110, %111 : vector<8x8xf32>
    %113 = arith.addf %112, %7 : vector<8x8xf32>
    %cst_39 = arith.constant dense<0xFF800000> : vector<8xf32>
    %114 = vector.multi_reduction <maximumf>, %113, %cst_39 [1] : vector<8x8xf32> to vector<8xf32>
    %115 = vector.shape_cast %114 : vector<8xf32> to vector<8x1xf32>
    %116 = vector.broadcast %115 : vector<8x1xf32> to vector<8x8xf32>
    %117 = arith.subf %113, %116 : vector<8x8xf32>
    %118 = math.exp %117 : vector<8x8xf32>
    %cst_40 = arith.constant dense<0.000000e+00> : vector<8xf32>
    %119 = vector.multi_reduction <add>, %118, %cst_40 [1] : vector<8x8xf32> to vector<8xf32>
    %120 = vector.shape_cast %119 : vector<8xf32> to vector<8x1xf32>
    %121 = tpu.reciprocal %120 {approx = true} : vector<8x1xf32> -> vector<8x1xf32>
    %122 = vector.broadcast %121 : vector<8x1xf32> to vector<8x8xf32>
    %123 = arith.mulf %118, %122 : vector<8x8xf32>
    %124 = arith.truncf %123 : vector<8x8xf32> to vector<8x8xbf16>
    %125 = arith.truncf %107 : vector<8x16xf32> to vector<8x16xbf16>
    %cst_41 = arith.constant dense<0.000000e+00> : vector<8x16xf32>
    %126 = tpu.matmul %124, %125, %cst_41 {dimension_numbers = #tpu.dot_dimension_numbers<[1], [0], [0], [1], [0, 0, 1, 1], [], []>} : vector<8x8xbf16>, vector<8x16xbf16>, vector<8x16xf32> -> vector<8x16xf32>
    %c0_42 = arith.constant 0 : index
    %c48 = arith.constant 48 : index
    %127 = vector.load %arg18[%c0_42, %c48] : memref<8x64xf32, #tpu.memory_space<vmem>>, vector<8x16xf32>
    tpu.vector_store %arg18[%c0_42, %c48], %126 {strides = array<i32>} : memref<8x64xf32, #tpu.memory_space<vmem>>, vector<8x16xf32>,
    %c0_43 = arith.constant 0 : index
    %c0_44 = arith.constant 0 : index
    %128 = vector.load %arg18[%c0_43, %c0_44] : memref<8x64xf32, #tpu.memory_space<vmem>>, vector<8x64xf32>
    %129 = arith.truncf %128 : vector<8x64xf32> to vector<8x64xbf16>
    %c0_45 = arith.constant 0 : index
    %c0_46 = arith.constant 0 : index
    %c0_47 = arith.constant 0 : index
    %130 = vector.load %arg5[%c0_45, %c0_46, %c0_47] : memref<4x64x64xbf16, #tpu.memory_space<vmem>>, vector<1x64x64xbf16>
    %131 = vector.shape_cast %130 : vector<1x64x64xbf16> to vector<64x64xbf16>
    %cst_48 = arith.constant dense<0.000000e+00> : vector<8x64xf32>
    %132 = tpu.matmul %129, %131, %cst_48 {dimension_numbers = #tpu.dot_dimension_numbers<[1], [0], [0], [1], [0, 0, 1, 1], [], []>} : vector<8x64xbf16>, vector<64x64xbf16>, vector<8x64xf32> -> vector<8x64xf32>
    %c0_49 = arith.constant 0 : index
    %c0_50 = arith.constant 0 : index
    %c0_51 = arith.constant 0 : index
    %133 = vector.load %arg6[%c0_49, %c0_50, %c0_51] : memref<4x1x64xf32, #tpu.memory_space<vmem>>, vector<1x1x64xf32>
    %134 = vector.shape_cast %133 : vector<1x1x64xf32> to vector<1x64xf32>
    %135 = vector.broadcast %134 : vector<1x64xf32> to vector<8x64xf32>
    %136 = arith.addf %132, %135 : vector<8x64xf32>
    %137 = arith.addf %1, %136 : vector<8x64xf32>
    %c0_52 = arith.constant 0 : index
    %c0_53 = arith.constant 0 : index
    %c0_54 = arith.constant 0 : index
    %138 = vector.load %arg7[%c0_52, %c0_53, %c0_54] : memref<4x1x64xf32, #tpu.memory_space<vmem>>, vector<1x1x64xf32>
    %139 = vector.shape_cast %138 : vector<1x1x64xf32> to vector<1x64xf32>
    %c0_55 = arith.constant 0 : index
    %c0_56 = arith.constant 0 : index
    %c0_57 = arith.constant 0 : index
    %140 = vector.load %arg8[%c0_55, %c0_56, %c0_57] : memref<4x1x64xf32, #tpu.memory_space<vmem>>, vector<1x1x64xf32>
    %141 = vector.shape_cast %140 : vector<1x1x64xf32> to vector<1x64xf32>
    %cst_58 = arith.constant dense<0.000000e+00> : vector<8xf32>
    %142 = vector.multi_reduction <add>, %137, %cst_58 [1] : vector<8x64xf32> to vector<8xf32>
    %143 = vector.shape_cast %142 : vector<8xf32> to vector<8x1xf32>
    %cst_59 = arith.constant 6.400000e+01 : f32
    %144 = vector.broadcast %cst_59 : f32 to vector<8x1xf32>
    %145 = arith.divf %143, %144 : vector<8x1xf32>
    %146 = vector.broadcast %145 : vector<8x1xf32> to vector<8x64xf32>
    %147 = arith.subf %137, %146 : vector<8x64xf32>
    %148 = arith.mulf %147, %147 : vector<8x64xf32>
    %cst_60 = arith.constant dense<0.000000e+00> : vector<8xf32>
    %149 = vector.multi_reduction <add>, %148, %cst_60 [1] : vector<8x64xf32> to vector<8xf32>
    %150 = vector.shape_cast %149 : vector<8xf32> to vector<8x1xf32>
    %cst_61 = arith.constant 6.400000e+01 : f32
    %151 = vector.broadcast %cst_61 : f32 to vector<8x1xf32>
    %152 = arith.divf %150, %151 : vector<8x1xf32>
    %cst_62 = arith.constant 9.99999974E-6 : f32
    %153 = vector.broadcast %cst_62 : f32 to vector<8x1xf32>
    %154 = arith.addf %152, %153 : vector<8x1xf32>
    %155 = math.rsqrt %154 : vector<8x1xf32>
    %156 = vector.broadcast %155 : vector<8x1xf32> to vector<8x64xf32>
    %157 = arith.mulf %147, %156 : vector<8x64xf32>
    %158 = vector.broadcast %139 : vector<1x64xf32> to vector<8x64xf32>
    %159 = arith.mulf %157, %158 : vector<8x64xf32>
    %160 = vector.broadcast %141 : vector<1x64xf32> to vector<8x64xf32>
    %161 = arith.addf %159, %160 : vector<8x64xf32>
    %162 = arith.truncf %161 : vector<8x64xf32> to vector<8x64xbf16>
    %c0_63 = arith.constant 0 : index
    %c0_64 = arith.constant 0 : index
    %c0_65 = arith.constant 0 : index
    %163 = vector.load %arg9[%c0_63, %c0_64, %c0_65] : memref<4x64x256xbf16, #tpu.memory_space<vmem>>, vector<1x64x256xbf16>
    %164 = vector.shape_cast %163 : vector<1x64x256xbf16> to vector<64x256xbf16>
    %cst_66 = arith.constant dense<0.000000e+00> : vector<8x256xf32>
    %165 = tpu.matmul %162, %164, %cst_66 {dimension_numbers = #tpu.dot_dimension_numbers<[1], [0], [0], [1], [0, 0, 1, 1], [], []>} : vector<8x64xbf16>, vector<64x256xbf16>, vector<8x256xf32> -> vector<8x256xf32>
    %c0_67 = arith.constant 0 : index
    %c0_68 = arith.constant 0 : index
    %c0_69 = arith.constant 0 : index
    %166 = vector.load %arg10[%c0_67, %c0_68, %c0_69] : memref<4x1x256xf32, #tpu.memory_space<vmem>>, vector<1x1x256xf32>
    %167 = vector.shape_cast %166 : vector<1x1x256xf32> to vector<1x256xf32>
    %168 = vector.broadcast %167 : vector<1x256xf32> to vector<8x256xf32>
    %169 = arith.addf %165, %168 : vector<8x256xf32>
    %cst_70 = arith.constant 0.000000e+00 : f32
    %170 = vector.broadcast %cst_70 : f32 to vector<8x256xf32>
    %171 = arith.maximumf %169, %170 : vector<8x256xf32>
    %172 = arith.truncf %171 : vector<8x256xf32> to vector<8x256xbf16>
    %c0_71 = arith.constant 0 : index
    %c0_72 = arith.constant 0 : index
    %c0_73 = arith.constant 0 : index
    %173 = vector.load %arg11[%c0_71, %c0_72, %c0_73] : memref<4x256x64xbf16, #tpu.memory_space<vmem>>, vector<1x256x64xbf16>
    %174 = vector.shape_cast %173 : vector<1x256x64xbf16> to vector<256x64xbf16>
    %cst_74 = arith.constant dense<0.000000e+00> : vector<8x64xf32>
    %175 = tpu.matmul %172, %174, %cst_74 {dimension_numbers = #tpu.dot_dimension_numbers<[1], [0], [0], [1], [0, 0, 1, 1], [], []>} : vector<8x256xbf16>, vector<256x64xbf16>, vector<8x64xf32> -> vector<8x64xf32>
    %c0_75 = arith.constant 0 : index
    %c0_76 = arith.constant 0 : index
    %c0_77 = arith.constant 0 : index
    %176 = vector.load %arg12[%c0_75, %c0_76, %c0_77] : memref<4x1x64xf32, #tpu.memory_space<vmem>>, vector<1x1x64xf32>
    %177 = vector.shape_cast %176 : vector<1x1x64xf32> to vector<1x64xf32>
    %178 = vector.broadcast %177 : vector<1x64xf32> to vector<8x64xf32>
    %179 = arith.addf %175, %178 : vector<8x64xf32>
    %180 = arith.addf %137, %179 : vector<8x64xf32>
    %c1 = arith.constant 1 : index
    %c0_78 = arith.constant 0 : index
    %c0_79 = arith.constant 0 : index
    %181 = vector.load %arg2[%c1, %c0_78, %c0_79] : memref<4x1x64xf32, #tpu.memory_space<vmem>>, vector<1x1x64xf32>
    %182 = vector.shape_cast %181 : vector<1x1x64xf32> to vector<1x64xf32>
    %c1_80 = arith.constant 1 : index
    %c0_81 = arith.constant 0 : index
    %c0_82 = arith.constant 0 : index
    %183 = vector.load %arg3[%c1_80, %c0_81, %c0_82] : memref<4x1x64xf32, #tpu.memory_space<vmem>>, vector<1x1x64xf32>
    %184 = vector.shape_cast %183 : vector<1x1x64xf32> to vector<1x64xf32>
    %cst_83 = arith.constant dense<0.000000e+00> : vector<8xf32>
    %185 = vector.multi_reduction <add>, %180, %cst_83 [1] : vector<8x64xf32> to vector<8xf32>
    %186 = vector.shape_cast %185 : vector<8xf32> to vector<8x1xf32>
    %cst_84 = arith.constant 6.400000e+01 : f32
    %187 = vector.broadcast %cst_84 : f32 to vector<8x1xf32>
    %188 = arith.divf %186, %187 : vector<8x1xf32>
    %189 = vector.broadcast %188 : vector<8x1xf32> to vector<8x64xf32>
    %190 = arith.subf %180, %189 : vector<8x64xf32>
    %191 = arith.mulf %190, %190 : vector<8x64xf32>
    %cst_85 = arith.constant dense<0.000000e+00> : vector<8xf32>
    %192 = vector.multi_reduction <add>, %191, %cst_85 [1] : vector<8x64xf32> to vector<8xf32>
    %193 = vector.shape_cast %192 : vector<8xf32> to vector<8x1xf32>
    %cst_86 = arith.constant 6.400000e+01 : f32
    %194 = vector.broadcast %cst_86 : f32 to vector<8x1xf32>
    %195 = arith.divf %193, %194 : vector<8x1xf32>
    %cst_87 = arith.constant 9.99999974E-6 : f32
    %196 = vector.broadcast %cst_87 : f32 to vector<8x1xf32>
    %197 = arith.addf %195, %196 : vector<8x1xf32>
    %198 = math.rsqrt %197 : vector<8x1xf32>
    %199 = vector.broadcast %198 : vector<8x1xf32> to vector<8x64xf32>
    %200 = arith.mulf %190, %199 : vector<8x64xf32>
    %201 = vector.broadcast %182 : vector<1x64xf32> to vector<8x64xf32>
    %202 = arith.mulf %200, %201 : vector<8x64xf32>
    %203 = vector.broadcast %184 : vector<1x64xf32> to vector<8x64xf32>
    %204 = arith.addf %202, %203 : vector<8x64xf32>
    %205 = arith.truncf %204 : vector<8x64xf32> to vector<8x64xbf16>
    %c1_88 = arith.constant 1 : index
    %c0_89 = arith.constant 0 : index
    %c0_90 = arith.constant 0 : index
    %206 = vector.load %arg4[%c1_88, %c0_89, %c0_90] : memref<4x64x192xbf16, #tpu.memory_space<vmem>>, vector<1x64x192xbf16>
    %207 = vector.shape_cast %206 : vector<1x64x192xbf16> to vector<64x192xbf16>
    %cst_91 = arith.constant dense<0.000000e+00> : vector<8x192xf32>
    %208 = tpu.matmul %205, %207, %cst_91 {dimension_numbers = #tpu.dot_dimension_numbers<[1], [0], [0], [1], [0, 0, 1, 1], [], []>} : vector<8x64xbf16>, vector<64x192xbf16>, vector<8x192xf32> -> vector<8x192xf32>
    %209 = vector.extract_strided_slice %208 {offsets = [0, 0], sizes = [8, 16], strides = [1, 1]} : vector<8x192xf32> to vector<8x16xf32>
    %210 = vector.extract_strided_slice %208 {offsets = [0, 64], sizes = [8, 16], strides = [1, 1]} : vector<8x192xf32> to vector<8x16xf32>
    %211 = vector.extract_strided_slice %208 {offsets = [0, 128], sizes = [8, 16], strides = [1, 1]} : vector<8x192xf32> to vector<8x16xf32>
    %212 = arith.truncf %209 : vector<8x16xf32> to vector<8x16xbf16>
    %213 = arith.truncf %210 : vector<8x16xf32> to vector<8x16xbf16>
    %cst_92 = arith.constant dense<0.000000e+00> : vector<8x8xf32>
    %214 = tpu.matmul %212, %213, %cst_92 {dimension_numbers = #tpu.dot_dimension_numbers<[1], [1], [0], [0], [0, 0, 1, 0], [], []>} : vector<8x16xbf16>, vector<8x16xbf16>, vector<8x8xf32> -> vector<8x8xf32>
    %cst_93 = arith.constant 1.250000e-01 : f32
    %215 = vector.broadcast %cst_93 : f32 to vector<8x8xf32>
    %216 = arith.mulf %214, %215 : vector<8x8xf32>
    %217 = arith.addf %216, %7 : vector<8x8xf32>
    %cst_94 = arith.constant dense<0xFF800000> : vector<8xf32>
    %218 = vector.multi_reduction <maximumf>, %217, %cst_94 [1] : vector<8x8xf32> to vector<8xf32>
    %219 = vector.shape_cast %218 : vector<8xf32> to vector<8x1xf32>
    %220 = vector.broadcast %219 : vector<8x1xf32> to vector<8x8xf32>
    %221 = arith.subf %217, %220 : vector<8x8xf32>
    %222 = math.exp %221 : vector<8x8xf32>
    %cst_95 = arith.constant dense<0.000000e+00> : vector<8xf32>
    %223 = vector.multi_reduction <add>, %222, %cst_95 [1] : vector<8x8xf32> to vector<8xf32>
    %224 = vector.shape_cast %223 : vector<8xf32> to vector<8x1xf32>
    %225 = tpu.reciprocal %224 {approx = true} : vector<8x1xf32> -> vector<8x1xf32>
    %226 = vector.broadcast %225 : vector<8x1xf32> to vector<8x8xf32>
    %227 = arith.mulf %222, %226 : vector<8x8xf32>
    %228 = arith.truncf %227 : vector<8x8xf32> to vector<8x8xbf16>
    %229 = arith.truncf %211 : vector<8x16xf32> to vector<8x16xbf16>
    %cst_96 = arith.constant dense<0.000000e+00> : vector<8x16xf32>
    %230 = tpu.matmul %228, %229, %cst_96 {dimension_numbers = #tpu.dot_dimension_numbers<[1], [0], [0], [1], [0, 0, 1, 1], [], []>} : vector<8x8xbf16>, vector<8x16xbf16>, vector<8x16xf32> -> vector<8x16xf32>
    %c0_97 = arith.constant 0 : index
    %c0_98 = arith.constant 0 : index
    %231 = vector.load %arg18[%c0_97, %c0_98] : memref<8x64xf32, #tpu.memory_space<vmem>>, vector<8x16xf32>
    tpu.vector_store %arg18[%c0_97, %c0_98], %230 {strides = array<i32>} : memref<8x64xf32, #tpu.memory_space<vmem>>, vector<8x16xf32>,
    %232 = vector.extract_strided_slice %208 {offsets = [0, 16], sizes = [8, 16], strides = [1, 1]} : vector<8x192xf32> to vector<8x16xf32>
    %233 = vector.extract_strided_slice %208 {offsets = [0, 80], sizes = [8, 16], strides = [1, 1]} : vector<8x192xf32> to vector<8x16xf32>
    %234 = vector.extract_strided_slice %208 {offsets = [0, 144], sizes = [8, 16], strides = [1, 1]} : vector<8x192xf32> to vector<8x16xf32>
    %235 = arith.truncf %232 : vector<8x16xf32> to vector<8x16xbf16>
    %236 = arith.truncf %233 : vector<8x16xf32> to vector<8x16xbf16>
    %cst_99 = arith.constant dense<0.000000e+00> : vector<8x8xf32>
    %237 = tpu.matmul %235, %236, %cst_99 {dimension_numbers = #tpu.dot_dimension_numbers<[1], [1], [0], [0], [0, 0, 1, 0], [], []>} : vector<8x16xbf16>, vector<8x16xbf16>, vector<8x8xf32> -> vector<8x8xf32>
    %cst_100 = arith.constant 1.250000e-01 : f32
    %238 = vector.broadcast %cst_100 : f32 to vector<8x8xf32>
    %239 = arith.mulf %237, %238 : vector<8x8xf32>
    %240 = arith.addf %239, %7 : vector<8x8xf32>
    %cst_101 = arith.constant dense<0xFF800000> : vector<8xf32>
    %241 = vector.multi_reduction <maximumf>, %240, %cst_101 [1] : vector<8x8xf32> to vector<8xf32>
    %242 = vector.shape_cast %241 : vector<8xf32> to vector<8x1xf32>
    %243 = vector.broadcast %242 : vector<8x1xf32> to vector<8x8xf32>
    %244 = arith.subf %240, %243 : vector<8x8xf32>
    %245 = math.exp %244 : vector<8x8xf32>
    %cst_102 = arith.constant dense<0.000000e+00> : vector<8xf32>
    %246 = vector.multi_reduction <add>, %245, %cst_102 [1] : vector<8x8xf32> to vector<8xf32>
    %247 = vector.shape_cast %246 : vector<8xf32> to vector<8x1xf32>
    %248 = tpu.reciprocal %247 {approx = true} : vector<8x1xf32> -> vector<8x1xf32>
    %249 = vector.broadcast %248 : vector<8x1xf32> to vector<8x8xf32>
    %250 = arith.mulf %245, %249 : vector<8x8xf32>
    %251 = arith.truncf %250 : vector<8x8xf32> to vector<8x8xbf16>
    %252 = arith.truncf %234 : vector<8x16xf32> to vector<8x16xbf16>
    %cst_103 = arith.constant dense<0.000000e+00> : vector<8x16xf32>
    %253 = tpu.matmul %251, %252, %cst_103 {dimension_numbers = #tpu.dot_dimension_numbers<[1], [0], [0], [1], [0, 0, 1, 1], [], []>} : vector<8x8xbf16>, vector<8x16xbf16>, vector<8x16xf32> -> vector<8x16xf32>
    %c0_104 = arith.constant 0 : index
    %c16_105 = arith.constant 16 : index
    %254 = vector.load %arg18[%c0_104, %c16_105] : memref<8x64xf32, #tpu.memory_space<vmem>>, vector<8x16xf32>
    tpu.vector_store %arg18[%c0_104, %c16_105], %253 {strides = array<i32>} : memref<8x64xf32, #tpu.memory_space<vmem>>, vector<8x16xf32>,
    %255 = vector.extract_strided_slice %208 {offsets = [0, 32], sizes = [8, 16], strides = [1, 1]} : vector<8x192xf32> to vector<8x16xf32>
    %256 = vector.extract_strided_slice %208 {offsets = [0, 96], sizes = [8, 16], strides = [1, 1]} : vector<8x192xf32> to vector<8x16xf32>
    %257 = vector.extract_strided_slice %208 {offsets = [0, 160], sizes = [8, 16], strides = [1, 1]} : vector<8x192xf32> to vector<8x16xf32>
    %258 = arith.truncf %255 : vector<8x16xf32> to vector<8x16xbf16>
    %259 = arith.truncf %256 : vector<8x16xf32> to vector<8x16xbf16>
    %cst_106 = arith.constant dense<0.000000e+00> : vector<8x8xf32>
    %260 = tpu.matmul %258, %259, %cst_106 {dimension_numbers = #tpu.dot_dimension_numbers<[1], [1], [0], [0], [0, 0, 1, 0], [], []>} : vector<8x16xbf16>, vector<8x16xbf16>, vector<8x8xf32> -> vector<8x8xf32>
    %cst_107 = arith.constant 1.250000e-01 : f32
    %261 = vector.broadcast %cst_107 : f32 to vector<8x8xf32>
    %262 = arith.mulf %260, %261 : vector<8x8xf32>
    %263 = arith.addf %262, %7 : vector<8x8xf32>
    %cst_108 = arith.constant dense<0xFF800000> : vector<8xf32>
    %264 = vector.multi_reduction <maximumf>, %263, %cst_108 [1] : vector<8x8xf32> to vector<8xf32>
    %265 = vector.shape_cast %264 : vector<8xf32> to vector<8x1xf32>
    %266 = vector.broadcast %265 : vector<8x1xf32> to vector<8x8xf32>
    %267 = arith.subf %263, %266 : vector<8x8xf32>
    %268 = math.exp %267 : vector<8x8xf32>
    %cst_109 = arith.constant dense<0.000000e+00> : vector<8xf32>
    %269 = vector.multi_reduction <add>, %268, %cst_109 [1] : vector<8x8xf32> to vector<8xf32>
    %270 = vector.shape_cast %269 : vector<8xf32> to vector<8x1xf32>
    %271 = tpu.reciprocal %270 {approx = true} : vector<8x1xf32> -> vector<8x1xf32>
    %272 = vector.broadcast %271 : vector<8x1xf32> to vector<8x8xf32>
    %273 = arith.mulf %268, %272 : vector<8x8xf32>
    %274 = arith.truncf %273 : vector<8x8xf32> to vector<8x8xbf16>
    %275 = arith.truncf %257 : vector<8x16xf32> to vector<8x16xbf16>
    %cst_110 = arith.constant dense<0.000000e+00> : vector<8x16xf32>
    %276 = tpu.matmul %274, %275, %cst_110 {dimension_numbers = #tpu.dot_dimension_numbers<[1], [0], [0], [1], [0, 0, 1, 1], [], []>} : vector<8x8xbf16>, vector<8x16xbf16>, vector<8x16xf32> -> vector<8x16xf32>
    %c0_111 = arith.constant 0 : index
    %c32_112 = arith.constant 32 : index
    %277 = vector.load %arg18[%c0_111, %c32_112] : memref<8x64xf32, #tpu.memory_space<vmem>>, vector<8x16xf32>
    tpu.vector_store %arg18[%c0_111, %c32_112], %276 {strides = array<i32>} : memref<8x64xf32, #tpu.memory_space<vmem>>, vector<8x16xf32>,
    %278 = vector.extract_strided_slice %208 {offsets = [0, 48], sizes = [8, 16], strides = [1, 1]} : vector<8x192xf32> to vector<8x16xf32>
    %279 = vector.extract_strided_slice %208 {offsets = [0, 112], sizes = [8, 16], strides = [1, 1]} : vector<8x192xf32> to vector<8x16xf32>
    %280 = vector.extract_strided_slice %208 {offsets = [0, 176], sizes = [8, 16], strides = [1, 1]} : vector<8x192xf32> to vector<8x16xf32>
    %281 = arith.truncf %278 : vector<8x16xf32> to vector<8x16xbf16>
    %282 = arith.truncf %279 : vector<8x16xf32> to vector<8x16xbf16>
    %cst_113 = arith.constant dense<0.000000e+00> : vector<8x8xf32>
    %283 = tpu.matmul %281, %282, %cst_113 {dimension_numbers = #tpu.dot_dimension_numbers<[1], [1], [0], [0], [0, 0, 1, 0], [], []>} : vector<8x16xbf16>, vector<8x16xbf16>, vector<8x8xf32> -> vector<8x8xf32>
    %cst_114 = arith.constant 1.250000e-01 : f32
    %284 = vector.broadcast %cst_114 : f32 to vector<8x8xf32>
    %285 = arith.mulf %283, %284 : vector<8x8xf32>
    %286 = arith.addf %285, %7 : vector<8x8xf32>
    %cst_115 = arith.constant dense<0xFF800000> : vector<8xf32>
    %287 = vector.multi_reduction <maximumf>, %286, %cst_115 [1] : vector<8x8xf32> to vector<8xf32>
    %288 = vector.shape_cast %287 : vector<8xf32> to vector<8x1xf32>
    %289 = vector.broadcast %288 : vector<8x1xf32> to vector<8x8xf32>
    %290 = arith.subf %286, %289 : vector<8x8xf32>
    %291 = math.exp %290 : vector<8x8xf32>
    %cst_116 = arith.constant dense<0.000000e+00> : vector<8xf32>
    %292 = vector.multi_reduction <add>, %291, %cst_116 [1] : vector<8x8xf32> to vector<8xf32>
    %293 = vector.shape_cast %292 : vector<8xf32> to vector<8x1xf32>
    %294 = tpu.reciprocal %293 {approx = true} : vector<8x1xf32> -> vector<8x1xf32>
    %295 = vector.broadcast %294 : vector<8x1xf32> to vector<8x8xf32>
    %296 = arith.mulf %291, %295 : vector<8x8xf32>
    %297 = arith.truncf %296 : vector<8x8xf32> to vector<8x8xbf16>
    %298 = arith.truncf %280 : vector<8x16xf32> to vector<8x16xbf16>
    %cst_117 = arith.constant dense<0.000000e+00> : vector<8x16xf32>
    %299 = tpu.matmul %297, %298, %cst_117 {dimension_numbers = #tpu.dot_dimension_numbers<[1], [0], [0], [1], [0, 0, 1, 1], [], []>} : vector<8x8xbf16>, vector<8x16xbf16>, vector<8x16xf32> -> vector<8x16xf32>
    %c0_118 = arith.constant 0 : index
    %c48_119 = arith.constant 48 : index
    %300 = vector.load %arg18[%c0_118, %c48_119] : memref<8x64xf32, #tpu.memory_space<vmem>>, vector<8x16xf32>
    tpu.vector_store %arg18[%c0_118, %c48_119], %299 {strides = array<i32>} : memref<8x64xf32, #tpu.memory_space<vmem>>, vector<8x16xf32>,
    %c0_120 = arith.constant 0 : index
    %c0_121 = arith.constant 0 : index
    %301 = vector.load %arg18[%c0_120, %c0_121] : memref<8x64xf32, #tpu.memory_space<vmem>>, vector<8x64xf32>
    %302 = arith.truncf %301 : vector<8x64xf32> to vector<8x64xbf16>
    %c1_122 = arith.constant 1 : index
    %c0_123 = arith.constant 0 : index
    %c0_124 = arith.constant 0 : index
    %303 = vector.load %arg5[%c1_122, %c0_123, %c0_124] : memref<4x64x64xbf16, #tpu.memory_space<vmem>>, vector<1x64x64xbf16>
    %304 = vector.shape_cast %303 : vector<1x64x64xbf16> to vector<64x64xbf16>
    %cst_125 = arith.constant dense<0.000000e+00> : vector<8x64xf32>
    %305 = tpu.matmul %302, %304, %cst_125 {dimension_numbers = #tpu.dot_dimension_numbers<[1], [0], [0], [1], [0, 0, 1, 1], [], []>} : vector<8x64xbf16>, vector<64x64xbf16>, vector<8x64xf32> -> vector<8x64xf32>
    %c1_126 = arith.constant 1 : index
    %c0_127 = arith.constant 0 : index
    %c0_128 = arith.constant 0 : index
    %306 = vector.load %arg6[%c1_126, %c0_127, %c0_128] : memref<4x1x64xf32, #tpu.memory_space<vmem>>, vector<1x1x64xf32>
    %307 = vector.shape_cast %306 : vector<1x1x64xf32> to vector<1x64xf32>
    %308 = vector.broadcast %307 : vector<1x64xf32> to vector<8x64xf32>
    %309 = arith.addf %305, %308 : vector<8x64xf32>
    %310 = arith.addf %180, %309 : vector<8x64xf32>
    %c1_129 = arith.constant 1 : index
    %c0_130 = arith.constant 0 : index
    %c0_131 = arith.constant 0 : index
    %311 = vector.load %arg7[%c1_129, %c0_130, %c0_131] : memref<4x1x64xf32, #tpu.memory_space<vmem>>, vector<1x1x64xf32>
    %312 = vector.shape_cast %311 : vector<1x1x64xf32> to vector<1x64xf32>
    %c1_132 = arith.constant 1 : index
    %c0_133 = arith.constant 0 : index
    %c0_134 = arith.constant 0 : index
    %313 = vector.load %arg8[%c1_132, %c0_133, %c0_134] : memref<4x1x64xf32, #tpu.memory_space<vmem>>, vector<1x1x64xf32>
    %314 = vector.shape_cast %313 : vector<1x1x64xf32> to vector<1x64xf32>
    %cst_135 = arith.constant dense<0.000000e+00> : vector<8xf32>
    %315 = vector.multi_reduction <add>, %310, %cst_135 [1] : vector<8x64xf32> to vector<8xf32>
    %316 = vector.shape_cast %315 : vector<8xf32> to vector<8x1xf32>
    %cst_136 = arith.constant 6.400000e+01 : f32
    %317 = vector.broadcast %cst_136 : f32 to vector<8x1xf32>
    %318 = arith.divf %316, %317 : vector<8x1xf32>
    %319 = vector.broadcast %318 : vector<8x1xf32> to vector<8x64xf32>
    %320 = arith.subf %310, %319 : vector<8x64xf32>
    %321 = arith.mulf %320, %320 : vector<8x64xf32>
    %cst_137 = arith.constant dense<0.000000e+00> : vector<8xf32>
    %322 = vector.multi_reduction <add>, %321, %cst_137 [1] : vector<8x64xf32> to vector<8xf32>
    %323 = vector.shape_cast %322 : vector<8xf32> to vector<8x1xf32>
    %cst_138 = arith.constant 6.400000e+01 : f32
    %324 = vector.broadcast %cst_138 : f32 to vector<8x1xf32>
    %325 = arith.divf %323, %324 : vector<8x1xf32>
    %cst_139 = arith.constant 9.99999974E-6 : f32
    %326 = vector.broadcast %cst_139 : f32 to vector<8x1xf32>
    %327 = arith.addf %325, %326 : vector<8x1xf32>
    %328 = math.rsqrt %327 : vector<8x1xf32>
    %329 = vector.broadcast %328 : vector<8x1xf32> to vector<8x64xf32>
    %330 = arith.mulf %320, %329 : vector<8x64xf32>
    %331 = vector.broadcast %312 : vector<1x64xf32> to vector<8x64xf32>
    %332 = arith.mulf %330, %331 : vector<8x64xf32>
    %333 = vector.broadcast %314 : vector<1x64xf32> to vector<8x64xf32>
    %334 = arith.addf %332, %333 : vector<8x64xf32>
    %335 = arith.truncf %334 : vector<8x64xf32> to vector<8x64xbf16>
    %c1_140 = arith.constant 1 : index
    %c0_141 = arith.constant 0 : index
    %c0_142 = arith.constant 0 : index
    %336 = vector.load %arg9[%c1_140, %c0_141, %c0_142] : memref<4x64x256xbf16, #tpu.memory_space<vmem>>, vector<1x64x256xbf16>
    %337 = vector.shape_cast %336 : vector<1x64x256xbf16> to vector<64x256xbf16>
    %cst_143 = arith.constant dense<0.000000e+00> : vector<8x256xf32>
    %338 = tpu.matmul %335, %337, %cst_143 {dimension_numbers = #tpu.dot_dimension_numbers<[1], [0], [0], [1], [0, 0, 1, 1], [], []>} : vector<8x64xbf16>, vector<64x256xbf16>, vector<8x256xf32> -> vector<8x256xf32>
    %c1_144 = arith.constant 1 : index
    %c0_145 = arith.constant 0 : index
    %c0_146 = arith.constant 0 : index
    %339 = vector.load %arg10[%c1_144, %c0_145, %c0_146] : memref<4x1x256xf32, #tpu.memory_space<vmem>>, vector<1x1x256xf32>
    %340 = vector.shape_cast %339 : vector<1x1x256xf32> to vector<1x256xf32>
    %341 = vector.broadcast %340 : vector<1x256xf32> to vector<8x256xf32>
    %342 = arith.addf %338, %341 : vector<8x256xf32>
    %cst_147 = arith.constant 0.000000e+00 : f32
    %343 = vector.broadcast %cst_147 : f32 to vector<8x256xf32>
    %344 = arith.maximumf %342, %343 : vector<8x256xf32>
    %345 = arith.truncf %344 : vector<8x256xf32> to vector<8x256xbf16>
    %c1_148 = arith.constant 1 : index
    %c0_149 = arith.constant 0 : index
    %c0_150 = arith.constant 0 : index
    %346 = vector.load %arg11[%c1_148, %c0_149, %c0_150] : memref<4x256x64xbf16, #tpu.memory_space<vmem>>, vector<1x256x64xbf16>
    %347 = vector.shape_cast %346 : vector<1x256x64xbf16> to vector<256x64xbf16>
    %cst_151 = arith.constant dense<0.000000e+00> : vector<8x64xf32>
    %348 = tpu.matmul %345, %347, %cst_151 {dimension_numbers = #tpu.dot_dimension_numbers<[1], [0], [0], [1], [0, 0, 1, 1], [], []>} : vector<8x256xbf16>, vector<256x64xbf16>, vector<8x64xf32> -> vector<8x64xf32>
    %c1_152 = arith.constant 1 : index
    %c0_153 = arith.constant 0 : index
    %c0_154 = arith.constant 0 : index
    %349 = vector.load %arg12[%c1_152, %c0_153, %c0_154] : memref<4x1x64xf32, #tpu.memory_space<vmem>>, vector<1x1x64xf32>
    %350 = vector.shape_cast %349 : vector<1x1x64xf32> to vector<1x64xf32>
    %351 = vector.broadcast %350 : vector<1x64xf32> to vector<8x64xf32>
    %352 = arith.addf %348, %351 : vector<8x64xf32>
    %353 = arith.addf %310, %352 : vector<8x64xf32>
    %c2 = arith.constant 2 : index
    %c0_155 = arith.constant 0 : index
    %c0_156 = arith.constant 0 : index
    %354 = vector.load %arg2[%c2, %c0_155, %c0_156] : memref<4x1x64xf32, #tpu.memory_space<vmem>>, vector<1x1x64xf32>
    %355 = vector.shape_cast %354 : vector<1x1x64xf32> to vector<1x64xf32>
    %c2_157 = arith.constant 2 : index
    %c0_158 = arith.constant 0 : index
    %c0_159 = arith.constant 0 : index
    %356 = vector.load %arg3[%c2_157, %c0_158, %c0_159] : memref<4x1x64xf32, #tpu.memory_space<vmem>>, vector<1x1x64xf32>
    %357 = vector.shape_cast %356 : vector<1x1x64xf32> to vector<1x64xf32>
    %cst_160 = arith.constant dense<0.000000e+00> : vector<8xf32>
    %358 = vector.multi_reduction <add>, %353, %cst_160 [1] : vector<8x64xf32> to vector<8xf32>
    %359 = vector.shape_cast %358 : vector<8xf32> to vector<8x1xf32>
    %cst_161 = arith.constant 6.400000e+01 : f32
    %360 = vector.broadcast %cst_161 : f32 to vector<8x1xf32>
    %361 = arith.divf %359, %360 : vector<8x1xf32>
    %362 = vector.broadcast %361 : vector<8x1xf32> to vector<8x64xf32>
    %363 = arith.subf %353, %362 : vector<8x64xf32>
    %364 = arith.mulf %363, %363 : vector<8x64xf32>
    %cst_162 = arith.constant dense<0.000000e+00> : vector<8xf32>
    %365 = vector.multi_reduction <add>, %364, %cst_162 [1] : vector<8x64xf32> to vector<8xf32>
    %366 = vector.shape_cast %365 : vector<8xf32> to vector<8x1xf32>
    %cst_163 = arith.constant 6.400000e+01 : f32
    %367 = vector.broadcast %cst_163 : f32 to vector<8x1xf32>
    %368 = arith.divf %366, %367 : vector<8x1xf32>
    %cst_164 = arith.constant 9.99999974E-6 : f32
    %369 = vector.broadcast %cst_164 : f32 to vector<8x1xf32>
    %370 = arith.addf %368, %369 : vector<8x1xf32>
    %371 = math.rsqrt %370 : vector<8x1xf32>
    %372 = vector.broadcast %371 : vector<8x1xf32> to vector<8x64xf32>
    %373 = arith.mulf %363, %372 : vector<8x64xf32>
    %374 = vector.broadcast %355 : vector<1x64xf32> to vector<8x64xf32>
    %375 = arith.mulf %373, %374 : vector<8x64xf32>
    %376 = vector.broadcast %357 : vector<1x64xf32> to vector<8x64xf32>
    %377 = arith.addf %375, %376 : vector<8x64xf32>
    %378 = arith.truncf %377 : vector<8x64xf32> to vector<8x64xbf16>
    %c2_165 = arith.constant 2 : index
    %c0_166 = arith.constant 0 : index
    %c0_167 = arith.constant 0 : index
    %379 = vector.load %arg4[%c2_165, %c0_166, %c0_167] : memref<4x64x192xbf16, #tpu.memory_space<vmem>>, vector<1x64x192xbf16>
    %380 = vector.shape_cast %379 : vector<1x64x192xbf16> to vector<64x192xbf16>
    %cst_168 = arith.constant dense<0.000000e+00> : vector<8x192xf32>
    %381 = tpu.matmul %378, %380, %cst_168 {dimension_numbers = #tpu.dot_dimension_numbers<[1], [0], [0], [1], [0, 0, 1, 1], [], []>} : vector<8x64xbf16>, vector<64x192xbf16>, vector<8x192xf32> -> vector<8x192xf32>
    %382 = vector.extract_strided_slice %381 {offsets = [0, 0], sizes = [8, 16], strides = [1, 1]} : vector<8x192xf32> to vector<8x16xf32>
    %383 = vector.extract_strided_slice %381 {offsets = [0, 64], sizes = [8, 16], strides = [1, 1]} : vector<8x192xf32> to vector<8x16xf32>
    %384 = vector.extract_strided_slice %381 {offsets = [0, 128], sizes = [8, 16], strides = [1, 1]} : vector<8x192xf32> to vector<8x16xf32>
    %385 = arith.truncf %382 : vector<8x16xf32> to vector<8x16xbf16>
    %386 = arith.truncf %383 : vector<8x16xf32> to vector<8x16xbf16>
    %cst_169 = arith.constant dense<0.000000e+00> : vector<8x8xf32>
    %387 = tpu.matmul %385, %386, %cst_169 {dimension_numbers = #tpu.dot_dimension_numbers<[1], [1], [0], [0], [0, 0, 1, 0], [], []>} : vector<8x16xbf16>, vector<8x16xbf16>, vector<8x8xf32> -> vector<8x8xf32>
    %cst_170 = arith.constant 1.250000e-01 : f32
    %388 = vector.broadcast %cst_170 : f32 to vector<8x8xf32>
    %389 = arith.mulf %387, %388 : vector<8x8xf32>
    %390 = arith.addf %389, %7 : vector<8x8xf32>
    %cst_171 = arith.constant dense<0xFF800000> : vector<8xf32>
    %391 = vector.multi_reduction <maximumf>, %390, %cst_171 [1] : vector<8x8xf32> to vector<8xf32>
    %392 = vector.shape_cast %391 : vector<8xf32> to vector<8x1xf32>
    %393 = vector.broadcast %392 : vector<8x1xf32> to vector<8x8xf32>
    %394 = arith.subf %390, %393 : vector<8x8xf32>
    %395 = math.exp %394 : vector<8x8xf32>
    %cst_172 = arith.constant dense<0.000000e+00> : vector<8xf32>
    %396 = vector.multi_reduction <add>, %395, %cst_172 [1] : vector<8x8xf32> to vector<8xf32>
    %397 = vector.shape_cast %396 : vector<8xf32> to vector<8x1xf32>
    %398 = tpu.reciprocal %397 {approx = true} : vector<8x1xf32> -> vector<8x1xf32>
    %399 = vector.broadcast %398 : vector<8x1xf32> to vector<8x8xf32>
    %400 = arith.mulf %395, %399 : vector<8x8xf32>
    %401 = arith.truncf %400 : vector<8x8xf32> to vector<8x8xbf16>
    %402 = arith.truncf %384 : vector<8x16xf32> to vector<8x16xbf16>
    %cst_173 = arith.constant dense<0.000000e+00> : vector<8x16xf32>
    %403 = tpu.matmul %401, %402, %cst_173 {dimension_numbers = #tpu.dot_dimension_numbers<[1], [0], [0], [1], [0, 0, 1, 1], [], []>} : vector<8x8xbf16>, vector<8x16xbf16>, vector<8x16xf32> -> vector<8x16xf32>
    %c0_174 = arith.constant 0 : index
    %c0_175 = arith.constant 0 : index
    %404 = vector.load %arg18[%c0_174, %c0_175] : memref<8x64xf32, #tpu.memory_space<vmem>>, vector<8x16xf32>
    tpu.vector_store %arg18[%c0_174, %c0_175], %403 {strides = array<i32>} : memref<8x64xf32, #tpu.memory_space<vmem>>, vector<8x16xf32>,
    %405 = vector.extract_strided_slice %381 {offsets = [0, 16], sizes = [8, 16], strides = [1, 1]} : vector<8x192xf32> to vector<8x16xf32>
    %406 = vector.extract_strided_slice %381 {offsets = [0, 80], sizes = [8, 16], strides = [1, 1]} : vector<8x192xf32> to vector<8x16xf32>
    %407 = vector.extract_strided_slice %381 {offsets = [0, 144], sizes = [8, 16], strides = [1, 1]} : vector<8x192xf32> to vector<8x16xf32>
    %408 = arith.truncf %405 : vector<8x16xf32> to vector<8x16xbf16>
    %409 = arith.truncf %406 : vector<8x16xf32> to vector<8x16xbf16>
    %cst_176 = arith.constant dense<0.000000e+00> : vector<8x8xf32>
    %410 = tpu.matmul %408, %409, %cst_176 {dimension_numbers = #tpu.dot_dimension_numbers<[1], [1], [0], [0], [0, 0, 1, 0], [], []>} : vector<8x16xbf16>, vector<8x16xbf16>, vector<8x8xf32> -> vector<8x8xf32>
    %cst_177 = arith.constant 1.250000e-01 : f32
    %411 = vector.broadcast %cst_177 : f32 to vector<8x8xf32>
    %412 = arith.mulf %410, %411 : vector<8x8xf32>
    %413 = arith.addf %412, %7 : vector<8x8xf32>
    %cst_178 = arith.constant dense<0xFF800000> : vector<8xf32>
    %414 = vector.multi_reduction <maximumf>, %413, %cst_178 [1] : vector<8x8xf32> to vector<8xf32>
    %415 = vector.shape_cast %414 : vector<8xf32> to vector<8x1xf32>
    %416 = vector.broadcast %415 : vector<8x1xf32> to vector<8x8xf32>
    %417 = arith.subf %413, %416 : vector<8x8xf32>
    %418 = math.exp %417 : vector<8x8xf32>
    %cst_179 = arith.constant dense<0.000000e+00> : vector<8xf32>
    %419 = vector.multi_reduction <add>, %418, %cst_179 [1] : vector<8x8xf32> to vector<8xf32>
    %420 = vector.shape_cast %419 : vector<8xf32> to vector<8x1xf32>
    %421 = tpu.reciprocal %420 {approx = true} : vector<8x1xf32> -> vector<8x1xf32>
    %422 = vector.broadcast %421 : vector<8x1xf32> to vector<8x8xf32>
    %423 = arith.mulf %418, %422 : vector<8x8xf32>
    %424 = arith.truncf %423 : vector<8x8xf32> to vector<8x8xbf16>
    %425 = arith.truncf %407 : vector<8x16xf32> to vector<8x16xbf16>
    %cst_180 = arith.constant dense<0.000000e+00> : vector<8x16xf32>
    %426 = tpu.matmul %424, %425, %cst_180 {dimension_numbers = #tpu.dot_dimension_numbers<[1], [0], [0], [1], [0, 0, 1, 1], [], []>} : vector<8x8xbf16>, vector<8x16xbf16>, vector<8x16xf32> -> vector<8x16xf32>
    %c0_181 = arith.constant 0 : index
    %c16_182 = arith.constant 16 : index
    %427 = vector.load %arg18[%c0_181, %c16_182] : memref<8x64xf32, #tpu.memory_space<vmem>>, vector<8x16xf32>
    tpu.vector_store %arg18[%c0_181, %c16_182], %426 {strides = array<i32>} : memref<8x64xf32, #tpu.memory_space<vmem>>, vector<8x16xf32>,
    %428 = vector.extract_strided_slice %381 {offsets = [0, 32], sizes = [8, 16], strides = [1, 1]} : vector<8x192xf32> to vector<8x16xf32>
    %429 = vector.extract_strided_slice %381 {offsets = [0, 96], sizes = [8, 16], strides = [1, 1]} : vector<8x192xf32> to vector<8x16xf32>
    %430 = vector.extract_strided_slice %381 {offsets = [0, 160], sizes = [8, 16], strides = [1, 1]} : vector<8x192xf32> to vector<8x16xf32>
    %431 = arith.truncf %428 : vector<8x16xf32> to vector<8x16xbf16>
    %432 = arith.truncf %429 : vector<8x16xf32> to vector<8x16xbf16>
    %cst_183 = arith.constant dense<0.000000e+00> : vector<8x8xf32>
    %433 = tpu.matmul %431, %432, %cst_183 {dimension_numbers = #tpu.dot_dimension_numbers<[1], [1], [0], [0], [0, 0, 1, 0], [], []>} : vector<8x16xbf16>, vector<8x16xbf16>, vector<8x8xf32> -> vector<8x8xf32>
    %cst_184 = arith.constant 1.250000e-01 : f32
    %434 = vector.broadcast %cst_184 : f32 to vector<8x8xf32>
    %435 = arith.mulf %433, %434 : vector<8x8xf32>
    %436 = arith.addf %435, %7 : vector<8x8xf32>
    %cst_185 = arith.constant dense<0xFF800000> : vector<8xf32>
    %437 = vector.multi_reduction <maximumf>, %436, %cst_185 [1] : vector<8x8xf32> to vector<8xf32>
    %438 = vector.shape_cast %437 : vector<8xf32> to vector<8x1xf32>
    %439 = vector.broadcast %438 : vector<8x1xf32> to vector<8x8xf32>
    %440 = arith.subf %436, %439 : vector<8x8xf32>
    %441 = math.exp %440 : vector<8x8xf32>
    %cst_186 = arith.constant dense<0.000000e+00> : vector<8xf32>
    %442 = vector.multi_reduction <add>, %441, %cst_186 [1] : vector<8x8xf32> to vector<8xf32>
    %443 = vector.shape_cast %442 : vector<8xf32> to vector<8x1xf32>
    %444 = tpu.reciprocal %443 {approx = true} : vector<8x1xf32> -> vector<8x1xf32>
    %445 = vector.broadcast %444 : vector<8x1xf32> to vector<8x8xf32>
    %446 = arith.mulf %441, %445 : vector<8x8xf32>
    %447 = arith.truncf %446 : vector<8x8xf32> to vector<8x8xbf16>
    %448 = arith.truncf %430 : vector<8x16xf32> to vector<8x16xbf16>
    %cst_187 = arith.constant dense<0.000000e+00> : vector<8x16xf32>
    %449 = tpu.matmul %447, %448, %cst_187 {dimension_numbers = #tpu.dot_dimension_numbers<[1], [0], [0], [1], [0, 0, 1, 1], [], []>} : vector<8x8xbf16>, vector<8x16xbf16>, vector<8x16xf32> -> vector<8x16xf32>
    %c0_188 = arith.constant 0 : index
    %c32_189 = arith.constant 32 : index
    %450 = vector.load %arg18[%c0_188, %c32_189] : memref<8x64xf32, #tpu.memory_space<vmem>>, vector<8x16xf32>
    tpu.vector_store %arg18[%c0_188, %c32_189], %449 {strides = array<i32>} : memref<8x64xf32, #tpu.memory_space<vmem>>, vector<8x16xf32>,
    %451 = vector.extract_strided_slice %381 {offsets = [0, 48], sizes = [8, 16], strides = [1, 1]} : vector<8x192xf32> to vector<8x16xf32>
    %452 = vector.extract_strided_slice %381 {offsets = [0, 112], sizes = [8, 16], strides = [1, 1]} : vector<8x192xf32> to vector<8x16xf32>
    %453 = vector.extract_strided_slice %381 {offsets = [0, 176], sizes = [8, 16], strides = [1, 1]} : vector<8x192xf32> to vector<8x16xf32>
    %454 = arith.truncf %451 : vector<8x16xf32> to vector<8x16xbf16>
    %455 = arith.truncf %452 : vector<8x16xf32> to vector<8x16xbf16>
    %cst_190 = arith.constant dense<0.000000e+00> : vector<8x8xf32>
    %456 = tpu.matmul %454, %455, %cst_190 {dimension_numbers = #tpu.dot_dimension_numbers<[1], [1], [0], [0], [0, 0, 1, 0], [], []>} : vector<8x16xbf16>, vector<8x16xbf16>, vector<8x8xf32> -> vector<8x8xf32>
    %cst_191 = arith.constant 1.250000e-01 : f32
    %457 = vector.broadcast %cst_191 : f32 to vector<8x8xf32>
    %458 = arith.mulf %456, %457 : vector<8x8xf32>
    %459 = arith.addf %458, %7 : vector<8x8xf32>
    %cst_192 = arith.constant dense<0xFF800000> : vector<8xf32>
    %460 = vector.multi_reduction <maximumf>, %459, %cst_192 [1] : vector<8x8xf32> to vector<8xf32>
    %461 = vector.shape_cast %460 : vector<8xf32> to vector<8x1xf32>
    %462 = vector.broadcast %461 : vector<8x1xf32> to vector<8x8xf32>
    %463 = arith.subf %459, %462 : vector<8x8xf32>
    %464 = math.exp %463 : vector<8x8xf32>
    %cst_193 = arith.constant dense<0.000000e+00> : vector<8xf32>
    %465 = vector.multi_reduction <add>, %464, %cst_193 [1] : vector<8x8xf32> to vector<8xf32>
    %466 = vector.shape_cast %465 : vector<8xf32> to vector<8x1xf32>
    %467 = tpu.reciprocal %466 {approx = true} : vector<8x1xf32> -> vector<8x1xf32>
    %468 = vector.broadcast %467 : vector<8x1xf32> to vector<8x8xf32>
    %469 = arith.mulf %464, %468 : vector<8x8xf32>
    %470 = arith.truncf %469 : vector<8x8xf32> to vector<8x8xbf16>
    %471 = arith.truncf %453 : vector<8x16xf32> to vector<8x16xbf16>
    %cst_194 = arith.constant dense<0.000000e+00> : vector<8x16xf32>
    %472 = tpu.matmul %470, %471, %cst_194 {dimension_numbers = #tpu.dot_dimension_numbers<[1], [0], [0], [1], [0, 0, 1, 1], [], []>} : vector<8x8xbf16>, vector<8x16xbf16>, vector<8x16xf32> -> vector<8x16xf32>
    %c0_195 = arith.constant 0 : index
    %c48_196 = arith.constant 48 : index
    %473 = vector.load %arg18[%c0_195, %c48_196] : memref<8x64xf32, #tpu.memory_space<vmem>>, vector<8x16xf32>
    tpu.vector_store %arg18[%c0_195, %c48_196], %472 {strides = array<i32>} : memref<8x64xf32, #tpu.memory_space<vmem>>, vector<8x16xf32>,
    %c0_197 = arith.constant 0 : index
    %c0_198 = arith.constant 0 : index
    %474 = vector.load %arg18[%c0_197, %c0_198] : memref<8x64xf32, #tpu.memory_space<vmem>>, vector<8x64xf32>
    %475 = arith.truncf %474 : vector<8x64xf32> to vector<8x64xbf16>
    %c2_199 = arith.constant 2 : index
    %c0_200 = arith.constant 0 : index
    %c0_201 = arith.constant 0 : index
    %476 = vector.load %arg5[%c2_199, %c0_200, %c0_201] : memref<4x64x64xbf16, #tpu.memory_space<vmem>>, vector<1x64x64xbf16>
    %477 = vector.shape_cast %476 : vector<1x64x64xbf16> to vector<64x64xbf16>
    %cst_202 = arith.constant dense<0.000000e+00> : vector<8x64xf32>
    %478 = tpu.matmul %475, %477, %cst_202 {dimension_numbers = #tpu.dot_dimension_numbers<[1], [0], [0], [1], [0, 0, 1, 1], [], []>} : vector<8x64xbf16>, vector<64x64xbf16>, vector<8x64xf32> -> vector<8x64xf32>
    %c2_203 = arith.constant 2 : index
    %c0_204 = arith.constant 0 : index
    %c0_205 = arith.constant 0 : index
    %479 = vector.load %arg6[%c2_203, %c0_204, %c0_205] : memref<4x1x64xf32, #tpu.memory_space<vmem>>, vector<1x1x64xf32>
    %480 = vector.shape_cast %479 : vector<1x1x64xf32> to vector<1x64xf32>
    %481 = vector.broadcast %480 : vector<1x64xf32> to vector<8x64xf32>
    %482 = arith.addf %478, %481 : vector<8x64xf32>
    %483 = arith.addf %353, %482 : vector<8x64xf32>
    %c2_206 = arith.constant 2 : index
    %c0_207 = arith.constant 0 : index
    %c0_208 = arith.constant 0 : index
    %484 = vector.load %arg7[%c2_206, %c0_207, %c0_208] : memref<4x1x64xf32, #tpu.memory_space<vmem>>, vector<1x1x64xf32>
    %485 = vector.shape_cast %484 : vector<1x1x64xf32> to vector<1x64xf32>
    %c2_209 = arith.constant 2 : index
    %c0_210 = arith.constant 0 : index
    %c0_211 = arith.constant 0 : index
    %486 = vector.load %arg8[%c2_209, %c0_210, %c0_211] : memref<4x1x64xf32, #tpu.memory_space<vmem>>, vector<1x1x64xf32>
    %487 = vector.shape_cast %486 : vector<1x1x64xf32> to vector<1x64xf32>
    %cst_212 = arith.constant dense<0.000000e+00> : vector<8xf32>
    %488 = vector.multi_reduction <add>, %483, %cst_212 [1] : vector<8x64xf32> to vector<8xf32>
    %489 = vector.shape_cast %488 : vector<8xf32> to vector<8x1xf32>
    %cst_213 = arith.constant 6.400000e+01 : f32
    %490 = vector.broadcast %cst_213 : f32 to vector<8x1xf32>
    %491 = arith.divf %489, %490 : vector<8x1xf32>
    %492 = vector.broadcast %491 : vector<8x1xf32> to vector<8x64xf32>
    %493 = arith.subf %483, %492 : vector<8x64xf32>
    %494 = arith.mulf %493, %493 : vector<8x64xf32>
    %cst_214 = arith.constant dense<0.000000e+00> : vector<8xf32>
    %495 = vector.multi_reduction <add>, %494, %cst_214 [1] : vector<8x64xf32> to vector<8xf32>
    %496 = vector.shape_cast %495 : vector<8xf32> to vector<8x1xf32>
    %cst_215 = arith.constant 6.400000e+01 : f32
    %497 = vector.broadcast %cst_215 : f32 to vector<8x1xf32>
    %498 = arith.divf %496, %497 : vector<8x1xf32>
    %cst_216 = arith.constant 9.99999974E-6 : f32
    %499 = vector.broadcast %cst_216 : f32 to vector<8x1xf32>
    %500 = arith.addf %498, %499 : vector<8x1xf32>
    %501 = math.rsqrt %500 : vector<8x1xf32>
    %502 = vector.broadcast %501 : vector<8x1xf32> to vector<8x64xf32>
    %503 = arith.mulf %493, %502 : vector<8x64xf32>
    %504 = vector.broadcast %485 : vector<1x64xf32> to vector<8x64xf32>
    %505 = arith.mulf %503, %504 : vector<8x64xf32>
    %506 = vector.broadcast %487 : vector<1x64xf32> to vector<8x64xf32>
    %507 = arith.addf %505, %506 : vector<8x64xf32>
    %508 = arith.truncf %507 : vector<8x64xf32> to vector<8x64xbf16>
    %c2_217 = arith.constant 2 : index
    %c0_218 = arith.constant 0 : index
    %c0_219 = arith.constant 0 : index
    %509 = vector.load %arg9[%c2_217, %c0_218, %c0_219] : memref<4x64x256xbf16, #tpu.memory_space<vmem>>, vector<1x64x256xbf16>
    %510 = vector.shape_cast %509 : vector<1x64x256xbf16> to vector<64x256xbf16>
    %cst_220 = arith.constant dense<0.000000e+00> : vector<8x256xf32>
    %511 = tpu.matmul %508, %510, %cst_220 {dimension_numbers = #tpu.dot_dimension_numbers<[1], [0], [0], [1], [0, 0, 1, 1], [], []>} : vector<8x64xbf16>, vector<64x256xbf16>, vector<8x256xf32> -> vector<8x256xf32>
    %c2_221 = arith.constant 2 : index
    %c0_222 = arith.constant 0 : index
    %c0_223 = arith.constant 0 : index
    %512 = vector.load %arg10[%c2_221, %c0_222, %c0_223] : memref<4x1x256xf32, #tpu.memory_space<vmem>>, vector<1x1x256xf32>
    %513 = vector.shape_cast %512 : vector<1x1x256xf32> to vector<1x256xf32>
    %514 = vector.broadcast %513 : vector<1x256xf32> to vector<8x256xf32>
    %515 = arith.addf %511, %514 : vector<8x256xf32>
    %cst_224 = arith.constant 0.000000e+00 : f32
    %516 = vector.broadcast %cst_224 : f32 to vector<8x256xf32>
    %517 = arith.maximumf %515, %516 : vector<8x256xf32>
    %518 = arith.truncf %517 : vector<8x256xf32> to vector<8x256xbf16>
    %c2_225 = arith.constant 2 : index
    %c0_226 = arith.constant 0 : index
    %c0_227 = arith.constant 0 : index
    %519 = vector.load %arg11[%c2_225, %c0_226, %c0_227] : memref<4x256x64xbf16, #tpu.memory_space<vmem>>, vector<1x256x64xbf16>
    %520 = vector.shape_cast %519 : vector<1x256x64xbf16> to vector<256x64xbf16>
    %cst_228 = arith.constant dense<0.000000e+00> : vector<8x64xf32>
    %521 = tpu.matmul %518, %520, %cst_228 {dimension_numbers = #tpu.dot_dimension_numbers<[1], [0], [0], [1], [0, 0, 1, 1], [], []>} : vector<8x256xbf16>, vector<256x64xbf16>, vector<8x64xf32> -> vector<8x64xf32>
    %c2_229 = arith.constant 2 : index
    %c0_230 = arith.constant 0 : index
    %c0_231 = arith.constant 0 : index
    %522 = vector.load %arg12[%c2_229, %c0_230, %c0_231] : memref<4x1x64xf32, #tpu.memory_space<vmem>>, vector<1x1x64xf32>
    %523 = vector.shape_cast %522 : vector<1x1x64xf32> to vector<1x64xf32>
    %524 = vector.broadcast %523 : vector<1x64xf32> to vector<8x64xf32>
    %525 = arith.addf %521, %524 : vector<8x64xf32>
    %526 = arith.addf %483, %525 : vector<8x64xf32>
    %c3 = arith.constant 3 : index
    %c0_232 = arith.constant 0 : index
    %c0_233 = arith.constant 0 : index
    %527 = vector.load %arg2[%c3, %c0_232, %c0_233] : memref<4x1x64xf32, #tpu.memory_space<vmem>>, vector<1x1x64xf32>
    %528 = vector.shape_cast %527 : vector<1x1x64xf32> to vector<1x64xf32>
    %c3_234 = arith.constant 3 : index
    %c0_235 = arith.constant 0 : index
    %c0_236 = arith.constant 0 : index
    %529 = vector.load %arg3[%c3_234, %c0_235, %c0_236] : memref<4x1x64xf32, #tpu.memory_space<vmem>>, vector<1x1x64xf32>
    %530 = vector.shape_cast %529 : vector<1x1x64xf32> to vector<1x64xf32>
    %cst_237 = arith.constant dense<0.000000e+00> : vector<8xf32>
    %531 = vector.multi_reduction <add>, %526, %cst_237 [1] : vector<8x64xf32> to vector<8xf32>
    %532 = vector.shape_cast %531 : vector<8xf32> to vector<8x1xf32>
    %cst_238 = arith.constant 6.400000e+01 : f32
    %533 = vector.broadcast %cst_238 : f32 to vector<8x1xf32>
    %534 = arith.divf %532, %533 : vector<8x1xf32>
    %535 = vector.broadcast %534 : vector<8x1xf32> to vector<8x64xf32>
    %536 = arith.subf %526, %535 : vector<8x64xf32>
    %537 = arith.mulf %536, %536 : vector<8x64xf32>
    %cst_239 = arith.constant dense<0.000000e+00> : vector<8xf32>
    %538 = vector.multi_reduction <add>, %537, %cst_239 [1] : vector<8x64xf32> to vector<8xf32>
    %539 = vector.shape_cast %538 : vector<8xf32> to vector<8x1xf32>
    %cst_240 = arith.constant 6.400000e+01 : f32
    %540 = vector.broadcast %cst_240 : f32 to vector<8x1xf32>
    %541 = arith.divf %539, %540 : vector<8x1xf32>
    %cst_241 = arith.constant 9.99999974E-6 : f32
    %542 = vector.broadcast %cst_241 : f32 to vector<8x1xf32>
    %543 = arith.addf %541, %542 : vector<8x1xf32>
    %544 = math.rsqrt %543 : vector<8x1xf32>
    %545 = vector.broadcast %544 : vector<8x1xf32> to vector<8x64xf32>
    %546 = arith.mulf %536, %545 : vector<8x64xf32>
    %547 = vector.broadcast %528 : vector<1x64xf32> to vector<8x64xf32>
    %548 = arith.mulf %546, %547 : vector<8x64xf32>
    %549 = vector.broadcast %530 : vector<1x64xf32> to vector<8x64xf32>
    %550 = arith.addf %548, %549 : vector<8x64xf32>
    %551 = arith.truncf %550 : vector<8x64xf32> to vector<8x64xbf16>
    %c3_242 = arith.constant 3 : index
    %c0_243 = arith.constant 0 : index
    %c0_244 = arith.constant 0 : index
    %552 = vector.load %arg4[%c3_242, %c0_243, %c0_244] : memref<4x64x192xbf16, #tpu.memory_space<vmem>>, vector<1x64x192xbf16>
    %553 = vector.shape_cast %552 : vector<1x64x192xbf16> to vector<64x192xbf16>
    %cst_245 = arith.constant dense<0.000000e+00> : vector<8x192xf32>
    %554 = tpu.matmul %551, %553, %cst_245 {dimension_numbers = #tpu.dot_dimension_numbers<[1], [0], [0], [1], [0, 0, 1, 1], [], []>} : vector<8x64xbf16>, vector<64x192xbf16>, vector<8x192xf32> -> vector<8x192xf32>
    %555 = vector.extract_strided_slice %554 {offsets = [0, 0], sizes = [8, 16], strides = [1, 1]} : vector<8x192xf32> to vector<8x16xf32>
    %556 = vector.extract_strided_slice %554 {offsets = [0, 64], sizes = [8, 16], strides = [1, 1]} : vector<8x192xf32> to vector<8x16xf32>
    %557 = vector.extract_strided_slice %554 {offsets = [0, 128], sizes = [8, 16], strides = [1, 1]} : vector<8x192xf32> to vector<8x16xf32>
    %558 = arith.truncf %555 : vector<8x16xf32> to vector<8x16xbf16>
    %559 = arith.truncf %556 : vector<8x16xf32> to vector<8x16xbf16>
    %cst_246 = arith.constant dense<0.000000e+00> : vector<8x8xf32>
    %560 = tpu.matmul %558, %559, %cst_246 {dimension_numbers = #tpu.dot_dimension_numbers<[1], [1], [0], [0], [0, 0, 1, 0], [], []>} : vector<8x16xbf16>, vector<8x16xbf16>, vector<8x8xf32> -> vector<8x8xf32>
    %cst_247 = arith.constant 1.250000e-01 : f32
    %561 = vector.broadcast %cst_247 : f32 to vector<8x8xf32>
    %562 = arith.mulf %560, %561 : vector<8x8xf32>
    %563 = arith.addf %562, %7 : vector<8x8xf32>
    %cst_248 = arith.constant dense<0xFF800000> : vector<8xf32>
    %564 = vector.multi_reduction <maximumf>, %563, %cst_248 [1] : vector<8x8xf32> to vector<8xf32>
    %565 = vector.shape_cast %564 : vector<8xf32> to vector<8x1xf32>
    %566 = vector.broadcast %565 : vector<8x1xf32> to vector<8x8xf32>
    %567 = arith.subf %563, %566 : vector<8x8xf32>
    %568 = math.exp %567 : vector<8x8xf32>
    %cst_249 = arith.constant dense<0.000000e+00> : vector<8xf32>
    %569 = vector.multi_reduction <add>, %568, %cst_249 [1] : vector<8x8xf32> to vector<8xf32>
    %570 = vector.shape_cast %569 : vector<8xf32> to vector<8x1xf32>
    %571 = tpu.reciprocal %570 {approx = true} : vector<8x1xf32> -> vector<8x1xf32>
    %572 = vector.broadcast %571 : vector<8x1xf32> to vector<8x8xf32>
    %573 = arith.mulf %568, %572 : vector<8x8xf32>
    %574 = arith.truncf %573 : vector<8x8xf32> to vector<8x8xbf16>
    %575 = arith.truncf %557 : vector<8x16xf32> to vector<8x16xbf16>
    %cst_250 = arith.constant dense<0.000000e+00> : vector<8x16xf32>
    %576 = tpu.matmul %574, %575, %cst_250 {dimension_numbers = #tpu.dot_dimension_numbers<[1], [0], [0], [1], [0, 0, 1, 1], [], []>} : vector<8x8xbf16>, vector<8x16xbf16>, vector<8x16xf32> -> vector<8x16xf32>
    %c0_251 = arith.constant 0 : index
    %c0_252 = arith.constant 0 : index
    %577 = vector.load %arg18[%c0_251, %c0_252] : memref<8x64xf32, #tpu.memory_space<vmem>>, vector<8x16xf32>
    tpu.vector_store %arg18[%c0_251, %c0_252], %576 {strides = array<i32>} : memref<8x64xf32, #tpu.memory_space<vmem>>, vector<8x16xf32>,
    %578 = vector.extract_strided_slice %554 {offsets = [0, 16], sizes = [8, 16], strides = [1, 1]} : vector<8x192xf32> to vector<8x16xf32>
    %579 = vector.extract_strided_slice %554 {offsets = [0, 80], sizes = [8, 16], strides = [1, 1]} : vector<8x192xf32> to vector<8x16xf32>
    %580 = vector.extract_strided_slice %554 {offsets = [0, 144], sizes = [8, 16], strides = [1, 1]} : vector<8x192xf32> to vector<8x16xf32>
    %581 = arith.truncf %578 : vector<8x16xf32> to vector<8x16xbf16>
    %582 = arith.truncf %579 : vector<8x16xf32> to vector<8x16xbf16>
    %cst_253 = arith.constant dense<0.000000e+00> : vector<8x8xf32>
    %583 = tpu.matmul %581, %582, %cst_253 {dimension_numbers = #tpu.dot_dimension_numbers<[1], [1], [0], [0], [0, 0, 1, 0], [], []>} : vector<8x16xbf16>, vector<8x16xbf16>, vector<8x8xf32> -> vector<8x8xf32>
    %cst_254 = arith.constant 1.250000e-01 : f32
    %584 = vector.broadcast %cst_254 : f32 to vector<8x8xf32>
    %585 = arith.mulf %583, %584 : vector<8x8xf32>
    %586 = arith.addf %585, %7 : vector<8x8xf32>
    %cst_255 = arith.constant dense<0xFF800000> : vector<8xf32>
    %587 = vector.multi_reduction <maximumf>, %586, %cst_255 [1] : vector<8x8xf32> to vector<8xf32>
    %588 = vector.shape_cast %587 : vector<8xf32> to vector<8x1xf32>
    %589 = vector.broadcast %588 : vector<8x1xf32> to vector<8x8xf32>
    %590 = arith.subf %586, %589 : vector<8x8xf32>
    %591 = math.exp %590 : vector<8x8xf32>
    %cst_256 = arith.constant dense<0.000000e+00> : vector<8xf32>
    %592 = vector.multi_reduction <add>, %591, %cst_256 [1] : vector<8x8xf32> to vector<8xf32>
    %593 = vector.shape_cast %592 : vector<8xf32> to vector<8x1xf32>
    %594 = tpu.reciprocal %593 {approx = true} : vector<8x1xf32> -> vector<8x1xf32>
    %595 = vector.broadcast %594 : vector<8x1xf32> to vector<8x8xf32>
    %596 = arith.mulf %591, %595 : vector<8x8xf32>
    %597 = arith.truncf %596 : vector<8x8xf32> to vector<8x8xbf16>
    %598 = arith.truncf %580 : vector<8x16xf32> to vector<8x16xbf16>
    %cst_257 = arith.constant dense<0.000000e+00> : vector<8x16xf32>
    %599 = tpu.matmul %597, %598, %cst_257 {dimension_numbers = #tpu.dot_dimension_numbers<[1], [0], [0], [1], [0, 0, 1, 1], [], []>} : vector<8x8xbf16>, vector<8x16xbf16>, vector<8x16xf32> -> vector<8x16xf32>
    %c0_258 = arith.constant 0 : index
    %c16_259 = arith.constant 16 : index
    %600 = vector.load %arg18[%c0_258, %c16_259] : memref<8x64xf32, #tpu.memory_space<vmem>>, vector<8x16xf32>
    tpu.vector_store %arg18[%c0_258, %c16_259], %599 {strides = array<i32>} : memref<8x64xf32, #tpu.memory_space<vmem>>, vector<8x16xf32>,
    %601 = vector.extract_strided_slice %554 {offsets = [0, 32], sizes = [8, 16], strides = [1, 1]} : vector<8x192xf32> to vector<8x16xf32>
    %602 = vector.extract_strided_slice %554 {offsets = [0, 96], sizes = [8, 16], strides = [1, 1]} : vector<8x192xf32> to vector<8x16xf32>
    %603 = vector.extract_strided_slice %554 {offsets = [0, 160], sizes = [8, 16], strides = [1, 1]} : vector<8x192xf32> to vector<8x16xf32>
    %604 = arith.truncf %601 : vector<8x16xf32> to vector<8x16xbf16>
    %605 = arith.truncf %602 : vector<8x16xf32> to vector<8x16xbf16>
    %cst_260 = arith.constant dense<0.000000e+00> : vector<8x8xf32>
    %606 = tpu.matmul %604, %605, %cst_260 {dimension_numbers = #tpu.dot_dimension_numbers<[1], [1], [0], [0], [0, 0, 1, 0], [], []>} : vector<8x16xbf16>, vector<8x16xbf16>, vector<8x8xf32> -> vector<8x8xf32>
    %cst_261 = arith.constant 1.250000e-01 : f32
    %607 = vector.broadcast %cst_261 : f32 to vector<8x8xf32>
    %608 = arith.mulf %606, %607 : vector<8x8xf32>
    %609 = arith.addf %608, %7 : vector<8x8xf32>
    %cst_262 = arith.constant dense<0xFF800000> : vector<8xf32>
    %610 = vector.multi_reduction <maximumf>, %609, %cst_262 [1] : vector<8x8xf32> to vector<8xf32>
    %611 = vector.shape_cast %610 : vector<8xf32> to vector<8x1xf32>
    %612 = vector.broadcast %611 : vector<8x1xf32> to vector<8x8xf32>
    %613 = arith.subf %609, %612 : vector<8x8xf32>
    %614 = math.exp %613 : vector<8x8xf32>
    %cst_263 = arith.constant dense<0.000000e+00> : vector<8xf32>
    %615 = vector.multi_reduction <add>, %614, %cst_263 [1] : vector<8x8xf32> to vector<8xf32>
    %616 = vector.shape_cast %615 : vector<8xf32> to vector<8x1xf32>
    %617 = tpu.reciprocal %616 {approx = true} : vector<8x1xf32> -> vector<8x1xf32>
    %618 = vector.broadcast %617 : vector<8x1xf32> to vector<8x8xf32>
    %619 = arith.mulf %614, %618 : vector<8x8xf32>
    %620 = arith.truncf %619 : vector<8x8xf32> to vector<8x8xbf16>
    %621 = arith.truncf %603 : vector<8x16xf32> to vector<8x16xbf16>
    %cst_264 = arith.constant dense<0.000000e+00> : vector<8x16xf32>
    %622 = tpu.matmul %620, %621, %cst_264 {dimension_numbers = #tpu.dot_dimension_numbers<[1], [0], [0], [1], [0, 0, 1, 1], [], []>} : vector<8x8xbf16>, vector<8x16xbf16>, vector<8x16xf32> -> vector<8x16xf32>
    %c0_265 = arith.constant 0 : index
    %c32_266 = arith.constant 32 : index
    %623 = vector.load %arg18[%c0_265, %c32_266] : memref<8x64xf32, #tpu.memory_space<vmem>>, vector<8x16xf32>
    tpu.vector_store %arg18[%c0_265, %c32_266], %622 {strides = array<i32>} : memref<8x64xf32, #tpu.memory_space<vmem>>, vector<8x16xf32>,
    %624 = vector.extract_strided_slice %554 {offsets = [0, 48], sizes = [8, 16], strides = [1, 1]} : vector<8x192xf32> to vector<8x16xf32>
    %625 = vector.extract_strided_slice %554 {offsets = [0, 112], sizes = [8, 16], strides = [1, 1]} : vector<8x192xf32> to vector<8x16xf32>
    %626 = vector.extract_strided_slice %554 {offsets = [0, 176], sizes = [8, 16], strides = [1, 1]} : vector<8x192xf32> to vector<8x16xf32>
    %627 = arith.truncf %624 : vector<8x16xf32> to vector<8x16xbf16>
    %628 = arith.truncf %625 : vector<8x16xf32> to vector<8x16xbf16>
    %cst_267 = arith.constant dense<0.000000e+00> : vector<8x8xf32>
    %629 = tpu.matmul %627, %628, %cst_267 {dimension_numbers = #tpu.dot_dimension_numbers<[1], [1], [0], [0], [0, 0, 1, 0], [], []>} : vector<8x16xbf16>, vector<8x16xbf16>, vector<8x8xf32> -> vector<8x8xf32>
    %cst_268 = arith.constant 1.250000e-01 : f32
    %630 = vector.broadcast %cst_268 : f32 to vector<8x8xf32>
    %631 = arith.mulf %629, %630 : vector<8x8xf32>
    %632 = arith.addf %631, %7 : vector<8x8xf32>
    %cst_269 = arith.constant dense<0xFF800000> : vector<8xf32>
    %633 = vector.multi_reduction <maximumf>, %632, %cst_269 [1] : vector<8x8xf32> to vector<8xf32>
    %634 = vector.shape_cast %633 : vector<8xf32> to vector<8x1xf32>
    %635 = vector.broadcast %634 : vector<8x1xf32> to vector<8x8xf32>
    %636 = arith.subf %632, %635 : vector<8x8xf32>
    %637 = math.exp %636 : vector<8x8xf32>
    %cst_270 = arith.constant dense<0.000000e+00> : vector<8xf32>
    %638 = vector.multi_reduction <add>, %637, %cst_270 [1] : vector<8x8xf32> to vector<8xf32>
    %639 = vector.shape_cast %638 : vector<8xf32> to vector<8x1xf32>
    %640 = tpu.reciprocal %639 {approx = true} : vector<8x1xf32> -> vector<8x1xf32>
    %641 = vector.broadcast %640 : vector<8x1xf32> to vector<8x8xf32>
    %642 = arith.mulf %637, %641 : vector<8x8xf32>
    %643 = arith.truncf %642 : vector<8x8xf32> to vector<8x8xbf16>
    %644 = arith.truncf %626 : vector<8x16xf32> to vector<8x16xbf16>
    %cst_271 = arith.constant dense<0.000000e+00> : vector<8x16xf32>
    %645 = tpu.matmul %643, %644, %cst_271 {dimension_numbers = #tpu.dot_dimension_numbers<[1], [0], [0], [1], [0, 0, 1, 1], [], []>} : vector<8x8xbf16>, vector<8x16xbf16>, vector<8x16xf32> -> vector<8x16xf32>
    %c0_272 = arith.constant 0 : index
    %c48_273 = arith.constant 48 : index
    %646 = vector.load %arg18[%c0_272, %c48_273] : memref<8x64xf32, #tpu.memory_space<vmem>>, vector<8x16xf32>
    tpu.vector_store %arg18[%c0_272, %c48_273], %645 {strides = array<i32>} : memref<8x64xf32, #tpu.memory_space<vmem>>, vector<8x16xf32>,
    %c0_274 = arith.constant 0 : index
    %c0_275 = arith.constant 0 : index
    %647 = vector.load %arg18[%c0_274, %c0_275] : memref<8x64xf32, #tpu.memory_space<vmem>>, vector<8x64xf32>
    %648 = arith.truncf %647 : vector<8x64xf32> to vector<8x64xbf16>
    %c3_276 = arith.constant 3 : index
    %c0_277 = arith.constant 0 : index
    %c0_278 = arith.constant 0 : index
    %649 = vector.load %arg5[%c3_276, %c0_277, %c0_278] : memref<4x64x64xbf16, #tpu.memory_space<vmem>>, vector<1x64x64xbf16>
    %650 = vector.shape_cast %649 : vector<1x64x64xbf16> to vector<64x64xbf16>
    %cst_279 = arith.constant dense<0.000000e+00> : vector<8x64xf32>
    %651 = tpu.matmul %648, %650, %cst_279 {dimension_numbers = #tpu.dot_dimension_numbers<[1], [0], [0], [1], [0, 0, 1, 1], [], []>} : vector<8x64xbf16>, vector<64x64xbf16>, vector<8x64xf32> -> vector<8x64xf32>
    %c3_280 = arith.constant 3 : index
    %c0_281 = arith.constant 0 : index
    %c0_282 = arith.constant 0 : index
    %652 = vector.load %arg6[%c3_280, %c0_281, %c0_282] : memref<4x1x64xf32, #tpu.memory_space<vmem>>, vector<1x1x64xf32>
    %653 = vector.shape_cast %652 : vector<1x1x64xf32> to vector<1x64xf32>
    %654 = vector.broadcast %653 : vector<1x64xf32> to vector<8x64xf32>
    %655 = arith.addf %651, %654 : vector<8x64xf32>
    %656 = arith.addf %526, %655 : vector<8x64xf32>
    %c3_283 = arith.constant 3 : index
    %c0_284 = arith.constant 0 : index
    %c0_285 = arith.constant 0 : index
    %657 = vector.load %arg7[%c3_283, %c0_284, %c0_285] : memref<4x1x64xf32, #tpu.memory_space<vmem>>, vector<1x1x64xf32>
    %658 = vector.shape_cast %657 : vector<1x1x64xf32> to vector<1x64xf32>
    %c3_286 = arith.constant 3 : index
    %c0_287 = arith.constant 0 : index
    %c0_288 = arith.constant 0 : index
    %659 = vector.load %arg8[%c3_286, %c0_287, %c0_288] : memref<4x1x64xf32, #tpu.memory_space<vmem>>, vector<1x1x64xf32>
    %660 = vector.shape_cast %659 : vector<1x1x64xf32> to vector<1x64xf32>
    %cst_289 = arith.constant dense<0.000000e+00> : vector<8xf32>
    %661 = vector.multi_reduction <add>, %656, %cst_289 [1] : vector<8x64xf32> to vector<8xf32>
    %662 = vector.shape_cast %661 : vector<8xf32> to vector<8x1xf32>
    %cst_290 = arith.constant 6.400000e+01 : f32
    %663 = vector.broadcast %cst_290 : f32 to vector<8x1xf32>
    %664 = arith.divf %662, %663 : vector<8x1xf32>
    %665 = vector.broadcast %664 : vector<8x1xf32> to vector<8x64xf32>
    %666 = arith.subf %656, %665 : vector<8x64xf32>
    %667 = arith.mulf %666, %666 : vector<8x64xf32>
    %cst_291 = arith.constant dense<0.000000e+00> : vector<8xf32>
    %668 = vector.multi_reduction <add>, %667, %cst_291 [1] : vector<8x64xf32> to vector<8xf32>
    %669 = vector.shape_cast %668 : vector<8xf32> to vector<8x1xf32>
    %cst_292 = arith.constant 6.400000e+01 : f32
    %670 = vector.broadcast %cst_292 : f32 to vector<8x1xf32>
    %671 = arith.divf %669, %670 : vector<8x1xf32>
    %cst_293 = arith.constant 9.99999974E-6 : f32
    %672 = vector.broadcast %cst_293 : f32 to vector<8x1xf32>
    %673 = arith.addf %671, %672 : vector<8x1xf32>
    %674 = math.rsqrt %673 : vector<8x1xf32>
    %675 = vector.broadcast %674 : vector<8x1xf32> to vector<8x64xf32>
    %676 = arith.mulf %666, %675 : vector<8x64xf32>
    %677 = vector.broadcast %658 : vector<1x64xf32> to vector<8x64xf32>
    %678 = arith.mulf %676, %677 : vector<8x64xf32>
    %679 = vector.broadcast %660 : vector<1x64xf32> to vector<8x64xf32>
    %680 = arith.addf %678, %679 : vector<8x64xf32>
    %681 = arith.truncf %680 : vector<8x64xf32> to vector<8x64xbf16>
    %c3_294 = arith.constant 3 : index
    %c0_295 = arith.constant 0 : index
    %c0_296 = arith.constant 0 : index
    %682 = vector.load %arg9[%c3_294, %c0_295, %c0_296] : memref<4x64x256xbf16, #tpu.memory_space<vmem>>, vector<1x64x256xbf16>
    %683 = vector.shape_cast %682 : vector<1x64x256xbf16> to vector<64x256xbf16>
    %cst_297 = arith.constant dense<0.000000e+00> : vector<8x256xf32>
    %684 = tpu.matmul %681, %683, %cst_297 {dimension_numbers = #tpu.dot_dimension_numbers<[1], [0], [0], [1], [0, 0, 1, 1], [], []>} : vector<8x64xbf16>, vector<64x256xbf16>, vector<8x256xf32> -> vector<8x256xf32>
    %c3_298 = arith.constant 3 : index
    %c0_299 = arith.constant 0 : index
    %c0_300 = arith.constant 0 : index
    %685 = vector.load %arg10[%c3_298, %c0_299, %c0_300] : memref<4x1x256xf32, #tpu.memory_space<vmem>>, vector<1x1x256xf32>
    %686 = vector.shape_cast %685 : vector<1x1x256xf32> to vector<1x256xf32>
    %687 = vector.broadcast %686 : vector<1x256xf32> to vector<8x256xf32>
    %688 = arith.addf %684, %687 : vector<8x256xf32>
    %cst_301 = arith.constant 0.000000e+00 : f32
    %689 = vector.broadcast %cst_301 : f32 to vector<8x256xf32>
    %690 = arith.maximumf %688, %689 : vector<8x256xf32>
    %691 = arith.truncf %690 : vector<8x256xf32> to vector<8x256xbf16>
    %c3_302 = arith.constant 3 : index
    %c0_303 = arith.constant 0 : index
    %c0_304 = arith.constant 0 : index
    %692 = vector.load %arg11[%c3_302, %c0_303, %c0_304] : memref<4x256x64xbf16, #tpu.memory_space<vmem>>, vector<1x256x64xbf16>
    %693 = vector.shape_cast %692 : vector<1x256x64xbf16> to vector<256x64xbf16>
    %cst_305 = arith.constant dense<0.000000e+00> : vector<8x64xf32>
    %694 = tpu.matmul %691, %693, %cst_305 {dimension_numbers = #tpu.dot_dimension_numbers<[1], [0], [0], [1], [0, 0, 1, 1], [], []>} : vector<8x256xbf16>, vector<256x64xbf16>, vector<8x64xf32> -> vector<8x64xf32>
    %c3_306 = arith.constant 3 : index
    %c0_307 = arith.constant 0 : index
    %c0_308 = arith.constant 0 : index
    %695 = vector.load %arg12[%c3_306, %c0_307, %c0_308] : memref<4x1x64xf32, #tpu.memory_space<vmem>>, vector<1x1x64xf32>
    %696 = vector.shape_cast %695 : vector<1x1x64xf32> to vector<1x64xf32>
    %697 = vector.broadcast %696 : vector<1x64xf32> to vector<8x64xf32>
    %698 = arith.addf %694, %697 : vector<8x64xf32>
    %699 = arith.addf %656, %698 : vector<8x64xf32>
    %c0_309 = arith.constant 0 : index
    %c0_310 = arith.constant 0 : index
    %700 = vector.load %arg13[%c0_309, %c0_310] : memref<1x64xf32, #tpu.memory_space<vmem>>, vector<1x64xf32>
    %c0_311 = arith.constant 0 : index
    %c0_312 = arith.constant 0 : index
    %701 = vector.load %arg14[%c0_311, %c0_312] : memref<1x64xf32, #tpu.memory_space<vmem>>, vector<1x64xf32>
    %cst_313 = arith.constant dense<0.000000e+00> : vector<8xf32>
    %702 = vector.multi_reduction <add>, %699, %cst_313 [1] : vector<8x64xf32> to vector<8xf32>
    %703 = vector.shape_cast %702 : vector<8xf32> to vector<8x1xf32>
    %cst_314 = arith.constant 6.400000e+01 : f32
    %704 = vector.broadcast %cst_314 : f32 to vector<8x1xf32>
    %705 = arith.divf %703, %704 : vector<8x1xf32>
    %706 = vector.broadcast %705 : vector<8x1xf32> to vector<8x64xf32>
    %707 = arith.subf %699, %706 : vector<8x64xf32>
    %708 = arith.mulf %707, %707 : vector<8x64xf32>
    %cst_315 = arith.constant dense<0.000000e+00> : vector<8xf32>
    %709 = vector.multi_reduction <add>, %708, %cst_315 [1] : vector<8x64xf32> to vector<8xf32>
    %710 = vector.shape_cast %709 : vector<8xf32> to vector<8x1xf32>
    %cst_316 = arith.constant 6.400000e+01 : f32
    %711 = vector.broadcast %cst_316 : f32 to vector<8x1xf32>
    %712 = arith.divf %710, %711 : vector<8x1xf32>
    %cst_317 = arith.constant 9.99999974E-6 : f32
    %713 = vector.broadcast %cst_317 : f32 to vector<8x1xf32>
    %714 = arith.addf %712, %713 : vector<8x1xf32>
    %715 = math.rsqrt %714 : vector<8x1xf32>
    %716 = vector.broadcast %715 : vector<8x1xf32> to vector<8x64xf32>
    %717 = arith.mulf %707, %716 : vector<8x64xf32>
    %718 = vector.broadcast %700 : vector<1x64xf32> to vector<8x64xf32>
    %719 = arith.mulf %717, %718 : vector<8x64xf32>
    %720 = vector.broadcast %701 : vector<1x64xf32> to vector<8x64xf32>
    %721 = arith.addf %719, %720 : vector<8x64xf32>
    %722 = arith.truncf %721 : vector<8x64xf32> to vector<8x64xbf16>
    %c0_318 = arith.constant 0 : index
    %c0_319 = arith.constant 0 : index
    %723 = vector.load %arg15[%c0_318, %c0_319] : memref<64x128xbf16, #tpu.memory_space<vmem>>, vector<64x128xbf16>
    %cst_320 = arith.constant dense<0.000000e+00> : vector<8x128xf32>
    %724 = tpu.matmul %722, %723, %cst_320 {dimension_numbers = #tpu.dot_dimension_numbers<[1], [0], [0], [1], [0, 0, 1, 1], [], []>} : vector<8x64xbf16>, vector<64x128xbf16>, vector<8x128xf32> -> vector<8x128xf32>
    %c0_321 = arith.constant 0 : index
    %c0_322 = arith.constant 0 : index
    %725 = vector.load %arg16[%c0_321, %c0_322] : memref<1x128xf32, #tpu.memory_space<vmem>>, vector<1x128xf32>
    %726 = vector.broadcast %725 : vector<1x128xf32> to vector<8x128xf32>
    %727 = arith.addf %724, %726 : vector<8x128xf32>
    %c0_323 = arith.constant 0 : index
    %c0_324 = arith.constant 0 : index
    %c0_325 = arith.constant 0 : index
    %728 = vector.load %arg17[%c0_323, %c0_324, %c0_325] : memref<1x8x128xf32, #tpu.memory_space<vmem>>, vector<1x8x128xf32>
    %729 = vector.shape_cast %728 : vector<1x8x128xf32> to vector<8x128xf32>
    %730 = vector.shape_cast %727 : vector<8x128xf32> to vector<1x8x128xf32>
    tpu.vector_store %arg17[%c0_323, %c0_324, %c0_325], %730 {strides = array<i32>} : memref<1x8x128xf32, #tpu.memory_space<vmem>>, vector<1x8x128xf32>,
    return
  }
  func.func @transform_0(%arg0: i32) -> (i32, i32, i32) {
    %c0_i32 = arith.constant 0 : i32
    %c0_i32_0 = arith.constant 0 : i32
    %c0_i32_1 = arith.constant 0 : i32
    return %arg0, %c0_i32, %c0_i32_0 : i32, i32, i32
  }
  func.func @transform_1(%arg0: i32) -> (i32, i32, i32) {
    %c0_i32 = arith.constant 0 : i32
    %c0_i32_0 = arith.constant 0 : i32
    %c0_i32_1 = arith.constant 0 : i32
    %c0_i32_2 = arith.constant 0 : i32
    return %c0_i32, %c0_i32_0, %c0_i32_1 : i32, i32, i32
  }
  func.func @transform_2(%arg0: i32) -> (i32, i32, i32) {
    %c0_i32 = arith.constant 0 : i32
    %c0_i32_0 = arith.constant 0 : i32
    %c0_i32_1 = arith.constant 0 : i32
    %c0_i32_2 = arith.constant 0 : i32
    return %c0_i32, %c0_i32_0, %c0_i32_1 : i32, i32, i32
  }
  func.func @transform_3(%arg0: i32) -> (i32, i32, i32) {
    %c0_i32 = arith.constant 0 : i32
    %c0_i32_0 = arith.constant 0 : i32
    %c0_i32_1 = arith.constant 0 : i32
    %c0_i32_2 = arith.constant 0 : i32
    return %c0_i32, %c0_i32_0, %c0_i32_1 : i32, i32, i32
  }
  func.func @transform_4(%arg0: i32) -> (i32, i32, i32) {
    %c0_i32 = arith.constant 0 : i32
    %c0_i32_0 = arith.constant 0 : i32
    %c0_i32_1 = arith.constant 0 : i32
    %c0_i32_2 = arith.constant 0 : i32
    return %c0_i32, %c0_i32_0, %c0_i32_1 : i32, i32, i32
  }
  func.func @transform_5(%arg0: i32) -> (i32, i32, i32) {
    %c0_i32 = arith.constant 0 : i32
    %c0_i32_0 = arith.constant 0 : i32
    %c0_i32_1 = arith.constant 0 : i32
    %c0_i32_2 = arith.constant 0 : i32
    return %c0_i32, %c0_i32_0, %c0_i32_1 : i32, i32, i32
  }
  func.func @transform_6(%arg0: i32) -> (i32, i32, i32) {
    %c0_i32 = arith.constant 0 : i32
    %c0_i32_0 = arith.constant 0 : i32
    %c0_i32_1 = arith.constant 0 : i32
    %c0_i32_2 = arith.constant 0 : i32
    return %c0_i32, %c0_i32_0, %c0_i32_1 : i32, i32, i32
  }
  func.func @transform_7(%arg0: i32) -> (i32, i32, i32) {
    %c0_i32 = arith.constant 0 : i32
    %c0_i32_0 = arith.constant 0 : i32
    %c0_i32_1 = arith.constant 0 : i32
    %c0_i32_2 = arith.constant 0 : i32
    return %c0_i32, %c0_i32_0, %c0_i32_1 : i32, i32, i32
  }
  func.func @transform_8(%arg0: i32) -> (i32, i32, i32) {
    %c0_i32 = arith.constant 0 : i32
    %c0_i32_0 = arith.constant 0 : i32
    %c0_i32_1 = arith.constant 0 : i32
    %c0_i32_2 = arith.constant 0 : i32
    return %c0_i32, %c0_i32_0, %c0_i32_1 : i32, i32, i32
  }
  func.func @transform_9(%arg0: i32) -> (i32, i32, i32) {
    %c0_i32 = arith.constant 0 : i32
    %c0_i32_0 = arith.constant 0 : i32
    %c0_i32_1 = arith.constant 0 : i32
    %c0_i32_2 = arith.constant 0 : i32
    return %c0_i32, %c0_i32_0, %c0_i32_1 : i32, i32, i32
  }
  func.func @transform_10(%arg0: i32) -> (i32, i32, i32) {
    %c0_i32 = arith.constant 0 : i32
    %c0_i32_0 = arith.constant 0 : i32
    %c0_i32_1 = arith.constant 0 : i32
    %c0_i32_2 = arith.constant 0 : i32
    return %c0_i32, %c0_i32_0, %c0_i32_1 : i32, i32, i32
  }
  func.func @transform_11(%arg0: i32) -> (i32, i32, i32) {
    %c0_i32 = arith.constant 0 : i32
    %c0_i32_0 = arith.constant 0 : i32
    %c0_i32_1 = arith.constant 0 : i32
    %c0_i32_2 = arith.constant 0 : i32
    return %c0_i32, %c0_i32_0, %c0_i32_1 : i32, i32, i32
  }
  func.func @transform_12(%arg0: i32) -> (i32, i32) {
    %c0_i32 = arith.constant 0 : i32
    %c0_i32_0 = arith.constant 0 : i32
    %c0_i32_1 = arith.constant 0 : i32
    return %c0_i32, %c0_i32_0 : i32, i32
  }
  func.func @transform_13(%arg0: i32) -> (i32, i32) {
    %c0_i32 = arith.constant 0 : i32
    %c0_i32_0 = arith.constant 0 : i32
    %c0_i32_1 = arith.constant 0 : i32
    return %c0_i32, %c0_i32_0 : i32, i32
  }
  func.func @transform_14(%arg0: i32) -> (i32, i32) {
    %c0_i32 = arith.constant 0 : i32
    %c0_i32_0 = arith.constant 0 : i32
    %c0_i32_1 = arith.constant 0 : i32
    return %c0_i32, %c0_i32_0 : i32, i32
  }
  func.func @transform_15(%arg0: i32) -> (i32, i32) {
    %c0_i32 = arith.constant 0 : i32
    %c0_i32_0 = arith.constant 0 : i32
    %c0_i32_1 = arith.constant 0 : i32
    return %c0_i32, %c0_i32_0 : i32, i32
  }
  func.func @transform_16(%arg0: i32) -> (i32, i32, i32) {
    %c0_i32 = arith.constant 0 : i32
    %c0_i32_0 = arith.constant 0 : i32
    %c0_i32_1 = arith.constant 0 : i32
    return %arg0, %c0_i32, %c0_i32_0 : i32, i32, i32
  }
}

</mosaic_0001>

<llo_original>
// kernel: tpu_custom_call.1
$region0: #{tpu_custom_call.1}
  #allocation0 [shape = 'u32[]', space=smem, size = 0x4, offset = 0x4, fixed_abs, tag = 'smem constant byte address 0x4 - core index']
  #allocation1 [shape = 'u32[144,128]{1,0:T(1,128)}', space=vmem, size = 0x12000, scoped, tag = 'internal scratch']
  #allocation2 [shape = 'f32[8,64]{1,0:T(8,128)}', space=vmem, size = 0x1000, scoped, tag = 'scratch operand']
  %s0 = inlined_call_operand.vmem [shape: f32[2,8,64], index: 0, kind: input, shape index: {}]
  %s1 = inlined_call_operand.vmem [shape: f32[4,1,64], index: 1, kind: input, shape index: {}]
  %s2 = inlined_call_operand.vmem [shape: f32[4,1,64], index: 2, kind: input, shape index: {}]
  %s3 = inlined_call_operand.vmem [shape: bf16[4,64,192], index: 3, kind: input, shape index: {}]
  %s4 = inlined_call_operand.vmem [shape: bf16[4,64,64], index: 4, kind: input, shape index: {}]
  %s5 = inlined_call_operand.vmem [shape: f32[4,1,64], index: 5, kind: input, shape index: {}]
  %s6 = inlined_call_operand.vmem [shape: f32[4,1,64], index: 6, kind: input, shape index: {}]
  %s7 = inlined_call_operand.vmem [shape: f32[4,1,64], index: 7, kind: input, shape index: {}]
  %s8 = inlined_call_operand.vmem [shape: bf16[4,64,256], index: 8, kind: input, shape index: {}]
  %s9 = inlined_call_operand.vmem [shape: f32[4,1,256], index: 9, kind: input, shape index: {}]
  %s10 = inlined_call_operand.vmem [shape: bf16[4,256,64], index: 10, kind: input, shape index: {}]
  %s11 = inlined_call_operand.vmem [shape: f32[4,1,64], index: 11, kind: input, shape index: {}]
  %s12 = inlined_call_operand.vmem [shape: f32[1,64], index: 12, kind: input, shape index: {}]
  %s13 = inlined_call_operand.vmem [shape: f32[1,64], index: 13, kind: input, shape index: {}]
  %s14 = inlined_call_operand.vmem [shape: bf16[64,128], index: 14, kind: input, shape index: {}]
  %s15 = inlined_call_operand.vmem [shape: f32[1,128], index: 15, kind: input, shape index: {}]
  %s16 = inlined_call_operand.hbm [shape: f32[2,8,128], index: 16, kind: output, shape index: {}]
  %s17 = sld [smem:[#allocation0]]
  $region97: #{tpu_custom_call.1} parent=0
    _
  %s19 = ssub.s32 1, %s17
  %s20 = scalar_select 0, %s19, %s17
  $region1: #{tpu_custom_call.1} parent=0
    #allocation3 [shape = 'u8[8192]{0}', space=vmem, size = 0x2000, scoped, tag = 'output window, operand 0']
    #allocation4 [shape = 's32[2]{0}', space=sflag, size = 0x8, scoped, tag = 'scoped memory for tpu_custom_call.1']
    %21 = vsyncpa [#allocation4], 0
    %s22 = scalar_lea.sflag [#allocation4], 1
    %23 = vsyncpa %s22, 0
    loop: start=0, step=1, limit=4
    $region2: #{tpu_custom_call.1} parent=1 // loop_pre_header
      _
    $region3: #{tpu_custom_call.1} parent=1 // loop_header
      %s25 = sphi 0, %s29
      %p26 = scmp.ge.s32.totalorder %s25, 4
      %s35 = sphi 0, %s37
      %s38 = sphi 0, %s35
      %s39 = sphi 0, %s38
      %s55 = sphi 0, %s39
      %s59 = sphi 0, %s59
      %s61 = sphi 0, %s59
      %s62 = sphi 0, %s61
      %s76 = sphi 0, %s62
      %s80 = sphi 0, %s80
      %s82 = sphi 0, %s80
      %s83 = sphi 0, %s82
      %s97 = sphi 0, %s83
      %s101 = sphi 0, %s101
      %s103 = sphi 0, %s101
      %s104 = sphi 0, %s103
      %s118 = sphi 0, %s104
      %s122 = sphi 0, %s122
      %s124 = sphi 0, %s122
      %s125 = sphi 0, %s124
      %s139 = sphi 0, %s125
      %s143 = sphi 0, %s143
      %s145 = sphi 0, %s143
      %s146 = sphi 0, %s145
      %s160 = sphi 0, %s146
      %s164 = sphi 0, %s164
      %s166 = sphi 0, %s164
      %s167 = sphi 0, %s166
      %s181 = sphi 0, %s167
      %s185 = sphi 0, %s185
      %s187 = sphi 0, %s185
      %s188 = sphi 0, %s187
      %s202 = sphi 0, %s188
      %s206 = sphi 0, %s206
      %s208 = sphi 0, %s206
      %s209 = sphi 0, %s208
      %s223 = sphi 0, %s209
      %s227 = sphi 0, %s227
      %s229 = sphi 0, %s227
      %s230 = sphi 0, %s229
      %s244 = sphi 0, %s230
      %s248 = sphi 0, %s248
      %s250 = sphi 0, %s248
      %s251 = sphi 0, %s250
      %s265 = sphi 0, %s251
      %s269 = sphi 0, %s269
      %s271 = sphi 0, %s269
      %s272 = sphi 0, %s271
      %s286 = sphi 0, %s272
      %s290 = sphi 0, %s290
      %s292 = sphi 0, %s290
      %s293 = sphi 0, %s292
      %s307 = sphi 0, %s293
      %s311 = sphi 0, %s311
      %s313 = sphi 0, %s311
      %s314 = sphi 0, %s313
      %s328 = sphi 0, %s314
      %s332 = sphi 0, %s332
      %s334 = sphi 0, %s332
      %s335 = sphi 0, %s334
      %s349 = sphi 0, %s335
      %s353 = sphi 0, %s353
      %s355 = sphi 0, %s353
      %s356 = sphi 0, %s355
      %s370 = sphi 0, %s356
      %s376 = sphi 0, %s378
      %s379 = sphi 0, %s376
      %s380 = sphi 0, %s379
      %s396 = sphi 0, %s380
    $region4: #{tpu_custom_call.1} parent=1 // loop_header_branch
      %28 = sbr.rel (%p26) target = $region8
    $region5: #{tpu_custom_call.1} parent=1 // loop_body
      %s30 = ssub.s32 %s25, 1
      %s31 = ssub.s32 %s25, 2
      %s32 = sadd.s32 %s25, 1
      %s33 = ssub.s32 %s25, %s32
      %p34 = scmp.eq.s32.totalorder %s33, 0
      %s36 = sadd.s32 %s35, 1
      %s37 = scalar_select %p34, %s35, %s36
      %p40 = pneg %p34
      %p41 = scmp.eq.s32.totalorder %s25, 1
      %p42 = por %p40, %p41
      %p43 = scmp.ne.s32.totalorder %s35, %s38
      %p44 = scmp.eq.s32.totalorder %s25, 0
      %p45 = por %p43, %p44
      %p46 = scmp.ne.s32.totalorder %s35, %s38
      %p47 = scmp.eq.s32.totalorder %s30, 1
      %p48 = por %p46, %p47
      %p49 = scmp.ne.s32.totalorder %s38, %s39
      %p50 = scmp.eq.s32.totalorder %s30, 0
      %p51 = por %p49, %p50
      %p52 = scmp.ne.s32.totalorder %s38, %s39
      %p53 = scmp.eq.s32.totalorder %s31, 1
      %p54 = por %p52, %p53
      %p56 = scmp.ne.s32.totalorder %s39, %s55
      %p57 = scmp.eq.s32.totalorder %s31, 0
      %p58 = por %p56, %p57
      %s60 = sadd.s32 %s59, 1
      %p63 = scmp.eq.s32.totalorder %s25, 1
      %p64 = scmp.ne.s32.totalorder %s59, %s61
      %p65 = scmp.eq.s32.totalorder %s25, 0
      %p66 = por %p64, %p65
      %p67 = scmp.ne.s32.totalorder %s59, %s61
      %p68 = scmp.eq.s32.totalorder %s30, 1
      %p69 = por %p67, %p68
      %p70 = scmp.ne.s32.totalorder %s61, %s62
      %p71 = scmp.eq.s32.totalorder %s30, 0
      %p72 = por %p70, %p71
      %p73 = scmp.ne.s32.totalorder %s61, %s62
      %p74 = scmp.eq.s32.totalorder %s31, 1
      %p75 = por %p73, %p74
      %p77 = scmp.ne.s32.totalorder %s62, %s76
      %p78 = scmp.eq.s32.totalorder %s31, 0
      %p79 = por %p77, %p78
      %s81 = sadd.s32 %s80, 1
      %p84 = scmp.eq.s32.totalorder %s25, 1
      %p85 = scmp.ne.s32.totalorder %s80, %s82
      %p86 = scmp.eq.s32.totalorder %s25, 0
      %p87 = por %p85, %p86
      %p88 = scmp.ne.s32.totalorder %s80, %s82
      %p89 = scmp.eq.s32.totalorder %s30, 1
      %p90 = por %p88, %p89
      %p91 = scmp.ne.s32.totalorder %s82, %s83
      %p92 = scmp.eq.s32.totalorder %s30, 0
      %p93 = por %p91, %p92
      %p94 = scmp.ne.s32.totalorder %s82, %s83
      %p95 = scmp.eq.s32.totalorder %s31, 1
      %p96 = por %p94, %p95
      %p98 = scmp.ne.s32.totalorder %s83, %s97
      %p99 = scmp.eq.s32.totalorder %s31, 0
      %p100 = por %p98, %p99
      %s102 = sadd.s32 %s101, 1
      %p105 = scmp.eq.s32.totalorder %s25, 1
      %p106 = scmp.ne.s32.totalorder %s101, %s103
      %p107 = scmp.eq.s32.totalorder %s25, 0
      %p108 = por %p106, %p107
      %p109 = scmp.ne.s32.totalorder %s101, %s103
      %p110 = scmp.eq.s32.totalorder %s30, 1
      %p111 = por %p109, %p110
      %p112 = scmp.ne.s32.totalorder %s103, %s104
      %p113 = scmp.eq.s32.totalorder %s30, 0
      %p114 = por %p112, %p113
      %p115 = scmp.ne.s32.totalorder %s103, %s104
      %p116 = scmp.eq.s32.totalorder %s31, 1
      %p117 = por %p115, %p116
      %p119 = scmp.ne.s32.totalorder %s104, %s118
      %p120 = scmp.eq.s32.totalorder %s31, 0
      %p121 = por %p119, %p120
      %s123 = sadd.s32 %s122, 1
      %p126 = scmp.eq.s32.totalorder %s25, 1
      %p127 = scmp.ne.s32.totalorder %s122, %s124
      %p128 = scmp.eq.s32.totalorder %s25, 0
      %p129 = por %p127, %p128
      %p130 = scmp.ne.s32.totalorder %s122, %s124
      %p131 = scmp.eq.s32.totalorder %s30, 1
      %p132 = por %p130, %p131
      %p133 = scmp.ne.s32.totalorder %s124, %s125
      %p134 = scmp.eq.s32.totalorder %s30, 0
      %p135 = por %p133, %p134
      %p136 = scmp.ne.s32.totalorder %s124, %s125
      %p137 = scmp.eq.s32.totalorder %s31, 1
      %p138 = por %p136, %p137
      %p140 = scmp.ne.s32.totalorder %s125, %s139
      %p141 = scmp.eq.s32.totalorder %s31, 0
      %p142 = por %p140, %p141
      %s144 = sadd.s32 %s143, 1
      %p147 = scmp.eq.s32.totalorder %s25, 1
      %p148 = scmp.ne.s32.totalorder %s143, %s145
      %p149 = scmp.eq.s32.totalorder %s25, 0
      %p150 = por %p148, %p149
      %p151 = scmp.ne.s32.totalorder %s143, %s145
      %p152 = scmp.eq.s32.totalorder %s30, 1
      %p153 = por %p151, %p152
      %p154 = scmp.ne.s32.totalorder %s145, %s146
      %p155 = scmp.eq.s32.totalorder %s30, 0
      %p156 = por %p154, %p155
      %p157 = scmp.ne.s32.totalorder %s145, %s146
      %p158 = scmp.eq.s32.totalorder %s31, 1
      %p159 = por %p157, %p158
      %p161 = scmp.ne.s32.totalorder %s146, %s160
      %p162 = scmp.eq.s32.totalorder %s31, 0
      %p163 = por %p161, %p162
      %s165 = sadd.s32 %s164, 1
      %p168 = scmp.eq.s32.totalorder %s25, 1
      %p169 = scmp.ne.s32.totalorder %s164, %s166
      %p170 = scmp.eq.s32.totalorder %s25, 0
      %p171 = por %p169, %p170
      %p172 = scmp.ne.s32.totalorder %s164, %s166
      %p173 = scmp.eq.s32.totalorder %s30, 1
      %p174 = por %p172, %p173
      %p175 = scmp.ne.s32.totalorder %s166, %s167
      %p176 = scmp.eq.s32.totalorder %s30, 0
      %p177 = por %p175, %p176
      %p178 = scmp.ne.s32.totalorder %s166, %s167
      %p179 = scmp.eq.s32.totalorder %s31, 1
      %p180 = por %p178, %p179
      %p182 = scmp.ne.s32.totalorder %s167, %s181
      %p183 = scmp.eq.s32.totalorder %s31, 0
      %p184 = por %p182, %p183
      %s186 = sadd.s32 %s185, 1
      %p189 = scmp.eq.s32.totalorder %s25, 1
      %p190 = scmp.ne.s32.totalorder %s185, %s187
      %p191 = scmp.eq.s32.totalorder %s25, 0
      %p192 = por %p190, %p191
      %p193 = scmp.ne.s32.totalorder %s185, %s187
      %p194 = scmp.eq.s32.totalorder %s30, 1
      %p195 = por %p193, %p194
      %p196 = scmp.ne.s32.totalorder %s187, %s188
      %p197 = scmp.eq.s32.totalorder %s30, 0
      %p198 = por %p196, %p197
      %p199 = scmp.ne.s32.totalorder %s187, %s188
      %p200 = scmp.eq.s32.totalorder %s31, 1
      %p201 = por %p199, %p200
      %p203 = scmp.ne.s32.totalorder %s188, %s202
      %p204 = scmp.eq.s32.totalorder %s31, 0
      %p205 = por %p203, %p204
      %s207 = sadd.s32 %s206, 1
      %p210 = scmp.eq.s32.totalorder %s25, 1
      %p211 = scmp.ne.s32.totalorder %s206, %s208
      %p212 = scmp.eq.s32.totalorder %s25, 0
      %p213 = por %p211, %p212
      %p214 = scmp.ne.s32.totalorder %s206, %s208
      %p215 = scmp.eq.s32.totalorder %s30, 1
      %p216 = por %p214, %p215
      %p217 = scmp.ne.s32.totalorder %s208, %s209
      %p218 = scmp.eq.s32.totalorder %s30, 0
      %p219 = por %p217, %p218
      %p220 = scmp.ne.s32.totalorder %s208, %s209
      %p221 = scmp.eq.s32.totalorder %s31, 1
      %p222 = por %p220, %p221
      %p224 = scmp.ne.s32.totalorder %s209, %s223
      %p225 = scmp.eq.s32.totalorder %s31, 0
      %p226 = por %p224, %p225
      %s228 = sadd.s32 %s227, 1
      %p231 = scmp.eq.s32.totalorder %s25, 1
      %p232 = scmp.ne.s32.totalorder %s227, %s229
      %p233 = scmp.eq.s32.totalorder %s25, 0
      %p234 = por %p232, %p233
      %p235 = scmp.ne.s32.totalorder %s227, %s229
      %p236 = scmp.eq.s32.totalorder %s30, 1
      %p237 = por %p235, %p236
      %p238 = scmp.ne.s32.totalorder %s229, %s230
      %p239 = scmp.eq.s32.totalorder %s30, 0
      %p240 = por %p238, %p239
      %p241 = scmp.ne.s32.totalorder %s229, %s230
      %p242 = scmp.eq.s32.totalorder %s31, 1
      %p243 = por %p241, %p242
      %p245 = scmp.ne.s32.totalorder %s230, %s244
      %p246 = scmp.eq.s32.totalorder %s31, 0
      %p247 = por %p245, %p246
      %s249 = sadd.s32 %s248, 1
      %p252 = scmp.eq.s32.totalorder %s25, 1
      %p253 = scmp.ne.s32.totalorder %s248, %s250
      %p254 = scmp.eq.s32.totalorder %s25, 0
      %p255 = por %p253, %p254
      %p256 = scmp.ne.s32.totalorder %s248, %s250
      %p257 = scmp.eq.s32.totalorder %s30, 1
      %p258 = por %p256, %p257
      %p259 = scmp.ne.s32.totalorder %s250, %s251
      %p260 = scmp.eq.s32.totalorder %s30, 0
      %p261 = por %p259, %p260
      %p262 = scmp.ne.s32.totalorder %s250, %s251
      %p263 = scmp.eq.s32.totalorder %s31, 1
      %p264 = por %p262, %p263
      %p266 = scmp.ne.s32.totalorder %s251, %s265
      %p267 = scmp.eq.s32.totalorder %s31, 0
      %p268 = por %p266, %p267
      %s270 = sadd.s32 %s269, 1
      %p273 = scmp.eq.s32.totalorder %s25, 1
      %p274 = scmp.ne.s32.totalorder %s269, %s271
      %p275 = scmp.eq.s32.totalorder %s25, 0
      %p276 = por %p274, %p275
      %p277 = scmp.ne.s32.totalorder %s269, %s271
      %p278 = scmp.eq.s32.totalorder %s30, 1
      %p279 = por %p277, %p278
      %p280 = scmp.ne.s32.totalorder %s271, %s272
      %p281 = scmp.eq.s32.totalorder %s30, 0
      %p282 = por %p280, %p281
      %p283 = scmp.ne.s32.totalorder %s271, %s272
      %p284 = scmp.eq.s32.totalorder %s31, 1
      %p285 = por %p283, %p284
      %p287 = scmp.ne.s32.totalorder %s272, %s286
      %p288 = scmp.eq.s32.totalorder %s31, 0
      %p289 = por %p287, %p288
      %s291 = sadd.s32 %s290, 1
      %p294 = scmp.eq.s32.totalorder %s25, 1
      %p295 = scmp.ne.s32.totalorder %s290, %s292
      %p296 = scmp.eq.s32.totalorder %s25, 0
      %p297 = por %p295, %p296
      %p298 = scmp.ne.s32.totalorder %s290, %s292
      %p299 = scmp.eq.s32.totalorder %s30, 1
      %p300 = por %p298, %p299
      %p301 = scmp.ne.s32.totalorder %s292, %s293
      %p302 = scmp.eq.s32.totalorder %s30, 0
      %p303 = por %p301, %p302
      %p304 = scmp.ne.s32.totalorder %s292, %s293
      %p305 = scmp.eq.s32.totalorder %s31, 1
      %p306 = por %p304, %p305
      %p308 = scmp.ne.s32.totalorder %s293, %s307
      %p309 = scmp.eq.s32.totalorder %s31, 0
      %p310 = por %p308, %p309
      %s312 = sadd.s32 %s311, 1
      %p315 = scmp.eq.s32.totalorder %s25, 1
      %p316 = scmp.ne.s32.totalorder %s311, %s313
      %p317 = scmp.eq.s32.totalorder %s25, 0
      %p318 = por %p316, %p317
      %p319 = scmp.ne.s32.totalorder %s311, %s313
      %p320 = scmp.eq.s32.totalorder %s30, 1
      %p321 = por %p319, %p320
      %p322 = scmp.ne.s32.totalorder %s313, %s314
      %p323 = scmp.eq.s32.totalorder %s30, 0
      %p324 = por %p322, %p323
      %p325 = scmp.ne.s32.totalorder %s313, %s314
      %p326 = scmp.eq.s32.totalorder %s31, 1
      %p327 = por %p325, %p326
      %p329 = scmp.ne.s32.totalorder %s314, %s328
      %p330 = scmp.eq.s32.totalorder %s31, 0
      %p331 = por %p329, %p330
      %s333 = sadd.s32 %s332, 1
      %p336 = scmp.eq.s32.totalorder %s25, 1
      %p337 = scmp.ne.s32.totalorder %s332, %s334
      %p338 = scmp.eq.s32.totalorder %s25, 0
      %p339 = por %p337, %p338
      %p340 = scmp.ne.s32.totalorder %s332, %s334
      %p341 = scmp.eq.s32.totalorder %s30, 1
      %p342 = por %p340, %p341
      %p343 = scmp.ne.s32.totalorder %s334, %s335
      %p344 = scmp.eq.s32.totalorder %s30, 0
      %p345 = por %p343, %p344
      %p346 = scmp.ne.s32.totalorder %s334, %s335
      %p347 = scmp.eq.s32.totalorder %s31, 1
      %p348 = por %p346, %p347
      %p350 = scmp.ne.s32.totalorder %s335, %s349
      %p351 = scmp.eq.s32.totalorder %s31, 0
      %p352 = por %p350, %p351
      %s354 = sadd.s32 %s353, 1
      %p357 = scmp.eq.s32.totalorder %s25, 1
      %p358 = scmp.ne.s32.totalorder %s353, %s355
      %p359 = scmp.eq.s32.totalorder %s25, 0
      %p360 = por %p358, %p359
      %p361 = scmp.ne.s32.totalorder %s353, %s355
      %p362 = scmp.eq.s32.totalorder %s30, 1
      %p363 = por %p361, %p362
      %p364 = scmp.ne.s32.totalorder %s355, %s356
      %p365 = scmp.eq.s32.totalorder %s30, 0
      %p366 = por %p364, %p365
      %p367 = scmp.ne.s32.totalorder %s355, %s356
      %p368 = scmp.eq.s32.totalorder %s31, 1
      %p369 = por %p367, %p368
      %p371 = scmp.ne.s32.totalorder %s356, %s370
      %p372 = scmp.eq.s32.totalorder %s31, 0
      %p373 = por %p371, %p372
      %s374 = ssub.s32 %s25, %s32
      %p375 = scmp.eq.s32.totalorder %s374, 0
      %s377 = sadd.s32 %s376, 1
      %s378 = scalar_select %p375, %s376, %s377
      %p381 = pneg %p375
      %p382 = scmp.eq.s32.totalorder %s25, 1
      %p383 = por %p381, %p382
      %p384 = scmp.ne.s32.totalorder %s376, %s379
      %p385 = scmp.eq.s32.totalorder %s25, 0
      %p386 = por %p384, %p385
      %p387 = scmp.ne.s32.totalorder %s376, %s379
      %p388 = scmp.eq.s32.totalorder %s30, 1
      %p389 = por %p387, %p388
      %p390 = scmp.ne.s32.totalorder %s379, %s380
      %p391 = scmp.eq.s32.totalorder %s30, 0
      %p392 = por %p390, %p391
      %p393 = scmp.ne.s32.totalorder %s379, %s380
      %p394 = scmp.eq.s32.totalorder %s31, 1
      %p395 = por %p393, %p394
      %p397 = scmp.ne.s32.totalorder %s380, %s396
      %p398 = scmp.eq.s32.totalorder %s31, 0
      %p399 = por %p397, %p398
      %p400 = scmp.le.s32.totalorder 1, %s25
      %p401 = scmp.lt.s32.totalorder %s25, 3
      %p402 = pnand %p400, %p401
      %p403 = pneg %p402
      // Predicated region
      $region9: #{tpu_custom_call.1} parent=5 // pred_check
        _
      $region10: #{tpu_custom_call.1} parent=5 // pred_check_branch
        %405 = sbr.rel (%p402) target = $region12
      $region11: #{tpu_custom_call.1} parent=5 // pred_region
        %s406 = ssub.s32 %s25, 1
        // Predicated region
        $region13: #{tpu_custom_call.1} parent=11 // pred_check
          %p407 = pneg %p72
        $region14: #{tpu_custom_call.1} parent=11 // pred_check_branch
          %409 = sbr.rel (%p407) target = $region16
        $region15: #{tpu_custom_call.1} parent=11 // pred_region
          _
        $region16: #{tpu_custom_call.1} parent=11 // pred_fallthru
          _
        // Predicated region
        $region17: #{tpu_custom_call.1} parent=11 // pred_check
          %p410 = pneg %p93
        $region18: #{tpu_custom_call.1} parent=11 // pred_check_branch
          %412 = sbr.rel (%p410) target = $region20
        $region19: #{tpu_custom_call.1} parent=11 // pred_region
          _
        $region20: #{tpu_custom_call.1} parent=11 // pred_fallthru
          _
        // Predicated region
        $region21: #{tpu_custom_call.1} parent=11 // pred_check
          %p413 = pneg %p114
        $region22: #{tpu_custom_call.1} parent=11 // pred_check_branch
          %415 = sbr.rel (%p413) target = $region24
        $region23: #{tpu_custom_call.1} parent=11 // pred_region
          _
        $region24: #{tpu_custom_call.1} parent=11 // pred_fallthru
          _
        // Predicated region
        $region25: #{tpu_custom_call.1} parent=11 // pred_check
          %p416 = pneg %p135
        $region26: #{tpu_custom_call.1} parent=11 // pred_check_branch
          %418 = sbr.rel (%p416) target = $region28
        $region27: #{tpu_custom_call.1} parent=11 // pred_region
          _
        $region28: #{tpu_custom_call.1} parent=11 // pred_fallthru
          _
        // Predicated region
        $region29: #{tpu_custom_call.1} parent=11 // pred_check
          %p419 = pneg %p156
        $region30: #{tpu_custom_call.1} parent=11 // pred_check_branch
          %421 = sbr.rel (%p419) target = $region32
        $region31: #{tpu_custom_call.1} parent=11 // pred_region
          _
        $region32: #{tpu_custom_call.1} parent=11 // pred_fallthru
          _
        // Predicated region
        $region33: #{tpu_custom_call.1} parent=11 // pred_check
          %p422 = pneg %p177
        $region34: #{tpu_custom_call.1} parent=11 // pred_check_branch
          %424 = sbr.rel (%p422) target = $region36
        $region35: #{tpu_custom_call.1} parent=11 // pred_region
          _
        $region36: #{tpu_custom_call.1} parent=11 // pred_fallthru
          _
        // Predicated region
        $region37: #{tpu_custom_call.1} parent=11 // pred_check
          %p425 = pneg %p198
        $region38: #{tpu_custom_call.1} parent=11 // pred_check_branch
          %427 = sbr.rel (%p425) target = $region40
        $region39: #{tpu_custom_call.1} parent=11 // pred_region
          _
        $region40: #{tpu_custom_call.1} parent=11 // pred_fallthru
          _
        // Predicated region
        $region41: #{tpu_custom_call.1} parent=11 // pred_check
          %p428 = pneg %p219
        $region42: #{tpu_custom_call.1} parent=11 // pred_check_branch
          %430 = sbr.rel (%p428) target = $region44
        $region43: #{tpu_custom_call.1} parent=11 // pred_region
          _
        $region44: #{tpu_custom_call.1} parent=11 // pred_fallthru
          _
        // Predicated region
        $region45: #{tpu_custom_call.1} parent=11 // pred_check
          %p431 = pneg %p240
        $region46: #{tpu_custom_call.1} parent=11 // pred_check_branch
          %433 = sbr.rel (%p431) target = $region48
        $region47: #{tpu_custom_call.1} parent=11 // pred_region
          _
        $region48: #{tpu_custom_call.1} parent=11 // pred_fallthru
          _
        // Predicated region
        $region49: #{tpu_custom_call.1} parent=11 // pred_check
          %p434 = pneg %p261
        $region50: #{tpu_custom_call.1} parent=11 // pred_check_branch
          %436 = sbr.rel (%p434) target = $region52
        $region51: #{tpu_custom_call.1} parent=11 // pred_region
          _
        $region52: #{tpu_custom_call.1} parent=11 // pred_fallthru
          _
        // Predicated region
        $region53: #{tpu_custom_call.1} parent=11 // pred_check
          %p437 = pneg %p282
        $region54: #{tpu_custom_call.1} parent=11 // pred_check_branch
          %439 = sbr.rel (%p437) target = $region56
        $region55: #{tpu_custom_call.1} parent=11 // pred_region
          _
        $region56: #{tpu_custom_call.1} parent=11 // pred_fallthru
          _
        // Predicated region
        $region57: #{tpu_custom_call.1} parent=11 // pred_check
          %p440 = pneg %p303
        $region58: #{tpu_custom_call.1} parent=11 // pred_check_branch
          %442 = sbr.rel (%p440) target = $region60
        $region59: #{tpu_custom_call.1} parent=11 // pred_region
          _
        $region60: #{tpu_custom_call.1} parent=11 // pred_fallthru
          _
        // Predicated region
        $region61: #{tpu_custom_call.1} parent=11 // pred_check
          %p443 = pneg %p324
        $region62: #{tpu_custom_call.1} parent=11 // pred_check_branch
          %445 = sbr.rel (%p443) target = $region64
        $region63: #{tpu_custom_call.1} parent=11 // pred_region
          _
        $region64: #{tpu_custom_call.1} parent=11 // pred_fallthru
          _
        // Predicated region
        $region65: #{tpu_custom_call.1} parent=11 // pred_check
          %p446 = pneg %p345
        $region66: #{tpu_custom_call.1} parent=11 // pred_check_branch
          %448 = sbr.rel (%p446) target = $region68
        $region67: #{tpu_custom_call.1} parent=11 // pred_region
          _
        $region68: #{tpu_custom_call.1} parent=11 // pred_fallthru
          _
        // Predicated region
        $region69: #{tpu_custom_call.1} parent=11 // pred_check
          %p449 = pneg %p366
        $region70: #{tpu_custom_call.1} parent=11 // pred_check_branch
          %451 = sbr.rel (%p449) target = $region72
        $region71: #{tpu_custom_call.1} parent=11 // pred_region
          _
        $region72: #{tpu_custom_call.1} parent=11 // pred_fallthru
          _
      $region12: #{tpu_custom_call.1} parent=5 // pred_fallthru
        _
      %p452 = scmp.lt.s32.totalorder %s25, 2
      // Predicated region
      $region73: #{tpu_custom_call.1} parent=5 // pred_check
        %p453 = pneg %p452
      $region74: #{tpu_custom_call.1} parent=5 // pred_check_branch
        %455 = sbr.rel (%p453) target = $region76
      $region75: #{tpu_custom_call.1} parent=5 // pred_region
        // Predicated region
        $region77: #{tpu_custom_call.1} parent=75 // pred_check
          %p456 = pneg %p45
        $region78: #{tpu_custom_call.1} parent=75 // pred_check_branch
          %458 = sbr.rel (%p456) target = $region80
        $region79: #{tpu_custom_call.1} parent=75 // pred_region
          %p459 = scmp.lt.s32.totalorder %s25, 1
          %s460 = scalar_select %p459, %s25, 1
          %s461 = smul.addr %s460, 8
          %s462 = scalar_lea.vmem %s0, %s461
        $region80: #{tpu_custom_call.1} parent=75 // pred_fallthru
          _
      $region76: #{tpu_custom_call.1} parent=5 // pred_fallthru
        _
      %p463 = scmp.le.s32.totalorder 1, %s25
      %p464 = scmp.lt.s32.totalorder %s25, 3
      %p465 = pnand %p463, %p464
      %p466 = pneg %p465
      // Predicated region
      $region81: #{tpu_custom_call.1} parent=5 // pred_check
        _
      $region82: #{tpu_custom_call.1} parent=5 // pred_check_branch
        %468 = sbr.rel (%p465) target = $region84
      $region83: #{tpu_custom_call.1} parent=5 // pred_region
        %s469 = ssub.s32 %s25, 1
        %p470 = scmp.lt.s32.totalorder %s30, 1
        %s471 = scalar_select %p470, %s30, 1
        %s472 = smul.addr %s471, 8
        %s473 = scalar_lea.vmem %s0, %s472
        %p474 = pneg %p51
        %p475 = pneg %p48
        %p476 = pneg %p72
        %p477 = pneg %p69
        %p478 = pneg %p93
        %p479 = pneg %p90
        %p480 = pneg %p114
        %p481 = pneg %p111
        %p482 = pneg %p135
        %p483 = pneg %p132
        %p484 = pneg %p156
        %p485 = pneg %p153
        %p486 = pneg %p177
        %p487 = pneg %p174
        %p488 = pneg %p198
        %p489 = pneg %p195
        %p490 = pneg %p219
        %p491 = pneg %p216
        %p492 = pneg %p240
        %p493 = pneg %p237
        %p494 = pneg %p261
        %p495 = pneg %p258
        %p496 = pneg %p282
        %p497 = pneg %p279
        %p498 = pneg %p303
        %p499 = pneg %p300
        %p500 = pneg %p324
        %p501 = pneg %p321
        %p502 = pneg %p345
        %p503 = pneg %p342
        %p504 = pneg %p366
        %p505 = pneg %p363
        %p506 = pneg %p392
        %p507 = pneg %p389
        %s508 = sand.u32 %s379, 1
        %s509 = scalar_lea.sflag [#allocation4], %s508
        %s510 = sand.u32 %s379, 1
        %s511 = smul.addr %s510, 8
        %s512 = scalar_lea.vmem [#allocation3], %s511
        %p513 = scmp.lt.s32.totalorder %s30, 1
        %s514 = scalar_select %p513, %s30, 1
        %s515 = smul.addr %s514, 8
        %s516 = scalar_lea.vmem %s0, %s515
        %v518 = vld [vmem:[%s516] sm:$0xff]
        %v519 = vlaneseq
        %v520 = vshrl.u32 %v519, 7
        %v521 = vlaneseq
        %v522 = vand.u32 %v521, 127
        %vm523 = vcmp.ge.s32.totalorder %v520, %v522
        %v524 = vsel %vm523, 0.0, -inf
        %v525 = vld [vmem:[%s1] sm:$0x1]
        %v526 = vld [vmem:[%s2] sm:$0x1]
        %vm527 = vcmask 523264
        %v528 = vsel %vm527, %v518, 0.0
        %529 = vadd.xlane.f32.xlu0 %v528
        %v530 = vpop.xlane.xlu0 %529
        %v531 = vrcp.pop 64.0
        %v532 = vmul.f32 %v530, %v531
        %v533 = vsub.f32 %v518, %v532
        %v534 = vmul.f32 %v533, %v533
        %v535 = vsel %vm527, %v534, 0.0
        %536 = vadd.xlane.f32.xlu0 %v535
        %v537 = vpop.xlane.xlu0 %536
        %v538 = vmul.f32 %v537, %v531
        %v539 = vadd.f32 %v538, 1e-05
        %v540 = vrsqrt.pop %v539
        %v541 = vmul.f32 %v533, %v540
        %v543 = vlaneseq
        %v544 = vshrl.u32 %v543, 7
        %v545 = vsub.s32 0, %v544
        %v546 = vrot.slane %v525, %v545
        %v548 = vmul.f32 %v541, %v546
        %v550 = vlaneseq
        %v551 = vshrl.u32 %v550, 7
        %v552 = vsub.s32 0, %v551
        %v553 = vrot.slane %v526, %v552
        %v555 = vadd.f32 %v548, %v553
        %v556 = vpack.c.bf16 %v555, %v555
        %v557 = vld [vmem:[%s3] sm:$0xff]
        %v558 = vld [vmem:[%s3 + $0x8] sm:$0xff]
        %v559 = vld [vmem:[%s3 + $0x10] sm:$0xff]
        %v560 = vld [vmem:[%s3 + $0x18] sm:$0xff]
        %v561 = vld [vmem:[%s3 + $0x20] sm:$0xff]
        %v562 = vld [vmem:[%s3 + $0x28] sm:$0xff]
        %v563 = vld [vmem:[%s3 + $0x30] sm:$0xff]
        %v564 = vld [vmem:[%s3 + $0x38] sm:$0xff]
        %v573 = vunpack.c.l.b16 %v557
        %v574 = vunpack.c.h.b16 %v557
        %v575 = vunpack.c.l.b16 %v558
        %v576 = vunpack.c.h.b16 %v558
        %v577 = vunpack.c.l.b16 %v559
        %v578 = vunpack.c.h.b16 %v559
        %v579 = vunpack.c.l.b16 %v560
        %v580 = vunpack.c.h.b16 %v560
        %v581 = vunpack.c.l.b16 %v561
        %v582 = vunpack.c.h.b16 %v561
        %v583 = vunpack.c.l.b16 %v562
        %v584 = vunpack.c.h.b16 %v562
        %v585 = vunpack.c.l.b16 %v563
        %v586 = vunpack.c.h.b16 %v563
        %v587 = vunpack.c.l.b16 %v564
        %v588 = vunpack.c.h.b16 %v564
        %v589 = vpack.c.b16 %v575, %v573
        %v590 = vpack.c.b16 %v576, %v574
        %v591 = vpack.c.b16 %v579, %v577
        %v592 = vpack.c.b16 %v580, %v578
        %v593 = vpack.c.b16 %v583, %v581
        %v594 = vpack.c.b16 %v584, %v582
        %v595 = vpack.c.b16 %v587, %v585
        %v596 = vpack.c.b16 %v588, %v586
        %v606 = vsel %vm527, %v556, 0
        %608 = vmatprep.subr.bf16.mxu0 %v590
        %609 = vmatpush1.bf16.msra.mxu0 %v589
        %610 = vmatprep.subr.bf16.mxu0 %v592
        %611 = vmatpush1.bf16.msra.mxu0 %v591
        %612 = vmatprep.subr.bf16.mxu0 %v594
        %613 = vmatpush1.bf16.msra.mxu0 %v593
        %614 = vmatprep.subr.bf16.mxu0 %v596
        %615 = vmatpush1.bf16.msra.mxu0 %v595
        %616 = vmatprep.subr.bf16.mxu0 0
        %617 = vmatpush1.bf16.msra.mxu0 0
        %618 = vmatprep.subr.bf16.mxu0 0
        %619 = vmatpush1.bf16.msra.mxu0 0
        %620 = vmatprep.subr.bf16.mxu0 0
        %621 = vmatpush1.bf16.msra.mxu0 0
        %622 = vmatprep.subr.bf16.mxu0 0
        %623 = vmatpush1.bf16.msra.mxu0 0
        %624 = vmatprep.subr.bf16.mxu0 0
        %625 = vmatpush1.bf16.msra.mxu0 0
        %626 = vmatprep.subr.bf16.mxu0 0
        %627 = vmatpush1.bf16.msra.mxu0 0
        %628 = vmatprep.subr.bf16.mxu0 0
        %629 = vmatpush1.bf16.msra.mxu0 0
        %630 = vmatprep.subr.bf16.mxu0 0
        %631 = vmatpush1.bf16.msra.mxu0 0
        %632 = vmatprep.subr.bf16.mxu0 0
        %633 = vmatpush1.bf16.msra.mxu0 0
        %634 = vmatprep.subr.bf16.mxu0 0
        %635 = vmatpush1.bf16.msra.mxu0 0
        %636 = vmatprep.subr.bf16.mxu0 0
        %637 = vmatpush1.bf16.msra.mxu0 0
        %638 = vmatprep.subr.bf16.mxu0 0
        %639 = vmatpush1.bf16.msra.mxu0 0
        %640 = vmatprep.mubr.bf16.mxu0 0
        %641 = vmatmul.mubr.bf16.gmra.mrb[0].mxu0 %v606
        %v642 = vpop.f32.mrb[0].mxu0
        %v643 = vadd.f32 0.0, %v642
        %v644 = vpop.f32.mrb[0].mxu0
        %v645 = vadd.f32 0.0, %v644
        %v646 = vpop.f32.mrb[0].mxu0
        %v647 = vpop.f32.mrb[0].mxu0
        %648 = vdwg.mxu0
        %v649 = vpack.c.bf16 %v643, %v643
        %651 = vrot.lane.b32.xlu0 %v649, 64
        %v652 = vpop.permute.xlu0 %651
        %vm653 = vcmask 130048
        %v655 = vsel %vm653, %v649, 0
        %v658 = vsel %vm653, %v652, 0
        %660 = vmatprep.subr.bf16.mxu0 0
        %661 = vmatpush1.bf16.xpose.msra.mxu0 %v658
        %662 = vmatprep.subr.bf16.mxu0 0
        %663 = vmatpush1.bf16.xpose.msra.mxu0 0
        %664 = vmatprep.subr.bf16.mxu0 0
        %665 = vmatpush1.bf16.xpose.msra.mxu0 0
        %666 = vmatprep.subr.bf16.mxu0 0
        %667 = vmatpush1.bf16.xpose.msra.mxu0 0
        %668 = vmatprep.subr.bf16.mxu0 0
        %669 = vmatpush1.bf16.xpose.msra.mxu0 0
        %670 = vmatprep.subr.bf16.mxu0 0
        %671 = vmatpush1.bf16.xpose.msra.mxu0 0
        %672 = vmatprep.subr.bf16.mxu0 0
        %673 = vmatpush1.bf16.xpose.msra.mxu0 0
        %674 = vmatprep.subr.bf16.mxu0 0
        %675 = vmatpush1.bf16.xpose.msra.mxu0 0
        %676 = vmatprep.subr.bf16.mxu0 0
        %677 = vmatpush1.bf16.xpose.msra.mxu0 0
        %678 = vmatprep.subr.bf16.mxu0 0
        %679 = vmatpush1.bf16.xpose.msra.mxu0 0
        %680 = vmatprep.subr.bf16.mxu0 0
        %681 = vmatpush1.bf16.xpose.msra.mxu0 0
        %682 = vmatprep.subr.bf16.mxu0 0
        %683 = vmatpush1.bf16.xpose.msra.mxu0 0
        %684 = vmatprep.subr.bf16.mxu0 0
        %685 = vmatpush1.bf16.xpose.msra.mxu0 0
        %686 = vmatprep.subr.bf16.mxu0 0
        %687 = vmatpush1.bf16.xpose.msra.mxu0 0
        %688 = vmatprep.subr.bf16.mxu0 0
        %689 = vmatpush1.bf16.xpose.msra.mxu0 0
        %690 = vmatprep.subr.bf16.mxu0 0
        %691 = vmatpush1.bf16.xpose.msra.mxu0 0
        %692 = vmatprep.mubr.bf16.mxu0 0
        %693 = vmatmul.mubr.bf16.gmra.mrb[0].mxu0 %v655
        %v694 = vpop.f32.mrb[0].mxu0
        %v695 = vadd.f32 0.0, %v694
        %v696 = vpop.f32.mrb[0].mxu0
        %v697 = vpop.f32.mrb[0].mxu0
        %v698 = vpop.f32.mrb[0].mxu0
        %699 = vdwg.mxu0
        %v700 = vmul.f32 %v695, 0.125
        %v701 = vadd.f32 %v700, %v524
        %vm702 = vcmask 64512
        %v703 = vsel %vm702, %v701, -inf
        %704 = vmax.xlane.f32.xlu0 %v703
        %v705 = vpop.xlane.xlu0 %704
        %v706 = vsub.f32 %v701, %v705
        %v707 = vmul.f32 %v706, 1.442695
        %v708 = vpow.pop %v707
        %v709 = vsel %vm702, %v708, 0.0
        %710 = vadd.xlane.f32.xlu0 %v709
        %v711 = vpop.xlane.xlu0 %710
        %v712 = vrcp.pop %v711
        %v713 = vmul.f32 %v708, %v712
        %v714 = vpack.c.bf16 %v713, %v713
        %v715 = vpack.c.bf16 %v645, %v645
        %v717 = vsel %vm702, %v714, 0
        %vm719 = vcmask 1043456
        %v721 = vsel %vm719, %v715, 0
        %723 = vmatprep.subr.bf16.mxu0 0
        %724 = vmatpush1.bf16.msra.mxu0 %v721
        %725 = vmatprep.subr.bf16.mxu0 0
        %726 = vmatpush1.bf16.msra.mxu0 0
        %727 = vmatprep.subr.bf16.mxu0 0
        %728 = vmatpush1.bf16.msra.mxu0 0
        %729 = vmatprep.subr.bf16.mxu0 0
        %730 = vmatpush1.bf16.msra.mxu0 0
        %731 = vmatprep.subr.bf16.mxu0 0
        %732 = vmatpush1.bf16.msra.mxu0 0
        %733 = vmatprep.subr.bf16.mxu0 0
        %734 = vmatpush1.bf16.msra.mxu0 0
        %735 = vmatprep.subr.bf16.mxu0 0
        %736 = vmatpush1.bf16.msra.mxu0 0
        %737 = vmatprep.subr.bf16.mxu0 0
        %738 = vmatpush1.bf16.msra.mxu0 0
        %739 = vmatprep.subr.bf16.mxu0 0
        %740 = vmatpush1.bf16.msra.mxu0 0
        %741 = vmatprep.subr.bf16.mxu0 0
        %742 = vmatpush1.bf16.msra.mxu0 0
        %743 = vmatprep.subr.bf16.mxu0 0
        %744 = vmatpush1.bf16.msra.mxu0 0
        %745 = vmatprep.subr.bf16.mxu0 0
        %746 = vmatpush1.bf16.msra.mxu0 0
        %747 = vmatprep.subr.bf16.mxu0 0
        %748 = vmatpush1.bf16.msra.mxu0 0
        %749 = vmatprep.subr.bf16.mxu0 0
        %750 = vmatpush1.bf16.msra.mxu0 0
        %751 = vmatprep.subr.bf16.mxu0 0
        %752 = vmatpush1.bf16.msra.mxu0 0
        %753 = vmatprep.subr.bf16.mxu0 0
        %754 = vmatpush1.bf16.msra.mxu0 0
        %755 = vmatprep.mubr.bf16.mxu0 0
        %756 = vmatmul.mubr.bf16.gmra.mrb[0].mxu0 %v717
        %v757 = vpop.f32.mrb[0].mxu0
        %v758 = vadd.f32 0.0, %v757
        %v759 = vpop.f32.mrb[0].mxu0
        %v760 = vpop.f32.mrb[0].mxu0
        %v761 = vpop.f32.mrb[0].mxu0
        %762 = vdwg.mxu0
        %763 = vst.msk [vmem:[#allocation2] sm:$0xff] %vm653, %v758
        %764 = vrot.lane.b32.xlu0 %v649, 112
        %v765 = vpop.permute.xlu0 %764
        %766 = vrot.lane.b32.xlu0 %v649, 48
        %v767 = vpop.permute.xlu0 %766
        %v769 = vsel %vm653, %v765, 0
        %v772 = vsel %vm653, %v767, 0
        %774 = vmatprep.subr.bf16.mxu0 0
        %775 = vmatpush1.bf16.xpose.msra.mxu0 %v772
        %776 = vmatprep.subr.bf16.mxu0 0
        %777 = vmatpush1.bf16.xpose.msra.mxu0 0
        %778 = vmatprep.subr.bf16.mxu0 0
        %779 = vmatpush1.bf16.xpose.msra.mxu0 0
        %780 = vmatprep.subr.bf16.mxu0 0
        %781 = vmatpush1.bf16.xpose.msra.mxu0 0
        %782 = vmatprep.subr.bf16.mxu0 0
        %783 = vmatpush1.bf16.xpose.msra.mxu0 0
        %784 = vmatprep.subr.bf16.mxu0 0
        %785 = vmatpush1.bf16.xpose.msra.mxu0 0
        %786 = vmatprep.subr.bf16.mxu0 0
        %787 = vmatpush1.bf16.xpose.msra.mxu0 0
        %788 = vmatprep.subr.bf16.mxu0 0
        %789 = vmatpush1.bf16.xpose.msra.mxu0 0
        %790 = vmatprep.subr.bf16.mxu0 0
        %791 = vmatpush1.bf16.xpose.msra.mxu0 0
        %792 = vmatprep.subr.bf16.mxu0 0
        %793 = vmatpush1.bf16.xpose.msra.mxu0 0
        %794 = vmatprep.subr.bf16.mxu0 0
        %795 = vmatpush1.bf16.xpose.msra.mxu0 0
        %796 = vmatprep.subr.bf16.mxu0 0
        %797 = vmatpush1.bf16.xpose.msra.mxu0 0
        %798 = vmatprep.subr.bf16.mxu0 0
        %799 = vmatpush1.bf16.xpose.msra.mxu0 0
        %800 = vmatprep.subr.bf16.mxu0 0
        %801 = vmatpush1.bf16.xpose.msra.mxu0 0
        %802 = vmatprep.subr.bf16.mxu0 0
        %803 = vmatpush1.bf16.xpose.msra.mxu0 0
        %804 = vmatprep.subr.bf16.mxu0 0
        %805 = vmatpush1.bf16.xpose.msra.mxu0 0
        %806 = vmatprep.mubr.bf16.mxu0 0
        %807 = vmatmul.mubr.bf16.gmra.mrb[0].mxu0 %v769
        %v808 = vpop.f32.mrb[0].mxu0
        %v809 = vadd.f32 0.0, %v808
        %v810 = vpop.f32.mrb[0].mxu0
        %v811 = vpop.f32.mrb[0].mxu0
        %v812 = vpop.f32.mrb[0].mxu0
        %813 = vdwg.mxu0
        %v814 = vmul.f32 %v809, 0.125
        %v815 = vadd.f32 %v814, %v524
        %v816 = vsel %vm702, %v815, -inf
        %817 = vmax.xlane.f32.xlu0 %v816
        %v818 = vpop.xlane.xlu0 %817
        %v819 = vsub.f32 %v815, %v818
        %v820 = vmul.f32 %v819, 1.442695
        %v821 = vpow.pop %v820
        %v822 = vsel %vm702, %v821, 0.0
        %823 = vadd.xlane.f32.xlu0 %v822
        %v824 = vpop.xlane.xlu0 %823
        %v825 = vrcp.pop %v824
        %v826 = vmul.f32 %v821, %v825
        %v827 = vpack.c.bf16 %v826, %v826
        %829 = vrot.lane.b32.xlu0 %v715, 112
        %v830 = vpop.permute.xlu0 %829
        %v832 = vsel %vm702, %v827, 0
        %v835 = vsel %vm719, %v830, 0
        %837 = vmatprep.subr.bf16.mxu0 0
        %838 = vmatpush1.bf16.msra.mxu0 %v835
        %839 = vmatprep.subr.bf16.mxu0 0
        %840 = vmatpush1.bf16.msra.mxu0 0
        %841 = vmatprep.subr.bf16.mxu0 0
        %842 = vmatpush1.bf16.msra.mxu0 0
        %843 = vmatprep.subr.bf16.mxu0 0
        %844 = vmatpush1.bf16.msra.mxu0 0
        %845 = vmatprep.subr.bf16.mxu0 0
        %846 = vmatpush1.bf16.msra.mxu0 0
        %847 = vmatprep.subr.bf16.mxu0 0
        %848 = vmatpush1.bf16.msra.mxu0 0
        %849 = vmatprep.subr.bf16.mxu0 0
        %850 = vmatpush1.bf16.msra.mxu0 0
        %851 = vmatprep.subr.bf16.mxu0 0
        %852 = vmatpush1.bf16.msra.mxu0 0
        %853 = vmatprep.subr.bf16.mxu0 0
        %854 = vmatpush1.bf16.msra.mxu0 0
        %855 = vmatprep.subr.bf16.mxu0 0
        %856 = vmatpush1.bf16.msra.mxu0 0
        %857 = vmatprep.subr.bf16.mxu0 0
        %858 = vmatpush1.bf16.msra.mxu0 0
        %859 = vmatprep.subr.bf16.mxu0 0
        %860 = vmatpush1.bf16.msra.mxu0 0
        %861 = vmatprep.subr.bf16.mxu0 0
        %862 = vmatpush1.bf16.msra.mxu0 0
        %863 = vmatprep.subr.bf16.mxu0 0
        %864 = vmatpush1.bf16.msra.mxu0 0
        %865 = vmatprep.subr.bf16.mxu0 0
        %866 = vmatpush1.bf16.msra.mxu0 0
        %867 = vmatprep.subr.bf16.mxu0 0
        %868 = vmatpush1.bf16.msra.mxu0 0
        %869 = vmatprep.mubr.bf16.mxu0 0
        %870 = vmatmul.mubr.bf16.gmra.mrb[0].mxu0 %v832
        %v871 = vpop.f32.mrb[0].mxu0
        %v872 = vadd.f32 0.0, %v871
        %v873 = vpop.f32.mrb[0].mxu0
        %v874 = vpop.f32.mrb[0].mxu0
        %v875 = vpop.f32.mrb[0].mxu0
        %876 = vdwg.mxu0
        %878 = vrot.lane.b32.xlu0 %v872, 16
        %v879 = vpop.permute.xlu0 %878
        %vm881 = vcmask 261248
        %882 = vst.msk [vmem:[#allocation2] sm:$0xff] %vm881, %v879
        %883 = vrot.lane.b32.xlu0 %v649, 96
        %v884 = vpop.permute.xlu0 %883
        %885 = vrot.lane.b32.xlu0 %v649, 32
        %v886 = vpop.permute.xlu0 %885
        %v888 = vsel %vm653, %v884, 0
        %v891 = vsel %vm653, %v886, 0
        %893 = vmatprep.subr.bf16.mxu0 0
        %894 = vmatpush1.bf16.xpose.msra.mxu0 %v891
        %895 = vmatprep.subr.bf16.mxu0 0
        %896 = vmatpush1.bf16.xpose.msra.mxu0 0
        %897 = vmatprep.subr.bf16.mxu0 0
        %898 = vmatpush1.bf16.xpose.msra.mxu0 0
        %899 = vmatprep.subr.bf16.mxu0 0
        %900 = vmatpush1.bf16.xpose.msra.mxu0 0
        %901 = vmatprep.subr.bf16.mxu0 0
        %902 = vmatpush1.bf16.xpose.msra.mxu0 0
        %903 = vmatprep.subr.bf16.mxu0 0
        %904 = vmatpush1.bf16.xpose.msra.mxu0 0
        %905 = vmatprep.subr.bf16.mxu0 0
        %906 = vmatpush1.bf16.xpose.msra.mxu0 0
        %907 = vmatprep.subr.bf16.mxu0 0
        %908 = vmatpush1.bf16.xpose.msra.mxu0 0
        %909 = vmatprep.subr.bf16.mxu0 0
        %910 = vmatpush1.bf16.xpose.msra.mxu0 0
        %911 = vmatprep.subr.bf16.mxu0 0
        %912 = vmatpush1.bf16.xpose.msra.mxu0 0
        %913 = vmatprep.subr.bf16.mxu0 0
        %914 = vmatpush1.bf16.xpose.msra.mxu0 0
        %915 = vmatprep.subr.bf16.mxu0 0
        %916 = vmatpush1.bf16.xpose.msra.mxu0 0
        %917 = vmatprep.subr.bf16.mxu0 0
        %918 = vmatpush1.bf16.xpose.msra.mxu0 0
        %919 = vmatprep.subr.bf16.mxu0 0
        %920 = vmatpush1.bf16.xpose.msra.mxu0 0
        %921 = vmatprep.subr.bf16.mxu0 0
        %922 = vmatpush1.bf16.xpose.msra.mxu0 0
        %923 = vmatprep.subr.bf16.mxu0 0
        %924 = vmatpush1.bf16.xpose.msra.mxu0 0
        %925 = vmatprep.mubr.bf16.mxu0 0
        %926 = vmatmul.mubr.bf16.gmra.mrb[0].mxu0 %v888
        %v927 = vpop.f32.mrb[0].mxu0
        %v928 = vadd.f32 0.0, %v927
        %v929 = vpop.f32.mrb[0].mxu0
        %v930 = vpop.f32.mrb[0].mxu0
        %v931 = vpop.f32.mrb[0].mxu0
        %932 = vdwg.mxu0
        %v933 = vmul.f32 %v928, 0.125
        %v934 = vadd.f32 %v933, %v524
        %v935 = vsel %vm702, %v934, -inf
        %936 = vmax.xlane.f32.xlu0 %v935
        %v937 = vpop.xlane.xlu0 %936
        %v938 = vsub.f32 %v934, %v937
        %v939 = vmul.f32 %v938, 1.442695
        %v940 = vpow.pop %v939
        %v941 = vsel %vm702, %v940, 0.0
        %942 = vadd.xlane.f32.xlu0 %v941
        %v943 = vpop.xlane.xlu0 %942
        %v944 = vrcp.pop %v943
        %v945 = vmul.f32 %v940, %v944
        %v946 = vpack.c.bf16 %v945, %v945
        %947 = vrot.lane.b32.xlu0 %v715, 96
        %v948 = vpop.permute.xlu0 %947
        %v950 = vsel %vm702, %v946, 0
        %v953 = vsel %vm719, %v948, 0
        %955 = vmatprep.subr.bf16.mxu0 0
        %956 = vmatpush1.bf16.msra.mxu0 %v953
        %957 = vmatprep.subr.bf16.mxu0 0
        %958 = vmatpush1.bf16.msra.mxu0 0
        %959 = vmatprep.subr.bf16.mxu0 0
        %960 = vmatpush1.bf16.msra.mxu0 0
        %961 = vmatprep.subr.bf16.mxu0 0
        %962 = vmatpush1.bf16.msra.mxu0 0
        %963 = vmatprep.subr.bf16.mxu0 0
        %964 = vmatpush1.bf16.msra.mxu0 0
        %965 = vmatprep.subr.bf16.mxu0 0
        %966 = vmatpush1.bf16.msra.mxu0 0
        %967 = vmatprep.subr.bf16.mxu0 0
        %968 = vmatpush1.bf16.msra.mxu0 0
        %969 = vmatprep.subr.bf16.mxu0 0
        %970 = vmatpush1.bf16.msra.mxu0 0
        %971 = vmatprep.subr.bf16.mxu0 0
        %972 = vmatpush1.bf16.msra.mxu0 0
        %973 = vmatprep.subr.bf16.mxu0 0
        %974 = vmatpush1.bf16.msra.mxu0 0
        %975 = vmatprep.subr.bf16.mxu0 0
        %976 = vmatpush1.bf16.msra.mxu0 0
        %977 = vmatprep.subr.bf16.mxu0 0
        %978 = vmatpush1.bf16.msra.mxu0 0
        %979 = vmatprep.subr.bf16.mxu0 0
        %980 = vmatpush1.bf16.msra.mxu0 0
        %981 = vmatprep.subr.bf16.mxu0 0
        %982 = vmatpush1.bf16.msra.mxu0 0
        %983 = vmatprep.subr.bf16.mxu0 0
        %984 = vmatpush1.bf16.msra.mxu0 0
        %985 = vmatprep.subr.bf16.mxu0 0
        %986 = vmatpush1.bf16.msra.mxu0 0
        %987 = vmatprep.mubr.bf16.mxu0 0
        %988 = vmatmul.mubr.bf16.gmra.mrb[0].mxu0 %v950
        %v989 = vpop.f32.mrb[0].mxu0
        %v990 = vadd.f32 0.0, %v989
        %v991 = vpop.f32.mrb[0].mxu0
        %v992 = vpop.f32.mrb[0].mxu0
        %v993 = vpop.f32.mrb[0].mxu0
        %994 = vdwg.mxu0
        %996 = vrot.lane.b32.xlu0 %v990, 32
        %v997 = vpop.permute.xlu0 %996
        %vm999 = vcmask 392448
        %1000 = vst.msk [vmem:[#allocation2] sm:$0xff] %vm999, %v997
        %1001 = vrot.lane.b32.xlu0 %v649, 80
        %v1002 = vpop.permute.xlu0 %1001
        %1003 = vrot.lane.b32.xlu0 %v649, 16
        %v1004 = vpop.permute.xlu0 %1003
        %v1006 = vsel %vm653, %v1002, 0
        %v1009 = vsel %vm653, %v1004, 0
        %1011 = vmatprep.subr.bf16.mxu0 0
        %1012 = vmatpush1.bf16.xpose.msra.mxu0 %v1009
        %1013 = vmatprep.subr.bf16.mxu0 0
        %1014 = vmatpush1.bf16.xpose.msra.mxu0 0
        %1015 = vmatprep.subr.bf16.mxu0 0
        %1016 = vmatpush1.bf16.xpose.msra.mxu0 0
        %1017 = vmatprep.subr.bf16.mxu0 0
        %1018 = vmatpush1.bf16.xpose.msra.mxu0 0
        %1019 = vmatprep.subr.bf16.mxu0 0
        %1020 = vmatpush1.bf16.xpose.msra.mxu0 0
        %1021 = vmatprep.subr.bf16.mxu0 0
        %1022 = vmatpush1.bf16.xpose.msra.mxu0 0
        %1023 = vmatprep.subr.bf16.mxu0 0
        %1024 = vmatpush1.bf16.xpose.msra.mxu0 0
        %1025 = vmatprep.subr.bf16.mxu0 0
        %1026 = vmatpush1.bf16.xpose.msra.mxu0 0
        %1027 = vmatprep.subr.bf16.mxu0 0
        %1028 = vmatpush1.bf16.xpose.msra.mxu0 0
        %1029 = vmatprep.subr.bf16.mxu0 0
        %1030 = vmatpush1.bf16.xpose.msra.mxu0 0
        %1031 = vmatprep.subr.bf16.mxu0 0
        %1032 = vmatpush1.bf16.xpose.msra.mxu0 0
        %1033 = vmatprep.subr.bf16.mxu0 0
        %1034 = vmatpush1.bf16.xpose.msra.mxu0 0
        %1035 = vmatprep.subr.bf16.mxu0 0
        %1036 = vmatpush1.bf16.xpose.msra.mxu0 0
        %1037 = vmatprep.subr.bf16.mxu0 0
        %1038 = vmatpush1.bf16.xpose.msra.mxu0 0
        %1039 = vmatprep.subr.bf16.mxu0 0
        %1040 = vmatpush1.bf16.xpose.msra.mxu0 0
        %1041 = vmatprep.subr.bf16.mxu0 0
        %1042 = vmatpush1.bf16.xpose.msra.mxu0 0
        %1043 = vmatprep.mubr.bf16.mxu0 0
        %1044 = vmatmul.mubr.bf16.gmra.mrb[0].mxu0 %v1006
        %v1045 = vpop.f32.mrb[0].mxu0
        %v1046 = vadd.f32 0.0, %v1045
        %v1047 = vpop.f32.mrb[0].mxu0
        %v1048 = vpop.f32.mrb[0].mxu0
        %v1049 = vpop.f32.mrb[0].mxu0
        %1050 = vdwg.mxu0
        %v1051 = vmul.f32 %v1046, 0.125
        %v1052 = vadd.f32 %v1051, %v524
        %v1053 = vsel %vm702, %v1052, -inf
        %1054 = vmax.xlane.f32.xlu0 %v1053
        %v1055 = vpop.xlane.xlu0 %1054
        %v1056 = vsub.f32 %v1052, %v1055
        %v1057 = vmul.f32 %v1056, 1.442695
        %v1058 = vpow.pop %v1057
        %v1059 = vsel %vm702, %v1058, 0.0
        %1060 = vadd.xlane.f32.xlu0 %v1059
        %v1061 = vpop.xlane.xlu0 %1060
        %v1062 = vrcp.pop %v1061
        %v1063 = vmul.f32 %v1058, %v1062
        %v1064 = vpack.c.bf16 %v1063, %v1063
        %1065 = vrot.lane.b32.xlu0 %v715, 80
        %v1066 = vpop.permute.xlu0 %1065
        %v1068 = vsel %vm702, %v1064, 0
        %v1071 = vsel %vm719, %v1066, 0
        %1073 = vmatprep.subr.bf16.mxu0 0
        %1074 = vmatpush1.bf16.msra.mxu0 %v1071
        %1075 = vmatprep.subr.bf16.mxu0 0
        %1076 = vmatpush1.bf16.msra.mxu0 0
        %1077 = vmatprep.subr.bf16.mxu0 0
        %1078 = vmatpush1.bf16.msra.mxu0 0
        %1079 = vmatprep.subr.bf16.mxu0 0
        %1080 = vmatpush1.bf16.msra.mxu0 0
        %1081 = vmatprep.subr.bf16.mxu0 0
        %1082 = vmatpush1.bf16.msra.mxu0 0
        %1083 = vmatprep.subr.bf16.mxu0 0
        %1084 = vmatpush1.bf16.msra.mxu0 0
        %1085 = vmatprep.subr.bf16.mxu0 0
        %1086 = vmatpush1.bf16.msra.mxu0 0
        %1087 = vmatprep.subr.bf16.mxu0 0
        %1088 = vmatpush1.bf16.msra.mxu0 0
        %1089 = vmatprep.subr.bf16.mxu0 0
        %1090 = vmatpush1.bf16.msra.mxu0 0
        %1091 = vmatprep.subr.bf16.mxu0 0
        %1092 = vmatpush1.bf16.msra.mxu0 0
        %1093 = vmatprep.subr.bf16.mxu0 0
        %1094 = vmatpush1.bf16.msra.mxu0 0
        %1095 = vmatprep.subr.bf16.mxu0 0
        %1096 = vmatpush1.bf16.msra.mxu0 0
        %1097 = vmatprep.subr.bf16.mxu0 0
        %1098 = vmatpush1.bf16.msra.mxu0 0
        %1099 = vmatprep.subr.bf16.mxu0 0
        %1100 = vmatpush1.bf16.msra.mxu0 0
        %1101 = vmatprep.subr.bf16.mxu0 0
        %1102 = vmatpush1.bf16.msra.mxu0 0
        %1103 = vmatprep.subr.bf16.mxu0 0
        %1104 = vmatpush1.bf16.msra.mxu0 0
        %1105 = vmatprep.mubr.bf16.mxu0 0
        %1106 = vmatmul.mubr.bf16.gmra.mrb[0].mxu0 %v1068
        %v1107 = vpop.f32.mrb[0].mxu0
        %v1108 = vadd.f32 0.0, %v1107
        %v1109 = vpop.f32.mrb[0].mxu0
        %v1110 = vpop.f32.mrb[0].mxu0
        %v1111 = vpop.f32.mrb[0].mxu0
        %1112 = vdwg.mxu0
        %1114 = vrot.lane.b32.xlu0 %v1108, 48
        %v1115 = vpop.permute.xlu0 %1114
        %vm1117 = vcmask 523648
        %1118 = vst.msk [vmem:[#allocation2] sm:$0xff] %vm1117, %v1115
        %v1119 = vld [vmem:[#allocation2] sm:$0xff]
        %v1120 = vpack.c.bf16 %v1119, %v1119
        %v1121 = vld [vmem:[%s4] sm:$0xf]
        %v1122 = vld [vmem:[%s4 + $0x4] sm:$0xf]
        %v1123 = vld [vmem:[%s4 + $0x8] sm:$0xf]
        %v1124 = vld [vmem:[%s4 + $0xc] sm:$0xf]
        %v1125 = vld [vmem:[%s4 + $0x10] sm:$0xf]
        %v1126 = vld [vmem:[%s4 + $0x14] sm:$0xf]
        %v1127 = vld [vmem:[%s4 + $0x18] sm:$0xf]
        %v1128 = vld [vmem:[%s4 + $0x1c] sm:$0xf]
        %v1129 = vld [vmem:[%s5] sm:$0x1]
        %v1131 = vlaneseq
        %v1132 = vshrl.u32 %v1131, 7
        %v1133 = vsub.s32 0, %v1132
        %v1134 = vrot.slane %v1129, %v1133
        %v1144 = vunpack.c.l.b16 %v1121
        %v1145 = vunpack.c.l.b16 %v1122
        %v1146 = vunpack.c.l.b16 %v1123
        %v1147 = vunpack.c.l.b16 %v1124
        %v1148 = vunpack.c.l.b16 %v1125
        %v1149 = vunpack.c.l.b16 %v1126
        %v1150 = vunpack.c.l.b16 %v1127
        %v1151 = vunpack.c.l.b16 %v1128
        %v1152 = vpack.c.b16 %v1145, %v1144
        %v1153 = vpack.c.b16 %v1147, %v1146
        %v1154 = vpack.c.b16 %v1149, %v1148
        %v1155 = vpack.c.b16 %v1151, %v1150
        %v1161 = vsel %vm527, %v1120, 0
        %1163 = vmatprep.subr.bf16.mxu0 0
        %1164 = vmatpush1.bf16.msra.mxu0 %v1152
        %1165 = vmatprep.subr.bf16.mxu0 0
        %1166 = vmatpush1.bf16.msra.mxu0 %v1153
        %1167 = vmatprep.subr.bf16.mxu0 0
        %1168 = vmatpush1.bf16.msra.mxu0 %v1154
        %1169 = vmatprep.subr.bf16.mxu0 0
        %1170 = vmatpush1.bf16.msra.mxu0 %v1155
        %1171 = vmatprep.subr.bf16.mxu0 0
        %1172 = vmatpush1.bf16.msra.mxu0 0
        %1173 = vmatprep.subr.bf16.mxu0 0
        %1174 = vmatpush1.bf16.msra.mxu0 0
        %1175 = vmatprep.subr.bf16.mxu0 0
        %1176 = vmatpush1.bf16.msra.mxu0 0
        %1177 = vmatprep.subr.bf16.mxu0 0
        %1178 = vmatpush1.bf16.msra.mxu0 0
        %1179 = vmatprep.subr.bf16.mxu0 0
        %1180 = vmatpush1.bf16.msra.mxu0 0
        %1181 = vmatprep.subr.bf16.mxu0 0
        %1182 = vmatpush1.bf16.msra.mxu0 0
        %1183 = vmatprep.subr.bf16.mxu0 0
        %1184 = vmatpush1.bf16.msra.mxu0 0
        %1185 = vmatprep.subr.bf16.mxu0 0
        %1186 = vmatpush1.bf16.msra.mxu0 0
        %1187 = vmatprep.subr.bf16.mxu0 0
        %1188 = vmatpush1.bf16.msra.mxu0 0
        %1189 = vmatprep.subr.bf16.mxu0 0
        %1190 = vmatpush1.bf16.msra.mxu0 0
        %1191 = vmatprep.subr.bf16.mxu0 0
        %1192 = vmatpush1.bf16.msra.mxu0 0
        %1193 = vmatprep.subr.bf16.mxu0 0
        %1194 = vmatpush1.bf16.msra.mxu0 0
        %1195 = vmatprep.mubr.bf16.mxu0 0
        %1196 = vmatmul.mubr.bf16.gmra.mrb[0].mxu0 %v1161
        %v1197 = vpop.f32.mrb[0].mxu0
        %v1198 = vadd.f32 %v1134, %v1197
        %v1199 = vpop.f32.mrb[0].mxu0
        %v1200 = vpop.f32.mrb[0].mxu0
        %v1201 = vpop.f32.mrb[0].mxu0
        %1202 = vdwg.mxu0
        %v1203 = vadd.f32 %v518, %v1198
        %v1204 = vld [vmem:[%s6] sm:$0x1]
        %v1205 = vld [vmem:[%s7] sm:$0x1]
        %v1206 = vsel %vm527, %v1203, 0.0
        %1207 = vadd.xlane.f32.xlu0 %v1206
        %v1208 = vpop.xlane.xlu0 %1207
        %v1209 = vmul.f32 %v1208, %v531
        %v1210 = vsub.f32 %v1203, %v1209
        %v1211 = vmul.f32 %v1210, %v1210
        %v1212 = vsel %vm527, %v1211, 0.0
        %1213 = vadd.xlane.f32.xlu0 %v1212
        %v1214 = vpop.xlane.xlu0 %1213
        %v1215 = vmul.f32 %v1214, %v531
        %v1216 = vadd.f32 %v1215, 1e-05
        %v1217 = vrsqrt.pop %v1216
        %v1218 = vmul.f32 %v1210, %v1217
        %v1220 = vlaneseq
        %v1221 = vshrl.u32 %v1220, 7
        %v1222 = vsub.s32 0, %v1221
        %v1223 = vrot.slane %v1204, %v1222
        %v1225 = vmul.f32 %v1218, %v1223
        %v1227 = vlaneseq
        %v1228 = vshrl.u32 %v1227, 7
        %v1229 = vsub.s32 0, %v1228
        %v1230 = vrot.slane %v1205, %v1229
        %v1232 = vadd.f32 %v1225, %v1230
        %v1233 = vpack.c.bf16 %v1232, %v1232
        %v1234 = vld [vmem:[%s8] sm:$0xff]
        %v1235 = vld [vmem:[%s8 + $0x8] sm:$0xff]
        %v1236 = vld [vmem:[%s8 + $0x10] sm:$0xff]
        %v1237 = vld [vmem:[%s8 + $0x18] sm:$0xff]
        %v1238 = vld [vmem:[%s8 + $0x20] sm:$0xff]
        %v1239 = vld [vmem:[%s8 + $0x28] sm:$0xff]
        %v1240 = vld [vmem:[%s8 + $0x30] sm:$0xff]
        %v1241 = vld [vmem:[%s8 + $0x38] sm:$0xff]
        %v1242 = vld [vmem:[%s9] sm:$0x3]
        %v1244 = vlaneseq
        %v1245 = vshrl.u32 %v1244, 7
        %v1246 = vsub.s32 0, %v1245
        %v1247 = vrot.slane %v1242, %v1246
        %v1248 = vlaneseq
        %v1249 = vshrl.u32 %v1248, 7
        %v1250 = vsub.s32 1, %v1249
        %v1251 = vrot.slane %v1242, %v1250
        %v1262 = vunpack.c.l.b16 %v1234
        %v1263 = vunpack.c.h.b16 %v1234
        %v1264 = vunpack.c.l.b16 %v1235
        %v1265 = vunpack.c.h.b16 %v1235
        %v1266 = vunpack.c.l.b16 %v1236
        %v1267 = vunpack.c.h.b16 %v1236
        %v1268 = vunpack.c.l.b16 %v1237
        %v1269 = vunpack.c.h.b16 %v1237
        %v1270 = vunpack.c.l.b16 %v1238
        %v1271 = vunpack.c.h.b16 %v1238
        %v1272 = vunpack.c.l.b16 %v1239
        %v1273 = vunpack.c.h.b16 %v1239
        %v1274 = vunpack.c.l.b16 %v1240
        %v1275 = vunpack.c.h.b16 %v1240
        %v1276 = vunpack.c.l.b16 %v1241
        %v1277 = vunpack.c.h.b16 %v1241
        %v1278 = vpack.c.b16 %v1264, %v1262
        %v1279 = vpack.c.b16 %v1265, %v1263
        %v1280 = vpack.c.b16 %v1268, %v1266
        %v1281 = vpack.c.b16 %v1269, %v1267
        %v1282 = vpack.c.b16 %v1272, %v1270
        %v1283 = vpack.c.b16 %v1273, %v1271
        %v1284 = vpack.c.b16 %v1276, %v1274
        %v1285 = vpack.c.b16 %v1277, %v1275
        %v1295 = vsel %vm527, %v1233, 0
        %1297 = vmatprep.subr.bf16.mxu0 %v1279
        %1298 = vmatpush1.bf16.msra.mxu0 %v1278
        %1299 = vmatprep.subr.bf16.mxu0 %v1281
        %1300 = vmatpush1.bf16.msra.mxu0 %v1280
        %1301 = vmatprep.subr.bf16.mxu0 %v1283
        %1302 = vmatpush1.bf16.msra.mxu0 %v1282
        %1303 = vmatprep.subr.bf16.mxu0 %v1285
        %1304 = vmatpush1.bf16.msra.mxu0 %v1284
        %1305 = vmatprep.subr.bf16.mxu0 0
        %1306 = vmatpush1.bf16.msra.mxu0 0
        %1307 = vmatprep.subr.bf16.mxu0 0
        %1308 = vmatpush1.bf16.msra.mxu0 0
        %1309 = vmatprep.subr.bf16.mxu0 0
        %1310 = vmatpush1.bf16.msra.mxu0 0
        %1311 = vmatprep.subr.bf16.mxu0 0
        %1312 = vmatpush1.bf16.msra.mxu0 0
        %1313 = vmatprep.subr.bf16.mxu0 0
        %1314 = vmatpush1.bf16.msra.mxu0 0
        %1315 = vmatprep.subr.bf16.mxu0 0
        %1316 = vmatpush1.bf16.msra.mxu0 0
        %1317 = vmatprep.subr.bf16.mxu0 0
        %1318 = vmatpush1.bf16.msra.mxu0 0
        %1319 = vmatprep.subr.bf16.mxu0 0
        %1320 = vmatpush1.bf16.msra.mxu0 0
        %1321 = vmatprep.subr.bf16.mxu0 0
        %1322 = vmatpush1.bf16.msra.mxu0 0
        %1323 = vmatprep.subr.bf16.mxu0 0
        %1324 = vmatpush1.bf16.msra.mxu0 0
        %1325 = vmatprep.subr.bf16.mxu0 0
        %1326 = vmatpush1.bf16.msra.mxu0 0
        %1327 = vmatprep.subr.bf16.mxu0 0
        %1328 = vmatpush1.bf16.msra.mxu0 0
        %1329 = vmatprep.mubr.bf16.mxu0 0
        %1330 = vmatmul.mubr.bf16.gmra.mrb[0].mxu0 %v1295
        %v1331 = vpop.f32.mrb[0].mxu0
        %v1332 = vadd.f32 %v1247, %v1331
        %v1333 = vpop.f32.mrb[0].mxu0
        %v1334 = vadd.f32 %v1251, %v1333
        %v1335 = vpop.f32.mrb[0].mxu0
        %v1336 = vpop.f32.mrb[0].mxu0
        %1337 = vdwg.mxu0
        %v1338 = vmax.f32 %v1332, 0.0
        %v1339 = vmax.f32 %v1334, 0.0
        %v1340 = vpack.c.bf16 %v1338, %v1338
        %v1341 = vpack.c.bf16 %v1339, %v1339
        %v1342 = vld [vmem:[%s10] sm:$0xf]
        %v1343 = vld [vmem:[%s10 + $0x4] sm:$0xf]
        %v1344 = vld [vmem:[%s10 + $0x8] sm:$0xf]
        %v1345 = vld [vmem:[%s10 + $0xc] sm:$0xf]
        %v1346 = vld [vmem:[%s10 + $0x10] sm:$0xf]
        %v1347 = vld [vmem:[%s10 + $0x14] sm:$0xf]
        %v1348 = vld [vmem:[%s10 + $0x18] sm:$0xf]
        %v1349 = vld [vmem:[%s10 + $0x1c] sm:$0xf]
        %v1350 = vld [vmem:[%s10 + $0x20] sm:$0xf]
        %v1351 = vld [vmem:[%s10 + $0x24] sm:$0xf]
        %v1352 = vld [vmem:[%s10 + $0x28] sm:$0xf]
        %v1353 = vld [vmem:[%s10 + $0x2c] sm:$0xf]
        %v1354 = vld [vmem:[%s10 + $0x30] sm:$0xf]
        %v1355 = vld [vmem:[%s10 + $0x34] sm:$0xf]
        %v1356 = vld [vmem:[%s10 + $0x38] sm:$0xf]
        %v1357 = vld [vmem:[%s10 + $0x3c] sm:$0xf]
        %v1358 = vld [vmem:[%s10 + $0x40] sm:$0xf]
        %v1359 = vld [vmem:[%s10 + $0x44] sm:$0xf]
        %v1360 = vld [vmem:[%s10 + $0x48] sm:$0xf]
        %v1361 = vld [vmem:[%s10 + $0x4c] sm:$0xf]
        %v1362 = vld [vmem:[%s10 + $0x50] sm:$0xf]
        %v1363 = vld [vmem:[%s10 + $0x54] sm:$0xf]
        %v1364 = vld [vmem:[%s10 + $0x58] sm:$0xf]
        %v1365 = vld [vmem:[%s10 + $0x5c] sm:$0xf]
        %v1366 = vld [vmem:[%s10 + $0x60] sm:$0xf]
        %v1367 = vld [vmem:[%s10 + $0x64] sm:$0xf]
        %v1368 = vld [vmem:[%s10 + $0x68] sm:$0xf]
        %v1369 = vld [vmem:[%s10 + $0x6c] sm:$0xf]
        %v1370 = vld [vmem:[%s10 + $0x70] sm:$0xf]
        %v1371 = vld [vmem:[%s10 + $0x74] sm:$0xf]
        %v1372 = vld [vmem:[%s10 + $0x78] sm:$0xf]
        %v1373 = vld [vmem:[%s10 + $0x7c] sm:$0xf]
        %v1374 = vld [vmem:[%s11] sm:$0x1]
        %v1376 = vlaneseq
        %v1377 = vshrl.u32 %v1376, 7
        %v1378 = vsub.s32 0, %v1377
        %v1379 = vrot.slane %v1374, %v1378
        %v1413 = vunpack.c.l.b16 %v1342
        %v1414 = vunpack.c.l.b16 %v1343
        %v1415 = vunpack.c.l.b16 %v1344
        %v1416 = vunpack.c.l.b16 %v1345
        %v1417 = vunpack.c.l.b16 %v1346
        %v1418 = vunpack.c.l.b16 %v1347
        %v1419 = vunpack.c.l.b16 %v1348
        %v1420 = vunpack.c.l.b16 %v1349
        %v1421 = vunpack.c.l.b16 %v1350
        %v1422 = vunpack.c.l.b16 %v1351
        %v1423 = vunpack.c.l.b16 %v1352
        %v1424 = vunpack.c.l.b16 %v1353
        %v1425 = vunpack.c.l.b16 %v1354
        %v1426 = vunpack.c.l.b16 %v1355
        %v1427 = vunpack.c.l.b16 %v1356
        %v1428 = vunpack.c.l.b16 %v1357
        %v1429 = vunpack.c.l.b16 %v1358
        %v1430 = vunpack.c.l.b16 %v1359
        %v1431 = vunpack.c.l.b16 %v1360
        %v1432 = vunpack.c.l.b16 %v1361
        %v1433 = vunpack.c.l.b16 %v1362
        %v1434 = vunpack.c.l.b16 %v1363
        %v1435 = vunpack.c.l.b16 %v1364
        %v1436 = vunpack.c.l.b16 %v1365
        %v1437 = vunpack.c.l.b16 %v1366
        %v1438 = vunpack.c.l.b16 %v1367
        %v1439 = vunpack.c.l.b16 %v1368
        %v1440 = vunpack.c.l.b16 %v1369
        %v1441 = vunpack.c.l.b16 %v1370
        %v1442 = vunpack.c.l.b16 %v1371
        %v1443 = vunpack.c.l.b16 %v1372
        %v1444 = vunpack.c.l.b16 %v1373
        %v1445 = vpack.c.b16 %v1414, %v1413
        %v1446 = vpack.c.b16 %v1416, %v1415
        %v1447 = vpack.c.b16 %v1418, %v1417
        %v1448 = vpack.c.b16 %v1420, %v1419
        %v1449 = vpack.c.b16 %v1422, %v1421
        %v1450 = vpack.c.b16 %v1424, %v1423
        %v1451 = vpack.c.b16 %v1426, %v1425
        %v1452 = vpack.c.b16 %v1428, %v1427
        %v1453 = vpack.c.b16 %v1430, %v1429
        %v1454 = vpack.c.b16 %v1432, %v1431
        %v1455 = vpack.c.b16 %v1434, %v1433
        %v1456 = vpack.c.b16 %v1436, %v1435
        %v1457 = vpack.c.b16 %v1438, %v1437
        %v1458 = vpack.c.b16 %v1440, %v1439
        %v1459 = vpack.c.b16 %v1442, %v1441
        %v1460 = vpack.c.b16 %v1444, %v1443
        %1477 = vmatprep.subr.bf16.mxu0 0
        %1478 = vmatpush1.bf16.msra.mxu0 %v1445
        %1479 = vmatprep.subr.bf16.mxu0 0
        %1480 = vmatpush1.bf16.msra.mxu0 %v1446
        %1481 = vmatprep.subr.bf16.mxu0 0
        %1482 = vmatpush1.bf16.msra.mxu0 %v1447
        %1483 = vmatprep.subr.bf16.mxu0 0
        %1484 = vmatpush1.bf16.msra.mxu0 %v1448
        %1485 = vmatprep.subr.bf16.mxu0 0
        %1486 = vmatpush1.bf16.msra.mxu0 %v1449
        %1487 = vmatprep.subr.bf16.mxu0 0
        %1488 = vmatpush1.bf16.msra.mxu0 %v1450
        %1489 = vmatprep.subr.bf16.mxu0 0
        %1490 = vmatpush1.bf16.msra.mxu0 %v1451
        %1491 = vmatprep.subr.bf16.mxu0 0
        %1492 = vmatpush1.bf16.msra.mxu0 %v1452
        %1493 = vmatprep.subr.bf16.mxu0 0
        %1494 = vmatpush1.bf16.msra.mxu0 %v1453
        %1495 = vmatprep.subr.bf16.mxu0 0
        %1496 = vmatpush1.bf16.msra.mxu0 %v1454
        %1497 = vmatprep.subr.bf16.mxu0 0
        %1498 = vmatpush1.bf16.msra.mxu0 %v1455
        %1499 = vmatprep.subr.bf16.mxu0 0
        %1500 = vmatpush1.bf16.msra.mxu0 %v1456
        %1501 = vmatprep.subr.bf16.mxu0 0
        %1502 = vmatpush1.bf16.msra.mxu0 %v1457
        %1503 = vmatprep.subr.bf16.mxu0 0
        %1504 = vmatpush1.bf16.msra.mxu0 %v1458
        %1505 = vmatprep.subr.bf16.mxu0 0
        %1506 = vmatpush1.bf16.msra.mxu0 %v1459
        %1507 = vmatprep.subr.bf16.mxu0 0
        %1508 = vmatpush1.bf16.msra.mxu0 %v1460
        %1509 = vmatprep.mubr.bf16.mxu0 %v1341
        %1510 = vmatmul.mubr.bf16.gmra.mrb[0].mxu0 %v1340
        %v1511 = vpop.f32.mrb[0].mxu0
        %v1512 = vadd.f32 %v1379, %v1511
        %v1513 = vpop.f32.mrb[0].mxu0
        %v1514 = vpop.f32.mrb[0].mxu0
        %v1515 = vpop.f32.mrb[0].mxu0
        %1516 = vdwg.mxu0
        %v1517 = vadd.f32 %v1203, %v1512
        %s1518 = scalar_lea.vmem %s1, 1
        %v1519 = vld [vmem:[%s1518] sm:$0x1]
        %s1520 = scalar_lea.vmem %s2, 1
        %v1521 = vld [vmem:[%s1520] sm:$0x1]
        %v1522 = vsel %vm527, %v1517, 0.0
        %1523 = vadd.xlane.f32.xlu0 %v1522
        %v1524 = vpop.xlane.xlu0 %1523
        %v1525 = vmul.f32 %v1524, %v531
        %v1526 = vsub.f32 %v1517, %v1525
        %v1527 = vmul.f32 %v1526, %v1526
        %v1528 = vsel %vm527, %v1527, 0.0
        %1529 = vadd.xlane.f32.xlu0 %v1528
        %v1530 = vpop.xlane.xlu0 %1529
        %v1531 = vmul.f32 %v1530, %v531
        %v1532 = vadd.f32 %v1531, 1e-05
        %v1533 = vrsqrt.pop %v1532
        %v1534 = vmul.f32 %v1526, %v1533
        %v1536 = vlaneseq
        %v1537 = vshrl.u32 %v1536, 7
        %v1538 = vsub.s32 0, %v1537
        %v1539 = vrot.slane %v1519, %v1538
        %v1541 = vmul.f32 %v1534, %v1539
        %v1543 = vlaneseq
        %v1544 = vshrl.u32 %v1543, 7
        %v1545 = vsub.s32 0, %v1544
        %v1546 = vrot.slane %v1521, %v1545
        %v1548 = vadd.f32 %v1541, %v1546
        %v1549 = vpack.c.bf16 %v1548, %v1548
        %s1550 = scalar_lea.vmem %s3, 64
        %v1551 = vld [vmem:[%s1550] sm:$0xff]
        %v1552 = vld [vmem:[%s1550 + $0x8] sm:$0xff]
        %v1553 = vld [vmem:[%s1550 + $0x10] sm:$0xff]
        %v1554 = vld [vmem:[%s1550 + $0x18] sm:$0xff]
        %v1555 = vld [vmem:[%s1550 + $0x20] sm:$0xff]
        %v1556 = vld [vmem:[%s1550 + $0x28] sm:$0xff]
        %v1557 = vld [vmem:[%s1550 + $0x30] sm:$0xff]
        %v1558 = vld [vmem:[%s1550 + $0x38] sm:$0xff]
        %v1567 = vunpack.c.l.b16 %v1551
        %v1568 = vunpack.c.h.b16 %v1551
        %v1569 = vunpack.c.l.b16 %v1552
        %v1570 = vunpack.c.h.b16 %v1552
        %v1571 = vunpack.c.l.b16 %v1553
        %v1572 = vunpack.c.h.b16 %v1553
        %v1573 = vunpack.c.l.b16 %v1554
        %v1574 = vunpack.c.h.b16 %v1554
        %v1575 = vunpack.c.l.b16 %v1555
        %v1576 = vunpack.c.h.b16 %v1555
        %v1577 = vunpack.c.l.b16 %v1556
        %v1578 = vunpack.c.h.b16 %v1556
        %v1579 = vunpack.c.l.b16 %v1557
        %v1580 = vunpack.c.h.b16 %v1557
        %v1581 = vunpack.c.l.b16 %v1558
        %v1582 = vunpack.c.h.b16 %v1558
        %v1583 = vpack.c.b16 %v1569, %v1567
        %v1584 = vpack.c.b16 %v1570, %v1568
        %v1585 = vpack.c.b16 %v1573, %v1571
        %v1586 = vpack.c.b16 %v1574, %v1572
        %v1587 = vpack.c.b16 %v1577, %v1575
        %v1588 = vpack.c.b16 %v1578, %v1576
        %v1589 = vpack.c.b16 %v1581, %v1579
        %v1590 = vpack.c.b16 %v1582, %v1580
        %v1600 = vsel %vm527, %v1549, 0
        %1602 = vmatprep.subr.bf16.mxu0 %v1584
        %1603 = vmatpush1.bf16.msra.mxu0 %v1583
        %1604 = vmatprep.subr.bf16.mxu0 %v1586
        %1605 = vmatpush1.bf16.msra.mxu0 %v1585
        %1606 = vmatprep.subr.bf16.mxu0 %v1588
        %1607 = vmatpush1.bf16.msra.mxu0 %v1587
        %1608 = vmatprep.subr.bf16.mxu0 %v1590
        %1609 = vmatpush1.bf16.msra.mxu0 %v1589
        %1610 = vmatprep.subr.bf16.mxu0 0
        %1611 = vmatpush1.bf16.msra.mxu0 0
        %1612 = vmatprep.subr.bf16.mxu0 0
        %1613 = vmatpush1.bf16.msra.mxu0 0
        %1614 = vmatprep.subr.bf16.mxu0 0
        %1615 = vmatpush1.bf16.msra.mxu0 0
        %1616 = vmatprep.subr.bf16.mxu0 0
        %1617 = vmatpush1.bf16.msra.mxu0 0
        %1618 = vmatprep.subr.bf16.mxu0 0
        %1619 = vmatpush1.bf16.msra.mxu0 0
        %1620 = vmatprep.subr.bf16.mxu0 0
        %1621 = vmatpush1.bf16.msra.mxu0 0
        %1622 = vmatprep.subr.bf16.mxu0 0
        %1623 = vmatpush1.bf16.msra.mxu0 0
        %1624 = vmatprep.subr.bf16.mxu0 0
        %1625 = vmatpush1.bf16.msra.mxu0 0
        %1626 = vmatprep.subr.bf16.mxu0 0
        %1627 = vmatpush1.bf16.msra.mxu0 0
        %1628 = vmatprep.subr.bf16.mxu0 0
        %1629 = vmatpush1.bf16.msra.mxu0 0
        %1630 = vmatprep.subr.bf16.mxu0 0
        %1631 = vmatpush1.bf16.msra.mxu0 0
        %1632 = vmatprep.subr.bf16.mxu0 0
        %1633 = vmatpush1.bf16.msra.mxu0 0
        %1634 = vmatprep.mubr.bf16.mxu0 0
        %1635 = vmatmul.mubr.bf16.gmra.mrb[0].mxu0 %v1600
        %v1636 = vpop.f32.mrb[0].mxu0
        %v1637 = vadd.f32 0.0, %v1636
        %v1638 = vpop.f32.mrb[0].mxu0
        %v1639 = vadd.f32 0.0, %v1638
        %v1640 = vpop.f32.mrb[0].mxu0
        %v1641 = vpop.f32.mrb[0].mxu0
        %1642 = vdwg.mxu0
        %v1643 = vpack.c.bf16 %v1637, %v1637
        %1645 = vrot.lane.b32.xlu0 %v1643, 64
        %v1646 = vpop.permute.xlu0 %1645
        %v1648 = vsel %vm653, %v1643, 0
        %v1651 = vsel %vm653, %v1646, 0
        %1653 = vmatprep.subr.bf16.mxu0 0
        %1654 = vmatpush1.bf16.xpose.msra.mxu0 %v1651
        %1655 = vmatprep.subr.bf16.mxu0 0
        %1656 = vmatpush1.bf16.xpose.msra.mxu0 0
        %1657 = vmatprep.subr.bf16.mxu0 0
        %1658 = vmatpush1.bf16.xpose.msra.mxu0 0
        %1659 = vmatprep.subr.bf16.mxu0 0
        %1660 = vmatpush1.bf16.xpose.msra.mxu0 0
        %1661 = vmatprep.subr.bf16.mxu0 0
        %1662 = vmatpush1.bf16.xpose.msra.mxu0 0
        %1663 = vmatprep.subr.bf16.mxu0 0
        %1664 = vmatpush1.bf16.xpose.msra.mxu0 0
        %1665 = vmatprep.subr.bf16.mxu0 0
        %1666 = vmatpush1.bf16.xpose.msra.mxu0 0
        %1667 = vmatprep.subr.bf16.mxu0 0
        %1668 = vmatpush1.bf16.xpose.msra.mxu0 0
        %1669 = vmatprep.subr.bf16.mxu0 0
        %1670 = vmatpush1.bf16.xpose.msra.mxu0 0
        %1671 = vmatprep.subr.bf16.mxu0 0
        %1672 = vmatpush1.bf16.xpose.msra.mxu0 0
        %1673 = vmatprep.subr.bf16.mxu0 0
        %1674 = vmatpush1.bf16.xpose.msra.mxu0 0
        %1675 = vmatprep.subr.bf16.mxu0 0
        %1676 = vmatpush1.bf16.xpose.msra.mxu0 0
        %1677 = vmatprep.subr.bf16.mxu0 0
        %1678 = vmatpush1.bf16.xpose.msra.mxu0 0
        %1679 = vmatprep.subr.bf16.mxu0 0
        %1680 = vmatpush1.bf16.xpose.msra.mxu0 0
        %1681 = vmatprep.subr.bf16.mxu0 0
        %1682 = vmatpush1.bf16.xpose.msra.mxu0 0
        %1683 = vmatprep.subr.bf16.mxu0 0
        %1684 = vmatpush1.bf16.xpose.msra.mxu0 0
        %1685 = vmatprep.mubr.bf16.mxu0 0
        %1686 = vmatmul.mubr.bf16.gmra.mrb[0].mxu0 %v1648
        %v1687 = vpop.f32.mrb[0].mxu0
        %v1688 = vadd.f32 0.0, %v1687
        %v1689 = vpop.f32.mrb[0].mxu0
        %v1690 = vpop.f32.mrb[0].mxu0
        %v1691 = vpop.f32.mrb[0].mxu0
        %1692 = vdwg.mxu0
        %v1693 = vmul.f32 %v1688, 0.125
        %v1694 = vadd.f32 %v1693, %v524
        %v1695 = vsel %vm702, %v1694, -inf
        %1696 = vmax.xlane.f32.xlu0 %v1695
        %v1697 = vpop.xlane.xlu0 %1696
        %v1698 = vsub.f32 %v1694, %v1697
        %v1699 = vmul.f32 %v1698, 1.442695
        %v1700 = vpow.pop %v1699
        %v1701 = vsel %vm702, %v1700, 0.0
        %1702 = vadd.xlane.f32.xlu0 %v1701
        %v1703 = vpop.xlane.xlu0 %1702
        %v1704 = vrcp.pop %v1703
        %v1705 = vmul.f32 %v1700, %v1704
        %v1706 = vpack.c.bf16 %v1705, %v1705
        %v1707 = vpack.c.bf16 %v1639, %v1639
        %v1709 = vsel %vm702, %v1706, 0
        %v1712 = vsel %vm719, %v1707, 0
        %1714 = vmatprep.subr.bf16.mxu0 0
        %1715 = vmatpush1.bf16.msra.mxu0 %v1712
        %1716 = vmatprep.subr.bf16.mxu0 0
        %1717 = vmatpush1.bf16.msra.mxu0 0
        %1718 = vmatprep.subr.bf16.mxu0 0
        %1719 = vmatpush1.bf16.msra.mxu0 0
        %1720 = vmatprep.subr.bf16.mxu0 0
        %1721 = vmatpush1.bf16.msra.mxu0 0
        %1722 = vmatprep.subr.bf16.mxu0 0
        %1723 = vmatpush1.bf16.msra.mxu0 0
        %1724 = vmatprep.subr.bf16.mxu0 0
        %1725 = vmatpush1.bf16.msra.mxu0 0
        %1726 = vmatprep.subr.bf16.mxu0 0
        %1727 = vmatpush1.bf16.msra.mxu0 0
        %1728 = vmatprep.subr.bf16.mxu0 0
        %1729 = vmatpush1.bf16.msra.mxu0 0
        %1730 = vmatprep.subr.bf16.mxu0 0
        %1731 = vmatpush1.bf16.msra.mxu0 0
        %1732 = vmatprep.subr.bf16.mxu0 0
        %1733 = vmatpush1.bf16.msra.mxu0 0
        %1734 = vmatprep.subr.bf16.mxu0 0
        %1735 = vmatpush1.bf16.msra.mxu0 0
        %1736 = vmatprep.subr.bf16.mxu0 0
        %1737 = vmatpush1.bf16.msra.mxu0 0
        %1738 = vmatprep.subr.bf16.mxu0 0
        %1739 = vmatpush1.bf16.msra.mxu0 0
        %1740 = vmatprep.subr.bf16.mxu0 0
        %1741 = vmatpush1.bf16.msra.mxu0 0
        %1742 = vmatprep.subr.bf16.mxu0 0
        %1743 = vmatpush1.bf16.msra.mxu0 0
        %1744 = vmatprep.subr.bf16.mxu0 0
        %1745 = vmatpush1.bf16.msra.mxu0 0
        %1746 = vmatprep.mubr.bf16.mxu0 0
        %1747 = vmatmul.mubr.bf16.gmra.mrb[0].mxu0 %v1709
        %v1748 = vpop.f32.mrb[0].mxu0
        %v1749 = vadd.f32 0.0, %v1748
        %v1750 = vpop.f32.mrb[0].mxu0
        %v1751 = vpop.f32.mrb[0].mxu0
        %v1752 = vpop.f32.mrb[0].mxu0
        %1753 = vdwg.mxu0
        %1754 = vst.msk [vmem:[#allocation2] sm:$0xff] %vm653, %v1749
        %1755 = vrot.lane.b32.xlu0 %v1643, 112
        %v1756 = vpop.permute.xlu0 %1755
        %1757 = vrot.lane.b32.xlu0 %v1643, 48
        %v1758 = vpop.permute.xlu0 %1757
        %v1760 = vsel %vm653, %v1756, 0
        %v1763 = vsel %vm653, %v1758, 0
        %1765 = vmatprep.subr.bf16.mxu0 0
        %1766 = vmatpush1.bf16.xpose.msra.mxu0 %v1763
        %1767 = vmatprep.subr.bf16.mxu0 0
        %1768 = vmatpush1.bf16.xpose.msra.mxu0 0
        %1769 = vmatprep.subr.bf16.mxu0 0
        %1770 = vmatpush1.bf16.xpose.msra.mxu0 0
        %1771 = vmatprep.subr.bf16.mxu0 0
        %1772 = vmatpush1.bf16.xpose.msra.mxu0 0
        %1773 = vmatprep.subr.bf16.mxu0 0
        %1774 = vmatpush1.bf16.xpose.msra.mxu0 0
        %1775 = vmatprep.subr.bf16.mxu0 0
        %1776 = vmatpush1.bf16.xpose.msra.mxu0 0
        %1777 = vmatprep.subr.bf16.mxu0 0
        %1778 = vmatpush1.bf16.xpose.msra.mxu0 0
        %1779 = vmatprep.subr.bf16.mxu0 0
        %1780 = vmatpush1.bf16.xpose.msra.mxu0 0
        %1781 = vmatprep.subr.bf16.mxu0 0
        %1782 = vmatpush1.bf16.xpose.msra.mxu0 0
        %1783 = vmatprep.subr.bf16.mxu0 0
        %1784 = vmatpush1.bf16.xpose.msra.mxu0 0
        %1785 = vmatprep.subr.bf16.mxu0 0
        %1786 = vmatpush1.bf16.xpose.msra.mxu0 0
        %1787 = vmatprep.subr.bf16.mxu0 0
        %1788 = vmatpush1.bf16.xpose.msra.mxu0 0
        %1789 = vmatprep.subr.bf16.mxu0 0
        %1790 = vmatpush1.bf16.xpose.msra.mxu0 0
        %1791 = vmatprep.subr.bf16.mxu0 0
        %1792 = vmatpush1.bf16.xpose.msra.mxu0 0
        %1793 = vmatprep.subr.bf16.mxu0 0
        %1794 = vmatpush1.bf16.xpose.msra.mxu0 0
        %1795 = vmatprep.subr.bf16.mxu0 0
        %1796 = vmatpush1.bf16.xpose.msra.mxu0 0
        %1797 = vmatprep.mubr.bf16.mxu0 0
        %1798 = vmatmul.mubr.bf16.gmra.mrb[0].mxu0 %v1760
        %v1799 = vpop.f32.mrb[0].mxu0
        %v1800 = vadd.f32 0.0, %v1799
        %v1801 = vpop.f32.mrb[0].mxu0
        %v1802 = vpop.f32.mrb[0].mxu0
        %v1803 = vpop.f32.mrb[0].mxu0
        %1804 = vdwg.mxu0
        %v1805 = vmul.f32 %v1800, 0.125
        %v1806 = vadd.f32 %v1805, %v524
        %v1807 = vsel %vm702, %v1806, -inf
        %1808 = vmax.xlane.f32.xlu0 %v1807
        %v1809 = vpop.xlane.xlu0 %1808
        %v1810 = vsub.f32 %v1806, %v1809
        %v1811 = vmul.f32 %v1810, 1.442695
        %v1812 = vpow.pop %v1811
        %v1813 = vsel %vm702, %v1812, 0.0
        %1814 = vadd.xlane.f32.xlu0 %v1813
        %v1815 = vpop.xlane.xlu0 %1814
        %v1816 = vrcp.pop %v1815
        %v1817 = vmul.f32 %v1812, %v1816
        %v1818 = vpack.c.bf16 %v1817, %v1817
        %1820 = vrot.lane.b32.xlu0 %v1707, 112
        %v1821 = vpop.permute.xlu0 %1820
        %v1823 = vsel %vm702, %v1818, 0
        %v1826 = vsel %vm719, %v1821, 0
        %1828 = vmatprep.subr.bf16.mxu0 0
        %1829 = vmatpush1.bf16.msra.mxu0 %v1826
        %1830 = vmatprep.subr.bf16.mxu0 0
        %1831 = vmatpush1.bf16.msra.mxu0 0
        %1832 = vmatprep.subr.bf16.mxu0 0
        %1833 = vmatpush1.bf16.msra.mxu0 0
        %1834 = vmatprep.subr.bf16.mxu0 0
        %1835 = vmatpush1.bf16.msra.mxu0 0
        %1836 = vmatprep.subr.bf16.mxu0 0
        %1837 = vmatpush1.bf16.msra.mxu0 0
        %1838 = vmatprep.subr.bf16.mxu0 0
        %1839 = vmatpush1.bf16.msra.mxu0 0
        %1840 = vmatprep.subr.bf16.mxu0 0
        %1841 = vmatpush1.bf16.msra.mxu0 0
        %1842 = vmatprep.subr.bf16.mxu0 0
        %1843 = vmatpush1.bf16.msra.mxu0 0
        %1844 = vmatprep.subr.bf16.mxu0 0
        %1845 = vmatpush1.bf16.msra.mxu0 0
        %1846 = vmatprep.subr.bf16.mxu0 0
        %1847 = vmatpush1.bf16.msra.mxu0 0
        %1848 = vmatprep.subr.bf16.mxu0 0
        %1849 = vmatpush1.bf16.msra.mxu0 0
        %1850 = vmatprep.subr.bf16.mxu0 0
        %1851 = vmatpush1.bf16.msra.mxu0 0
        %1852 = vmatprep.subr.bf16.mxu0 0
        %1853 = vmatpush1.bf16.msra.mxu0 0
        %1854 = vmatprep.subr.bf16.mxu0 0
        %1855 = vmatpush1.bf16.msra.mxu0 0
        %1856 = vmatprep.subr.bf16.mxu0 0
        %1857 = vmatpush1.bf16.msra.mxu0 0
        %1858 = vmatprep.subr.bf16.mxu0 0
        %1859 = vmatpush1.bf16.msra.mxu0 0
        %1860 = vmatprep.mubr.bf16.mxu0 0
        %1861 = vmatmul.mubr.bf16.gmra.mrb[0].mxu0 %v1823
        %v1862 = vpop.f32.mrb[0].mxu0
        %v1863 = vadd.f32 0.0, %v1862
        %v1864 = vpop.f32.mrb[0].mxu0
        %v1865 = vpop.f32.mrb[0].mxu0
        %v1866 = vpop.f32.mrb[0].mxu0
        %1867 = vdwg.mxu0
        %1869 = vrot.lane.b32.xlu0 %v1863, 16
        %v1870 = vpop.permute.xlu0 %1869
        %1872 = vst.msk [vmem:[#allocation2] sm:$0xff] %vm881, %v1870
        %1873 = vrot.lane.b32.xlu0 %v1643, 96
        %v1874 = vpop.permute.xlu0 %1873
        %1875 = vrot.lane.b32.xlu0 %v1643, 32
        %v1876 = vpop.permute.xlu0 %1875
        %v1878 = vsel %vm653, %v1874, 0
        %v1881 = vsel %vm653, %v1876, 0
        %1883 = vmatprep.subr.bf16.mxu0 0
        %1884 = vmatpush1.bf16.xpose.msra.mxu0 %v1881
        %1885 = vmatprep.subr.bf16.mxu0 0
        %1886 = vmatpush1.bf16.xpose.msra.mxu0 0
        %1887 = vmatprep.subr.bf16.mxu0 0
        %1888 = vmatpush1.bf16.xpose.msra.mxu0 0
        %1889 = vmatprep.subr.bf16.mxu0 0
        %1890 = vmatpush1.bf16.xpose.msra.mxu0 0
        %1891 = vmatprep.subr.bf16.mxu0 0
        %1892 = vmatpush1.bf16.xpose.msra.mxu0 0
        %1893 = vmatprep.subr.bf16.mxu0 0
        %1894 = vmatpush1.bf16.xpose.msra.mxu0 0
        %1895 = vmatprep.subr.bf16.mxu0 0
        %1896 = vmatpush1.bf16.xpose.msra.mxu0 0
        %1897 = vmatprep.subr.bf16.mxu0 0
        %1898 = vmatpush1.bf16.xpose.msra.mxu0 0
        %1899 = vmatprep.subr.bf16.mxu0 0
        %1900 = vmatpush1.bf16.xpose.msra.mxu0 0
        %1901 = vmatprep.subr.bf16.mxu0 0
        %1902 = vmatpush1.bf16.xpose.msra.mxu0 0
        %1903 = vmatprep.subr.bf16.mxu0 0
        %1904 = vmatpush1.bf16.xpose.msra.mxu0 0
        %1905 = vmatprep.subr.bf16.mxu0 0
        %1906 = vmatpush1.bf16.xpose.msra.mxu0 0
        %1907 = vmatprep.subr.bf16.mxu0 0
        %1908 = vmatpush1.bf16.xpose.msra.mxu0 0
        %1909 = vmatprep.subr.bf16.mxu0 0
        %1910 = vmatpush1.bf16.xpose.msra.mxu0 0
        %1911 = vmatprep.subr.bf16.mxu0 0
        %1912 = vmatpush1.bf16.xpose.msra.mxu0 0
        %1913 = vmatprep.subr.bf16.mxu0 0
        %1914 = vmatpush1.bf16.xpose.msra.mxu0 0
        %1915 = vmatprep.mubr.bf16.mxu0 0
        %1916 = vmatmul.mubr.bf16.gmra.mrb[0].mxu0 %v1878
        %v1917 = vpop.f32.mrb[0].mxu0
        %v1918 = vadd.f32 0.0, %v1917
        %v1919 = vpop.f32.mrb[0].mxu0
        %v1920 = vpop.f32.mrb[0].mxu0
        %v1921 = vpop.f32.mrb[0].mxu0
        %1922 = vdwg.mxu0
        %v1923 = vmul.f32 %v1918, 0.125
        %v1924 = vadd.f32 %v1923, %v524
        %v1925 = vsel %vm702, %v1924, -inf
        %1926 = vmax.xlane.f32.xlu0 %v1925
        %v1927 = vpop.xlane.xlu0 %1926
        %v1928 = vsub.f32 %v1924, %v1927
        %v1929 = vmul.f32 %v1928, 1.442695
        %v1930 = vpow.pop %v1929
        %v1931 = vsel %vm702, %v1930, 0.0
        %1932 = vadd.xlane.f32.xlu0 %v1931
        %v1933 = vpop.xlane.xlu0 %1932
        %v1934 = vrcp.pop %v1933
        %v1935 = vmul.f32 %v1930, %v1934
        %v1936 = vpack.c.bf16 %v1935, %v1935
        %1937 = vrot.lane.b32.xlu0 %v1707, 96
        %v1938 = vpop.permute.xlu0 %1937
        %v1940 = vsel %vm702, %v1936, 0
        %v1943 = vsel %vm719, %v1938, 0
        %1945 = vmatprep.subr.bf16.mxu0 0
        %1946 = vmatpush1.bf16.msra.mxu0 %v1943
        %1947 = vmatprep.subr.bf16.mxu0 0
        %1948 = vmatpush1.bf16.msra.mxu0 0
        %1949 = vmatprep.subr.bf16.mxu0 0
        %1950 = vmatpush1.bf16.msra.mxu0 0
        %1951 = vmatprep.subr.bf16.mxu0 0
        %1952 = vmatpush1.bf16.msra.mxu0 0
        %1953 = vmatprep.subr.bf16.mxu0 0
        %1954 = vmatpush1.bf16.msra.mxu0 0
        %1955 = vmatprep.subr.bf16.mxu0 0
        %1956 = vmatpush1.bf16.msra.mxu0 0
        %1957 = vmatprep.subr.bf16.mxu0 0
        %1958 = vmatpush1.bf16.msra.mxu0 0
        %1959 = vmatprep.subr.bf16.mxu0 0
        %1960 = vmatpush1.bf16.msra.mxu0 0
        %1961 = vmatprep.subr.bf16.mxu0 0
        %1962 = vmatpush1.bf16.msra.mxu0 0
        %1963 = vmatprep.subr.bf16.mxu0 0
        %1964 = vmatpush1.bf16.msra.mxu0 0
        %1965 = vmatprep.subr.bf16.mxu0 0
        %1966 = vmatpush1.bf16.msra.mxu0 0
        %1967 = vmatprep.subr.bf16.mxu0 0
        %1968 = vmatpush1.bf16.msra.mxu0 0
        %1969 = vmatprep.subr.bf16.mxu0 0
        %1970 = vmatpush1.bf16.msra.mxu0 0
        %1971 = vmatprep.subr.bf16.mxu0 0
        %1972 = vmatpush1.bf16.msra.mxu0 0
        %1973 = vmatprep.subr.bf16.mxu0 0
        %1974 = vmatpush1.bf16.msra.mxu0 0
        %1975 = vmatprep.subr.bf16.mxu0 0
        %1976 = vmatpush1.bf16.msra.mxu0 0
        %1977 = vmatprep.mubr.bf16.mxu0 0
        %1978 = vmatmul.mubr.bf16.gmra.mrb[0].mxu0 %v1940
        %v1979 = vpop.f32.mrb[0].mxu0
        %v1980 = vadd.f32 0.0, %v1979
        %v1981 = vpop.f32.mrb[0].mxu0
        %v1982 = vpop.f32.mrb[0].mxu0
        %v1983 = vpop.f32.mrb[0].mxu0
        %1984 = vdwg.mxu0
        %1986 = vrot.lane.b32.xlu0 %v1980, 32
        %v1987 = vpop.permute.xlu0 %1986
        %1989 = vst.msk [vmem:[#allocation2] sm:$0xff] %vm999, %v1987
        %1990 = vrot.lane.b32.xlu0 %v1643, 80
        %v1991 = vpop.permute.xlu0 %1990
        %1992 = vrot.lane.b32.xlu0 %v1643, 16
        %v1993 = vpop.permute.xlu0 %1992
        %v1995 = vsel %vm653, %v1991, 0
        %v1998 = vsel %vm653, %v1993, 0
        %2000 = vmatprep.subr.bf16.mxu0 0
        %2001 = vmatpush1.bf16.xpose.msra.mxu0 %v1998
        %2002 = vmatprep.subr.bf16.mxu0 0
        %2003 = vmatpush1.bf16.xpose.msra.mxu0 0
        %2004 = vmatprep.subr.bf16.mxu0 0
        %2005 = vmatpush1.bf16.xpose.msra.mxu0 0
        %2006 = vmatprep.subr.bf16.mxu0 0
        %2007 = vmatpush1.bf16.xpose.msra.mxu0 0
        %2008 = vmatprep.subr.bf16.mxu0 0
        %2009 = vmatpush1.bf16.xpose.msra.mxu0 0
        %2010 = vmatprep.subr.bf16.mxu0 0
        %2011 = vmatpush1.bf16.xpose.msra.mxu0 0
        %2012 = vmatprep.subr.bf16.mxu0 0
        %2013 = vmatpush1.bf16.xpose.msra.mxu0 0
        %2014 = vmatprep.subr.bf16.mxu0 0
        %2015 = vmatpush1.bf16.xpose.msra.mxu0 0
        %2016 = vmatprep.subr.bf16.mxu0 0
        %2017 = vmatpush1.bf16.xpose.msra.mxu0 0
        %2018 = vmatprep.subr.bf16.mxu0 0
        %2019 = vmatpush1.bf16.xpose.msra.mxu0 0
        %2020 = vmatprep.subr.bf16.mxu0 0
        %2021 = vmatpush1.bf16.xpose.msra.mxu0 0
        %2022 = vmatprep.subr.bf16.mxu0 0
        %2023 = vmatpush1.bf16.xpose.msra.mxu0 0
        %2024 = vmatprep.subr.bf16.mxu0 0
        %2025 = vmatpush1.bf16.xpose.msra.mxu0 0
        %2026 = vmatprep.subr.bf16.mxu0 0
        %2027 = vmatpush1.bf16.xpose.msra.mxu0 0
        %2028 = vmatprep.subr.bf16.mxu0 0
        %2029 = vmatpush1.bf16.xpose.msra.mxu0 0
        %2030 = vmatprep.subr.bf16.mxu0 0
        %2031 = vmatpush1.bf16.xpose.msra.mxu0 0
        %2032 = vmatprep.mubr.bf16.mxu0 0
        %2033 = vmatmul.mubr.bf16.gmra.mrb[0].mxu0 %v1995
        %v2034 = vpop.f32.mrb[0].mxu0
        %v2035 = vadd.f32 0.0, %v2034
        %v2036 = vpop.f32.mrb[0].mxu0
        %v2037 = vpop.f32.mrb[0].mxu0
        %v2038 = vpop.f32.mrb[0].mxu0
        %2039 = vdwg.mxu0
        %v2040 = vmul.f32 %v2035, 0.125
        %v2041 = vadd.f32 %v2040, %v524
        %v2042 = vsel %vm702, %v2041, -inf
        %2043 = vmax.xlane.f32.xlu0 %v2042
        %v2044 = vpop.xlane.xlu0 %2043
        %v2045 = vsub.f32 %v2041, %v2044
        %v2046 = vmul.f32 %v2045, 1.442695
        %v2047 = vpow.pop %v2046
        %v2048 = vsel %vm702, %v2047, 0.0
        %2049 = vadd.xlane.f32.xlu0 %v2048
        %v2050 = vpop.xlane.xlu0 %2049
        %v2051 = vrcp.pop %v2050
        %v2052 = vmul.f32 %v2047, %v2051
        %v2053 = vpack.c.bf16 %v2052, %v2052
        %2054 = vrot.lane.b32.xlu0 %v1707, 80
        %v2055 = vpop.permute.xlu0 %2054
        %v2057 = vsel %vm702, %v2053, 0
        %v2060 = vsel %vm719, %v2055, 0
        %2062 = vmatprep.subr.bf16.mxu0 0
        %2063 = vmatpush1.bf16.msra.mxu0 %v2060
        %2064 = vmatprep.subr.bf16.mxu0 0
        %2065 = vmatpush1.bf16.msra.mxu0 0
        %2066 = vmatprep.subr.bf16.mxu0 0
        %2067 = vmatpush1.bf16.msra.mxu0 0
        %2068 = vmatprep.subr.bf16.mxu0 0
        %2069 = vmatpush1.bf16.msra.mxu0 0
        %2070 = vmatprep.subr.bf16.mxu0 0
        %2071 = vmatpush1.bf16.msra.mxu0 0
        %2072 = vmatprep.subr.bf16.mxu0 0
        %2073 = vmatpush1.bf16.msra.mxu0 0
        %2074 = vmatprep.subr.bf16.mxu0 0
        %2075 = vmatpush1.bf16.msra.mxu0 0
        %2076 = vmatprep.subr.bf16.mxu0 0
        %2077 = vmatpush1.bf16.msra.mxu0 0
        %2078 = vmatprep.subr.bf16.mxu0 0
        %2079 = vmatpush1.bf16.msra.mxu0 0
        %2080 = vmatprep.subr.bf16.mxu0 0
        %2081 = vmatpush1.bf16.msra.mxu0 0
        %2082 = vmatprep.subr.bf16.mxu0 0
        %2083 = vmatpush1.bf16.msra.mxu0 0
        %2084 = vmatprep.subr.bf16.mxu0 0
        %2085 = vmatpush1.bf16.msra.mxu0 0
        %2086 = vmatprep.subr.bf16.mxu0 0
        %2087 = vmatpush1.bf16.msra.mxu0 0
        %2088 = vmatprep.subr.bf16.mxu0 0
        %2089 = vmatpush1.bf16.msra.mxu0 0
        %2090 = vmatprep.subr.bf16.mxu0 0
        %2091 = vmatpush1.bf16.msra.mxu0 0
        %2092 = vmatprep.subr.bf16.mxu0 0
        %2093 = vmatpush1.bf16.msra.mxu0 0
        %2094 = vmatprep.mubr.bf16.mxu0 0
        %2095 = vmatmul.mubr.bf16.gmra.mrb[0].mxu0 %v2057
        %v2096 = vpop.f32.mrb[0].mxu0
        %v2097 = vadd.f32 0.0, %v2096
        %v2098 = vpop.f32.mrb[0].mxu0
        %v2099 = vpop.f32.mrb[0].mxu0
        %v2100 = vpop.f32.mrb[0].mxu0
        %2101 = vdwg.mxu0
        %2103 = vrot.lane.b32.xlu0 %v2097, 48
        %v2104 = vpop.permute.xlu0 %2103
        %2106 = vst.msk [vmem:[#allocation2] sm:$0xff] %vm1117, %v2104
        %v2107 = vld [vmem:[#allocation2] sm:$0xff]
        %v2108 = vpack.c.bf16 %v2107, %v2107
        %s2109 = scalar_lea.vmem %s4, 32
        %v2110 = vld [vmem:[%s2109] sm:$0xf]
        %v2111 = vld [vmem:[%s2109 + $0x4] sm:$0xf]
        %v2112 = vld [vmem:[%s2109 + $0x8] sm:$0xf]
        %v2113 = vld [vmem:[%s2109 + $0xc] sm:$0xf]
        %v2114 = vld [vmem:[%s2109 + $0x10] sm:$0xf]
        %v2115 = vld [vmem:[%s2109 + $0x14] sm:$0xf]
        %v2116 = vld [vmem:[%s2109 + $0x18] sm:$0xf]
        %v2117 = vld [vmem:[%s2109 + $0x1c] sm:$0xf]
        %s2118 = scalar_lea.vmem %s5, 1
        %v2119 = vld [vmem:[%s2118] sm:$0x1]
        %v2121 = vlaneseq
        %v2122 = vshrl.u32 %v2121, 7
        %v2123 = vsub.s32 0, %v2122
        %v2124 = vrot.slane %v2119, %v2123
        %v2134 = vunpack.c.l.b16 %v2110
        %v2135 = vunpack.c.l.b16 %v2111
        %v2136 = vunpack.c.l.b16 %v2112
        %v2137 = vunpack.c.l.b16 %v2113
        %v2138 = vunpack.c.l.b16 %v2114
        %v2139 = vunpack.c.l.b16 %v2115
        %v2140 = vunpack.c.l.b16 %v2116
        %v2141 = vunpack.c.l.b16 %v2117
        %v2142 = vpack.c.b16 %v2135, %v2134
        %v2143 = vpack.c.b16 %v2137, %v2136
        %v2144 = vpack.c.b16 %v2139, %v2138
        %v2145 = vpack.c.b16 %v2141, %v2140
        %v2151 = vsel %vm527, %v2108, 0
        %2153 = vmatprep.subr.bf16.mxu0 0
        %2154 = vmatpush1.bf16.msra.mxu0 %v2142
        %2155 = vmatprep.subr.bf16.mxu0 0
        %2156 = vmatpush1.bf16.msra.mxu0 %v2143
        %2157 = vmatprep.subr.bf16.mxu0 0
        %2158 = vmatpush1.bf16.msra.mxu0 %v2144
        %2159 = vmatprep.subr.bf16.mxu0 0
        %2160 = vmatpush1.bf16.msra.mxu0 %v2145
        %2161 = vmatprep.subr.bf16.mxu0 0
        %2162 = vmatpush1.bf16.msra.mxu0 0
        %2163 = vmatprep.subr.bf16.mxu0 0
        %2164 = vmatpush1.bf16.msra.mxu0 0
        %2165 = vmatprep.subr.bf16.mxu0 0
        %2166 = vmatpush1.bf16.msra.mxu0 0
        %2167 = vmatprep.subr.bf16.mxu0 0
        %2168 = vmatpush1.bf16.msra.mxu0 0
        %2169 = vmatprep.subr.bf16.mxu0 0
        %2170 = vmatpush1.bf16.msra.mxu0 0
        %2171 = vmatprep.subr.bf16.mxu0 0
        %2172 = vmatpush1.bf16.msra.mxu0 0
        %2173 = vmatprep.subr.bf16.mxu0 0
        %2174 = vmatpush1.bf16.msra.mxu0 0
        %2175 = vmatprep.subr.bf16.mxu0 0
        %2176 = vmatpush1.bf16.msra.mxu0 0
        %2177 = vmatprep.subr.bf16.mxu0 0
        %2178 = vmatpush1.bf16.msra.mxu0 0
        %2179 = vmatprep.subr.bf16.mxu0 0
        %2180 = vmatpush1.bf16.msra.mxu0 0
        %2181 = vmatprep.subr.bf16.mxu0 0
        %2182 = vmatpush1.bf16.msra.mxu0 0
        %2183 = vmatprep.subr.bf16.mxu0 0
        %2184 = vmatpush1.bf16.msra.mxu0 0
        %2185 = vmatprep.mubr.bf16.mxu0 0
        %2186 = vmatmul.mubr.bf16.gmra.mrb[0].mxu0 %v2151
        %v2187 = vpop.f32.mrb[0].mxu0
        %v2188 = vadd.f32 %v2124, %v2187
        %v2189 = vpop.f32.mrb[0].mxu0
        %v2190 = vpop.f32.mrb[0].mxu0
        %v2191 = vpop.f32.mrb[0].mxu0
        %2192 = vdwg.mxu0
        %v2193 = vadd.f32 %v1517, %v2188
        %s2194 = scalar_lea.vmem %s6, 1
        %v2195 = vld [vmem:[%s2194] sm:$0x1]
        %s2196 = scalar_lea.vmem %s7, 1
        %v2197 = vld [vmem:[%s2196] sm:$0x1]
        %v2198 = vsel %vm527, %v2193, 0.0
        %2199 = vadd.xlane.f32.xlu0 %v2198
        %v2200 = vpop.xlane.xlu0 %2199
        %v2201 = vmul.f32 %v2200, %v531
        %v2202 = vsub.f32 %v2193, %v2201
        %v2203 = vmul.f32 %v2202, %v2202
        %v2204 = vsel %vm527, %v2203, 0.0
        %2205 = vadd.xlane.f32.xlu0 %v2204
        %v2206 = vpop.xlane.xlu0 %2205
        %v2207 = vmul.f32 %v2206, %v531
        %v2208 = vadd.f32 %v2207, 1e-05
        %v2209 = vrsqrt.pop %v2208
        %v2210 = vmul.f32 %v2202, %v2209
        %v2212 = vlaneseq
        %v2213 = vshrl.u32 %v2212, 7
        %v2214 = vsub.s32 0, %v2213
        %v2215 = vrot.slane %v2195, %v2214
        %v2217 = vmul.f32 %v2210, %v2215
        %v2219 = vlaneseq
        %v2220 = vshrl.u32 %v2219, 7
        %v2221 = vsub.s32 0, %v2220
        %v2222 = vrot.slane %v2197, %v2221
        %v2224 = vadd.f32 %v2217, %v2222
        %v2225 = vpack.c.bf16 %v2224, %v2224
        %s2226 = scalar_lea.vmem %s8, 64
        %v2227 = vld [vmem:[%s2226] sm:$0xff]
        %v2228 = vld [vmem:[%s2226 + $0x8] sm:$0xff]
        %v2229 = vld [vmem:[%s2226 + $0x10] sm:$0xff]
        %v2230 = vld [vmem:[%s2226 + $0x18] sm:$0xff]
        %v2231 = vld [vmem:[%s2226 + $0x20] sm:$0xff]
        %v2232 = vld [vmem:[%s2226 + $0x28] sm:$0xff]
        %v2233 = vld [vmem:[%s2226 + $0x30] sm:$0xff]
        %v2234 = vld [vmem:[%s2226 + $0x38] sm:$0xff]
        %s2235 = scalar_lea.vmem %s9, 2
        %v2236 = vld [vmem:[%s2235] sm:$0x3]
        %v2238 = vlaneseq
        %v2239 = vshrl.u32 %v2238, 7
        %v2240 = vsub.s32 0, %v2239
        %v2241 = vrot.slane %v2236, %v2240
        %v2242 = vlaneseq
        %v2243 = vshrl.u32 %v2242, 7
        %v2244 = vsub.s32 1, %v2243
        %v2245 = vrot.slane %v2236, %v2244
        %v2256 = vunpack.c.l.b16 %v2227
        %v2257 = vunpack.c.h.b16 %v2227
        %v2258 = vunpack.c.l.b16 %v2228
        %v2259 = vunpack.c.h.b16 %v2228
        %v2260 = vunpack.c.l.b16 %v2229
        %v2261 = vunpack.c.h.b16 %v2229
        %v2262 = vunpack.c.l.b16 %v2230
        %v2263 = vunpack.c.h.b16 %v2230
        %v2264 = vunpack.c.l.b16 %v2231
        %v2265 = vunpack.c.h.b16 %v2231
        %v2266 = vunpack.c.l.b16 %v2232
        %v2267 = vunpack.c.h.b16 %v2232
        %v2268 = vunpack.c.l.b16 %v2233
        %v2269 = vunpack.c.h.b16 %v2233
        %v2270 = vunpack.c.l.b16 %v2234
        %v2271 = vunpack.c.h.b16 %v2234
        %v2272 = vpack.c.b16 %v2258, %v2256
        %v2273 = vpack.c.b16 %v2259, %v2257
        %v2274 = vpack.c.b16 %v2262, %v2260
        %v2275 = vpack.c.b16 %v2263, %v2261
        %v2276 = vpack.c.b16 %v2266, %v2264
        %v2277 = vpack.c.b16 %v2267, %v2265
        %v2278 = vpack.c.b16 %v2270, %v2268
        %v2279 = vpack.c.b16 %v2271, %v2269
        %v2289 = vsel %vm527, %v2225, 0
        %2291 = vmatprep.subr.bf16.mxu0 %v2273
        %2292 = vmatpush1.bf16.msra.mxu0 %v2272
        %2293 = vmatprep.subr.bf16.mxu0 %v2275
        %2294 = vmatpush1.bf16.msra.mxu0 %v2274
        %2295 = vmatprep.subr.bf16.mxu0 %v2277
        %2296 = vmatpush1.bf16.msra.mxu0 %v2276
        %2297 = vmatprep.subr.bf16.mxu0 %v2279
        %2298 = vmatpush1.bf16.msra.mxu0 %v2278
        %2299 = vmatprep.subr.bf16.mxu0 0
        %2300 = vmatpush1.bf16.msra.mxu0 0
        %2301 = vmatprep.subr.bf16.mxu0 0
        %2302 = vmatpush1.bf16.msra.mxu0 0
        %2303 = vmatprep.subr.bf16.mxu0 0
        %2304 = vmatpush1.bf16.msra.mxu0 0
        %2305 = vmatprep.subr.bf16.mxu0 0
        %2306 = vmatpush1.bf16.msra.mxu0 0
        %2307 = vmatprep.subr.bf16.mxu0 0
        %2308 = vmatpush1.bf16.msra.mxu0 0
        %2309 = vmatprep.subr.bf16.mxu0 0
        %2310 = vmatpush1.bf16.msra.mxu0 0
        %2311 = vmatprep.subr.bf16.mxu0 0
        %2312 = vmatpush1.bf16.msra.mxu0 0
        %2313 = vmatprep.subr.bf16.mxu0 0
        %2314 = vmatpush1.bf16.msra.mxu0 0
        %2315 = vmatprep.subr.bf16.mxu0 0
        %2316 = vmatpush1.bf16.msra.mxu0 0
        %2317 = vmatprep.subr.bf16.mxu0 0
        %2318 = vmatpush1.bf16.msra.mxu0 0
        %2319 = vmatprep.subr.bf16.mxu0 0
        %2320 = vmatpush1.bf16.msra.mxu0 0
        %2321 = vmatprep.subr.bf16.mxu0 0
        %2322 = vmatpush1.bf16.msra.mxu0 0
        %2323 = vmatprep.mubr.bf16.mxu0 0
        %2324 = vmatmul.mubr.bf16.gmra.mrb[0].mxu0 %v2289
        %v2325 = vpop.f32.mrb[0].mxu0
        %v2326 = vadd.f32 %v2241, %v2325
        %v2327 = vpop.f32.mrb[0].mxu0
        %v2328 = vadd.f32 %v2245, %v2327
        %v2329 = vpop.f32.mrb[0].mxu0
        %v2330 = vpop.f32.mrb[0].mxu0
        %2331 = vdwg.mxu0
        %v2332 = vmax.f32 %v2326, 0.0
        %v2333 = vmax.f32 %v2328, 0.0
        %v2334 = vpack.c.bf16 %v2332, %v2332
        %v2335 = vpack.c.bf16 %v2333, %v2333
        %s2336 = scalar_lea.vmem %s10, 128
        %v2337 = vld [vmem:[%s2336] sm:$0xf]
        %v2338 = vld [vmem:[%s2336 + $0x4] sm:$0xf]
        %v2339 = vld [vmem:[%s2336 + $0x8] sm:$0xf]
        %v2340 = vld [vmem:[%s2336 + $0xc] sm:$0xf]
        %v2341 = vld [vmem:[%s2336 + $0x10] sm:$0xf]
        %v2342 = vld [vmem:[%s2336 + $0x14] sm:$0xf]
        %v2343 = vld [vmem:[%s2336 + $0x18] sm:$0xf]
        %v2344 = vld [vmem:[%s2336 + $0x1c] sm:$0xf]
        %v2345 = vld [vmem:[%s2336 + $0x20] sm:$0xf]
        %v2346 = vld [vmem:[%s2336 + $0x24] sm:$0xf]
        %v2347 = vld [vmem:[%s2336 + $0x28] sm:$0xf]
        %v2348 = vld [vmem:[%s2336 + $0x2c] sm:$0xf]
        %v2349 = vld [vmem:[%s2336 + $0x30] sm:$0xf]
        %v2350 = vld [vmem:[%s2336 + $0x34] sm:$0xf]
        %v2351 = vld [vmem:[%s2336 + $0x38] sm:$0xf]
        %v2352 = vld [vmem:[%s2336 + $0x3c] sm:$0xf]
        %v2353 = vld [vmem:[%s2336 + $0x40] sm:$0xf]
        %v2354 = vld [vmem:[%s2336 + $0x44] sm:$0xf]
        %v2355 = vld [vmem:[%s2336 + $0x48] sm:$0xf]
        %v2356 = vld [vmem:[%s2336 + $0x4c] sm:$0xf]
        %v2357 = vld [vmem:[%s2336 + $0x50] sm:$0xf]
        %v2358 = vld [vmem:[%s2336 + $0x54] sm:$0xf]
        %v2359 = vld [vmem:[%s2336 + $0x58] sm:$0xf]
        %v2360 = vld [vmem:[%s2336 + $0x5c] sm:$0xf]
        %v2361 = vld [vmem:[%s2336 + $0x60] sm:$0xf]
        %v2362 = vld [vmem:[%s2336 + $0x64] sm:$0xf]
        %v2363 = vld [vmem:[%s2336 + $0x68] sm:$0xf]
        %v2364 = vld [vmem:[%s2336 + $0x6c] sm:$0xf]
        %v2365 = vld [vmem:[%s2336 + $0x70] sm:$0xf]
        %v2366 = vld [vmem:[%s2336 + $0x74] sm:$0xf]
        %v2367 = vld [vmem:[%s2336 + $0x78] sm:$0xf]
        %v2368 = vld [vmem:[%s2336 + $0x7c] sm:$0xf]
        %s2369 = scalar_lea.vmem %s11, 1
        %v2370 = vld [vmem:[%s2369] sm:$0x1]
        %v2372 = vlaneseq
        %v2373 = vshrl.u32 %v2372, 7
        %v2374 = vsub.s32 0, %v2373
        %v2375 = vrot.slane %v2370, %v2374
        %v2409 = vunpack.c.l.b16 %v2337
        %v2410 = vunpack.c.l.b16 %v2338
        %v2411 = vunpack.c.l.b16 %v2339
        %v2412 = vunpack.c.l.b16 %v2340
        %v2413 = vunpack.c.l.b16 %v2341
        %v2414 = vunpack.c.l.b16 %v2342
        %v2415 = vunpack.c.l.b16 %v2343
        %v2416 = vunpack.c.l.b16 %v2344
        %v2417 = vunpack.c.l.b16 %v2345
        %v2418 = vunpack.c.l.b16 %v2346
        %v2419 = vunpack.c.l.b16 %v2347
        %v2420 = vunpack.c.l.b16 %v2348
        %v2421 = vunpack.c.l.b16 %v2349
        %v2422 = vunpack.c.l.b16 %v2350
        %v2423 = vunpack.c.l.b16 %v2351
        %v2424 = vunpack.c.l.b16 %v2352
        %v2425 = vunpack.c.l.b16 %v2353
        %v2426 = vunpack.c.l.b16 %v2354
        %v2427 = vunpack.c.l.b16 %v2355
        %v2428 = vunpack.c.l.b16 %v2356
        %v2429 = vunpack.c.l.b16 %v2357
        %v2430 = vunpack.c.l.b16 %v2358
        %v2431 = vunpack.c.l.b16 %v2359
        %v2432 = vunpack.c.l.b16 %v2360
        %v2433 = vunpack.c.l.b16 %v2361
        %v2434 = vunpack.c.l.b16 %v2362
        %v2435 = vunpack.c.l.b16 %v2363
        %v2436 = vunpack.c.l.b16 %v2364
        %v2437 = vunpack.c.l.b16 %v2365
        %v2438 = vunpack.c.l.b16 %v2366
        %v2439 = vunpack.c.l.b16 %v2367
        %v2440 = vunpack.c.l.b16 %v2368
        %v2441 = vpack.c.b16 %v2410, %v2409
        %v2442 = vpack.c.b16 %v2412, %v2411
        %v2443 = vpack.c.b16 %v2414, %v2413
        %v2444 = vpack.c.b16 %v2416, %v2415
        %v2445 = vpack.c.b16 %v2418, %v2417
        %v2446 = vpack.c.b16 %v2420, %v2419
        %v2447 = vpack.c.b16 %v2422, %v2421
        %v2448 = vpack.c.b16 %v2424, %v2423
        %v2449 = vpack.c.b16 %v2426, %v2425
        %v2450 = vpack.c.b16 %v2428, %v2427
        %v2451 = vpack.c.b16 %v2430, %v2429
        %v2452 = vpack.c.b16 %v2432, %v2431
        %v2453 = vpack.c.b16 %v2434, %v2433
        %v2454 = vpack.c.b16 %v2436, %v2435
        %v2455 = vpack.c.b16 %v2438, %v2437
        %v2456 = vpack.c.b16 %v2440, %v2439
        %2473 = vmatprep.subr.bf16.mxu0 0
        %2474 = vmatpush1.bf16.msra.mxu0 %v2441
        %2475 = vmatprep.subr.bf16.mxu0 0
        %2476 = vmatpush1.bf16.msra.mxu0 %v2442
        %2477 = vmatprep.subr.bf16.mxu0 0
        %2478 = vmatpush1.bf16.msra.mxu0 %v2443
        %2479 = vmatprep.subr.bf16.mxu0 0
        %2480 = vmatpush1.bf16.msra.mxu0 %v2444
        %2481 = vmatprep.subr.bf16.mxu0 0
        %2482 = vmatpush1.bf16.msra.mxu0 %v2445
        %2483 = vmatprep.subr.bf16.mxu0 0
        %2484 = vmatpush1.bf16.msra.mxu0 %v2446
        %2485 = vmatprep.subr.bf16.mxu0 0
        %2486 = vmatpush1.bf16.msra.mxu0 %v2447
        %2487 = vmatprep.subr.bf16.mxu0 0
        %2488 = vmatpush1.bf16.msra.mxu0 %v2448
        %2489 = vmatprep.subr.bf16.mxu0 0
        %2490 = vmatpush1.bf16.msra.mxu0 %v2449
        %2491 = vmatprep.subr.bf16.mxu0 0
        %2492 = vmatpush1.bf16.msra.mxu0 %v2450
        %2493 = vmatprep.subr.bf16.mxu0 0
        %2494 = vmatpush1.bf16.msra.mxu0 %v2451
        %2495 = vmatprep.subr.bf16.mxu0 0
        %2496 = vmatpush1.bf16.msra.mxu0 %v2452
        %2497 = vmatprep.subr.bf16.mxu0 0
        %2498 = vmatpush1.bf16.msra.mxu0 %v2453
        %2499 = vmatprep.subr.bf16.mxu0 0
        %2500 = vmatpush1.bf16.msra.mxu0 %v2454
        %2501 = vmatprep.subr.bf16.mxu0 0
        %2502 = vmatpush1.bf16.msra.mxu0 %v2455
        %2503 = vmatprep.subr.bf16.mxu0 0
        %2504 = vmatpush1.bf16.msra.mxu0 %v2456
        %2505 = vmatprep.mubr.bf16.mxu0 %v2335
        %2506 = vmatmul.mubr.bf16.gmra.mrb[0].mxu0 %v2334
        %v2507 = vpop.f32.mrb[0].mxu0
        %v2508 = vadd.f32 %v2375, %v2507
        %v2509 = vpop.f32.mrb[0].mxu0
        %v2510 = vpop.f32.mrb[0].mxu0
        %v2511 = vpop.f32.mrb[0].mxu0
        %2512 = vdwg.mxu0
        %v2513 = vadd.f32 %v2193, %v2508
        %s2514 = scalar_lea.vmem %s1, 2
        %v2515 = vld [vmem:[%s2514] sm:$0x1]
        %s2516 = scalar_lea.vmem %s2, 2
        %v2517 = vld [vmem:[%s2516] sm:$0x1]
        %v2518 = vsel %vm527, %v2513, 0.0
        %2519 = vadd.xlane.f32.xlu0 %v2518
        %v2520 = vpop.xlane.xlu0 %2519
        %v2521 = vmul.f32 %v2520, %v531
        %v2522 = vsub.f32 %v2513, %v2521
        %v2523 = vmul.f32 %v2522, %v2522
        %v2524 = vsel %vm527, %v2523, 0.0
        %2525 = vadd.xlane.f32.xlu0 %v2524
        %v2526 = vpop.xlane.xlu0 %2525
        %v2527 = vmul.f32 %v2526, %v531
        %v2528 = vadd.f32 %v2527, 1e-05
        %v2529 = vrsqrt.pop %v2528
        %v2530 = vmul.f32 %v2522, %v2529
        %v2532 = vlaneseq
        %v2533 = vshrl.u32 %v2532, 7
        %v2534 = vsub.s32 0, %v2533
        %v2535 = vrot.slane %v2515, %v2534
        %v2537 = vmul.f32 %v2530, %v2535
        %v2539 = vlaneseq
        %v2540 = vshrl.u32 %v2539, 7
        %v2541 = vsub.s32 0, %v2540
        %v2542 = vrot.slane %v2517, %v2541
        %v2544 = vadd.f32 %v2537, %v2542
        %v2545 = vpack.c.bf16 %v2544, %v2544
        %s2546 = scalar_lea.vmem %s3, 128
        %v2547 = vld [vmem:[%s2546] sm:$0xff]
        %v2548 = vld [vmem:[%s2546 + $0x8] sm:$0xff]
        %v2549 = vld [vmem:[%s2546 + $0x10] sm:$0xff]
        %v2550 = vld [vmem:[%s2546 + $0x18] sm:$0xff]
        %v2551 = vld [vmem:[%s2546 + $0x20] sm:$0xff]
        %v2552 = vld [vmem:[%s2546 + $0x28] sm:$0xff]
        %v2553 = vld [vmem:[%s2546 + $0x30] sm:$0xff]
        %v2554 = vld [vmem:[%s2546 + $0x38] sm:$0xff]
        %v2563 = vunpack.c.l.b16 %v2547
        %v2564 = vunpack.c.h.b16 %v2547
        %v2565 = vunpack.c.l.b16 %v2548
        %v2566 = vunpack.c.h.b16 %v2548
        %v2567 = vunpack.c.l.b16 %v2549
        %v2568 = vunpack.c.h.b16 %v2549
        %v2569 = vunpack.c.l.b16 %v2550
        %v2570 = vunpack.c.h.b16 %v2550
        %v2571 = vunpack.c.l.b16 %v2551
        %v2572 = vunpack.c.h.b16 %v2551
        %v2573 = vunpack.c.l.b16 %v2552
        %v2574 = vunpack.c.h.b16 %v2552
        %v2575 = vunpack.c.l.b16 %v2553
        %v2576 = vunpack.c.h.b16 %v2553
        %v2577 = vunpack.c.l.b16 %v2554
        %v2578 = vunpack.c.h.b16 %v2554
        %v2579 = vpack.c.b16 %v2565, %v2563
        %v2580 = vpack.c.b16 %v2566, %v2564
        %v2581 = vpack.c.b16 %v2569, %v2567
        %v2582 = vpack.c.b16 %v2570, %v2568
        %v2583 = vpack.c.b16 %v2573, %v2571
        %v2584 = vpack.c.b16 %v2574, %v2572
        %v2585 = vpack.c.b16 %v2577, %v2575
        %v2586 = vpack.c.b16 %v2578, %v2576
        %v2596 = vsel %vm527, %v2545, 0
        %2598 = vmatprep.subr.bf16.mxu0 %v2580
        %2599 = vmatpush1.bf16.msra.mxu0 %v2579
        %2600 = vmatprep.subr.bf16.mxu0 %v2582
        %2601 = vmatpush1.bf16.msra.mxu0 %v2581
        %2602 = vmatprep.subr.bf16.mxu0 %v2584
        %2603 = vmatpush1.bf16.msra.mxu0 %v2583
        %2604 = vmatprep.subr.bf16.mxu0 %v2586
        %2605 = vmatpush1.bf16.msra.mxu0 %v2585
        %2606 = vmatprep.subr.bf16.mxu0 0
        %2607 = vmatpush1.bf16.msra.mxu0 0
        %2608 = vmatprep.subr.bf16.mxu0 0
        %2609 = vmatpush1.bf16.msra.mxu0 0
        %2610 = vmatprep.subr.bf16.mxu0 0
        %2611 = vmatpush1.bf16.msra.mxu0 0
        %2612 = vmatprep.subr.bf16.mxu0 0
        %2613 = vmatpush1.bf16.msra.mxu0 0
        %2614 = vmatprep.subr.bf16.mxu0 0
        %2615 = vmatpush1.bf16.msra.mxu0 0
        %2616 = vmatprep.subr.bf16.mxu0 0
        %2617 = vmatpush1.bf16.msra.mxu0 0
        %2618 = vmatprep.subr.bf16.mxu0 0
        %2619 = vmatpush1.bf16.msra.mxu0 0
        %2620 = vmatprep.subr.bf16.mxu0 0
        %2621 = vmatpush1.bf16.msra.mxu0 0
        %2622 = vmatprep.subr.bf16.mxu0 0
        %2623 = vmatpush1.bf16.msra.mxu0 0
        %2624 = vmatprep.subr.bf16.mxu0 0
        %2625 = vmatpush1.bf16.msra.mxu0 0
        %2626 = vmatprep.subr.bf16.mxu0 0
        %2627 = vmatpush1.bf16.msra.mxu0 0
        %2628 = vmatprep.subr.bf16.mxu0 0
        %2629 = vmatpush1.bf16.msra.mxu0 0
        %2630 = vmatprep.mubr.bf16.mxu0 0
        %2631 = vmatmul.mubr.bf16.gmra.mrb[0].mxu0 %v2596
        %v2632 = vpop.f32.mrb[0].mxu0
        %v2633 = vadd.f32 0.0, %v2632
        %v2634 = vpop.f32.mrb[0].mxu0
        %v2635 = vadd.f32 0.0, %v2634
        %v2636 = vpop.f32.mrb[0].mxu0
        %v2637 = vpop.f32.mrb[0].mxu0
        %2638 = vdwg.mxu0
        %v2639 = vpack.c.bf16 %v2633, %v2633
        %2641 = vrot.lane.b32.xlu0 %v2639, 64
        %v2642 = vpop.permute.xlu0 %2641
        %v2644 = vsel %vm653, %v2639, 0
        %v2647 = vsel %vm653, %v2642, 0
        %2649 = vmatprep.subr.bf16.mxu0 0
        %2650 = vmatpush1.bf16.xpose.msra.mxu0 %v2647
        %2651 = vmatprep.subr.bf16.mxu0 0
        %2652 = vmatpush1.bf16.xpose.msra.mxu0 0
        %2653 = vmatprep.subr.bf16.mxu0 0
        %2654 = vmatpush1.bf16.xpose.msra.mxu0 0
        %2655 = vmatprep.subr.bf16.mxu0 0
        %2656 = vmatpush1.bf16.xpose.msra.mxu0 0
        %2657 = vmatprep.subr.bf16.mxu0 0
        %2658 = vmatpush1.bf16.xpose.msra.mxu0 0
        %2659 = vmatprep.subr.bf16.mxu0 0
        %2660 = vmatpush1.bf16.xpose.msra.mxu0 0
        %2661 = vmatprep.subr.bf16.mxu0 0
        %2662 = vmatpush1.bf16.xpose.msra.mxu0 0
        %2663 = vmatprep.subr.bf16.mxu0 0
        %2664 = vmatpush1.bf16.xpose.msra.mxu0 0
        %2665 = vmatprep.subr.bf16.mxu0 0
        %2666 = vmatpush1.bf16.xpose.msra.mxu0 0
        %2667 = vmatprep.subr.bf16.mxu0 0
        %2668 = vmatpush1.bf16.xpose.msra.mxu0 0
        %2669 = vmatprep.subr.bf16.mxu0 0
        %2670 = vmatpush1.bf16.xpose.msra.mxu0 0
        %2671 = vmatprep.subr.bf16.mxu0 0
        %2672 = vmatpush1.bf16.xpose.msra.mxu0 0
        %2673 = vmatprep.subr.bf16.mxu0 0
        %2674 = vmatpush1.bf16.xpose.msra.mxu0 0
        %2675 = vmatprep.subr.bf16.mxu0 0
        %2676 = vmatpush1.bf16.xpose.msra.mxu0 0
        %2677 = vmatprep.subr.bf16.mxu0 0
        %2678 = vmatpush1.bf16.xpose.msra.mxu0 0
        %2679 = vmatprep.subr.bf16.mxu0 0
        %2680 = vmatpush1.bf16.xpose.msra.mxu0 0
        %2681 = vmatprep.mubr.bf16.mxu0 0
        %2682 = vmatmul.mubr.bf16.gmra.mrb[0].mxu0 %v2644
        %v2683 = vpop.f32.mrb[0].mxu0
        %v2684 = vadd.f32 0.0, %v2683
        %v2685 = vpop.f32.mrb[0].mxu0
        %v2686 = vpop.f32.mrb[0].mxu0
        %v2687 = vpop.f32.mrb[0].mxu0
        %2688 = vdwg.mxu0
        %v2689 = vmul.f32 %v2684, 0.125
        %v2690 = vadd.f32 %v2689, %v524
        %v2691 = vsel %vm702, %v2690, -inf
        %2692 = vmax.xlane.f32.xlu0 %v2691
        %v2693 = vpop.xlane.xlu0 %2692
        %v2694 = vsub.f32 %v2690, %v2693
        %v2695 = vmul.f32 %v2694, 1.442695
        %v2696 = vpow.pop %v2695
        %v2697 = vsel %vm702, %v2696, 0.0
        %2698 = vadd.xlane.f32.xlu0 %v2697
        %v2699 = vpop.xlane.xlu0 %2698
        %v2700 = vrcp.pop %v2699
        %v2701 = vmul.f32 %v2696, %v2700
        %v2702 = vpack.c.bf16 %v2701, %v2701
        %v2703 = vpack.c.bf16 %v2635, %v2635
        %v2705 = vsel %vm702, %v2702, 0
        %v2708 = vsel %vm719, %v2703, 0
        %2710 = vmatprep.subr.bf16.mxu0 0
        %2711 = vmatpush1.bf16.msra.mxu0 %v2708
        %2712 = vmatprep.subr.bf16.mxu0 0
        %2713 = vmatpush1.bf16.msra.mxu0 0
        %2714 = vmatprep.subr.bf16.mxu0 0
        %2715 = vmatpush1.bf16.msra.mxu0 0
        %2716 = vmatprep.subr.bf16.mxu0 0
        %2717 = vmatpush1.bf16.msra.mxu0 0
        %2718 = vmatprep.subr.bf16.mxu0 0
        %2719 = vmatpush1.bf16.msra.mxu0 0
        %2720 = vmatprep.subr.bf16.mxu0 0
        %2721 = vmatpush1.bf16.msra.mxu0 0
        %2722 = vmatprep.subr.bf16.mxu0 0
        %2723 = vmatpush1.bf16.msra.mxu0 0
        %2724 = vmatprep.subr.bf16.mxu0 0
        %2725 = vmatpush1.bf16.msra.mxu0 0
        %2726 = vmatprep.subr.bf16.mxu0 0
        %2727 = vmatpush1.bf16.msra.mxu0 0
        %2728 = vmatprep.subr.bf16.mxu0 0
        %2729 = vmatpush1.bf16.msra.mxu0 0
        %2730 = vmatprep.subr.bf16.mxu0 0
        %2731 = vmatpush1.bf16.msra.mxu0 0
        %2732 = vmatprep.subr.bf16.mxu0 0
        %2733 = vmatpush1.bf16.msra.mxu0 0
        %2734 = vmatprep.subr.bf16.mxu0 0
        %2735 = vmatpush1.bf16.msra.mxu0 0
        %2736 = vmatprep.subr.bf16.mxu0 0
        %2737 = vmatpush1.bf16.msra.mxu0 0
        %2738 = vmatprep.subr.bf16.mxu0 0
        %2739 = vmatpush1.bf16.msra.mxu0 0
        %2740 = vmatprep.subr.bf16.mxu0 0
        %2741 = vmatpush1.bf16.msra.mxu0 0
        %2742 = vmatprep.mubr.bf16.mxu0 0
        %2743 = vmatmul.mubr.bf16.gmra.mrb[0].mxu0 %v2705
        %v2744 = vpop.f32.mrb[0].mxu0
        %v2745 = vadd.f32 0.0, %v2744
        %v2746 = vpop.f32.mrb[0].mxu0
        %v2747 = vpop.f32.mrb[0].mxu0
        %v2748 = vpop.f32.mrb[0].mxu0
        %2749 = vdwg.mxu0
        %2750 = vst.msk [vmem:[#allocation2] sm:$0xff] %vm653, %v2745
        %2751 = vrot.lane.b32.xlu0 %v2639, 112
        %v2752 = vpop.permute.xlu0 %2751
        %2753 = vrot.lane.b32.xlu0 %v2639, 48
        %v2754 = vpop.permute.xlu0 %2753
        %v2756 = vsel %vm653, %v2752, 0
        %v2759 = vsel %vm653, %v2754, 0
        %2761 = vmatprep.subr.bf16.mxu0 0
        %2762 = vmatpush1.bf16.xpose.msra.mxu0 %v2759
        %2763 = vmatprep.subr.bf16.mxu0 0
        %2764 = vmatpush1.bf16.xpose.msra.mxu0 0
        %2765 = vmatprep.subr.bf16.mxu0 0
        %2766 = vmatpush1.bf16.xpose.msra.mxu0 0
        %2767 = vmatprep.subr.bf16.mxu0 0
        %2768 = vmatpush1.bf16.xpose.msra.mxu0 0
        %2769 = vmatprep.subr.bf16.mxu0 0
        %2770 = vmatpush1.bf16.xpose.msra.mxu0 0
        %2771 = vmatprep.subr.bf16.mxu0 0
        %2772 = vmatpush1.bf16.xpose.msra.mxu0 0
        %2773 = vmatprep.subr.bf16.mxu0 0
        %2774 = vmatpush1.bf16.xpose.msra.mxu0 0
        %2775 = vmatprep.subr.bf16.mxu0 0
        %2776 = vmatpush1.bf16.xpose.msra.mxu0 0
        %2777 = vmatprep.subr.bf16.mxu0 0
        %2778 = vmatpush1.bf16.xpose.msra.mxu0 0
        %2779 = vmatprep.subr.bf16.mxu0 0
        %2780 = vmatpush1.bf16.xpose.msra.mxu0 0
        %2781 = vmatprep.subr.bf16.mxu0 0
        %2782 = vmatpush1.bf16.xpose.msra.mxu0 0
        %2783 = vmatprep.subr.bf16.mxu0 0
        %2784 = vmatpush1.bf16.xpose.msra.mxu0 0
        %2785 = vmatprep.subr.bf16.mxu0 0
        %2786 = vmatpush1.bf16.xpose.msra.mxu0 0
        %2787 = vmatprep.subr.bf16.mxu0 0
        %2788 = vmatpush1.bf16.xpose.msra.mxu0 0
        %2789 = vmatprep.subr.bf16.mxu0 0
        %2790 = vmatpush1.bf16.xpose.msra.mxu0 0
        %2791 = vmatprep.subr.bf16.mxu0 0
        %2792 = vmatpush1.bf16.xpose.msra.mxu0 0
        %2793 = vmatprep.mubr.bf16.mxu0 0
        %2794 = vmatmul.mubr.bf16.gmra.mrb[0].mxu0 %v2756
        %v2795 = vpop.f32.mrb[0].mxu0
        %v2796 = vadd.f32 0.0, %v2795
        %v2797 = vpop.f32.mrb[0].mxu0
        %v2798 = vpop.f32.mrb[0].mxu0
        %v2799 = vpop.f32.mrb[0].mxu0
        %2800 = vdwg.mxu0
        %v2801 = vmul.f32 %v2796, 0.125
        %v2802 = vadd.f32 %v2801, %v524
        %v2803 = vsel %vm702, %v2802, -inf
        %2804 = vmax.xlane.f32.xlu0 %v2803
        %v2805 = vpop.xlane.xlu0 %2804
        %v2806 = vsub.f32 %v2802, %v2805
        %v2807 = vmul.f32 %v2806, 1.442695
        %v2808 = vpow.pop %v2807
        %v2809 = vsel %vm702, %v2808, 0.0
        %2810 = vadd.xlane.f32.xlu0 %v2809
        %v2811 = vpop.xlane.xlu0 %2810
        %v2812 = vrcp.pop %v2811
        %v2813 = vmul.f32 %v2808, %v2812
        %v2814 = vpack.c.bf16 %v2813, %v2813
        %2816 = vrot.lane.b32.xlu0 %v2703, 112
        %v2817 = vpop.permute.xlu0 %2816
        %v2819 = vsel %vm702, %v2814, 0
        %v2822 = vsel %vm719, %v2817, 0
        %2824 = vmatprep.subr.bf16.mxu0 0
        %2825 = vmatpush1.bf16.msra.mxu0 %v2822
        %2826 = vmatprep.subr.bf16.mxu0 0
        %2827 = vmatpush1.bf16.msra.mxu0 0
        %2828 = vmatprep.subr.bf16.mxu0 0
        %2829 = vmatpush1.bf16.msra.mxu0 0
        %2830 = vmatprep.subr.bf16.mxu0 0
        %2831 = vmatpush1.bf16.msra.mxu0 0
        %2832 = vmatprep.subr.bf16.mxu0 0
        %2833 = vmatpush1.bf16.msra.mxu0 0
        %2834 = vmatprep.subr.bf16.mxu0 0
        %2835 = vmatpush1.bf16.msra.mxu0 0
        %2836 = vmatprep.subr.bf16.mxu0 0
        %2837 = vmatpush1.bf16.msra.mxu0 0
        %2838 = vmatprep.subr.bf16.mxu0 0
        %2839 = vmatpush1.bf16.msra.mxu0 0
        %2840 = vmatprep.subr.bf16.mxu0 0
        %2841 = vmatpush1.bf16.msra.mxu0 0
        %2842 = vmatprep.subr.bf16.mxu0 0
        %2843 = vmatpush1.bf16.msra.mxu0 0
        %2844 = vmatprep.subr.bf16.mxu0 0
        %2845 = vmatpush1.bf16.msra.mxu0 0
        %2846 = vmatprep.subr.bf16.mxu0 0
        %2847 = vmatpush1.bf16.msra.mxu0 0
        %2848 = vmatprep.subr.bf16.mxu0 0
        %2849 = vmatpush1.bf16.msra.mxu0 0
        %2850 = vmatprep.subr.bf16.mxu0 0
        %2851 = vmatpush1.bf16.msra.mxu0 0
        %2852 = vmatprep.subr.bf16.mxu0 0
        %2853 = vmatpush1.bf16.msra.mxu0 0
        %2854 = vmatprep.subr.bf16.mxu0 0
        %2855 = vmatpush1.bf16.msra.mxu0 0
        %2856 = vmatprep.mubr.bf16.mxu0 0
        %2857 = vmatmul.mubr.bf16.gmra.mrb[0].mxu0 %v2819
        %v2858 = vpop.f32.mrb[0].mxu0
        %v2859 = vadd.f32 0.0, %v2858
        %v2860 = vpop.f32.mrb[0].mxu0
        %v2861 = vpop.f32.mrb[0].mxu0
        %v2862 = vpop.f32.mrb[0].mxu0
        %2863 = vdwg.mxu0
        %2865 = vrot.lane.b32.xlu0 %v2859, 16
        %v2866 = vpop.permute.xlu0 %2865
        %2868 = vst.msk [vmem:[#allocation2] sm:$0xff] %vm881, %v2866
        %2869 = vrot.lane.b32.xlu0 %v2639, 96
        %v2870 = vpop.permute.xlu0 %2869
        %2871 = vrot.lane.b32.xlu0 %v2639, 32
        %v2872 = vpop.permute.xlu0 %2871
        %v2874 = vsel %vm653, %v2870, 0
        %v2877 = vsel %vm653, %v2872, 0
        %2879 = vmatprep.subr.bf16.mxu0 0
        %2880 = vmatpush1.bf16.xpose.msra.mxu0 %v2877
        %2881 = vmatprep.subr.bf16.mxu0 0
        %2882 = vmatpush1.bf16.xpose.msra.mxu0 0
        %2883 = vmatprep.subr.bf16.mxu0 0
        %2884 = vmatpush1.bf16.xpose.msra.mxu0 0
        %2885 = vmatprep.subr.bf16.mxu0 0
        %2886 = vmatpush1.bf16.xpose.msra.mxu0 0
        %2887 = vmatprep.subr.bf16.mxu0 0
        %2888 = vmatpush1.bf16.xpose.msra.mxu0 0
        %2889 = vmatprep.subr.bf16.mxu0 0
        %2890 = vmatpush1.bf16.xpose.msra.mxu0 0
        %2891 = vmatprep.subr.bf16.mxu0 0
        %2892 = vmatpush1.bf16.xpose.msra.mxu0 0
        %2893 = vmatprep.subr.bf16.mxu0 0
        %2894 = vmatpush1.bf16.xpose.msra.mxu0 0
        %2895 = vmatprep.subr.bf16.mxu0 0
        %2896 = vmatpush1.bf16.xpose.msra.mxu0 0
        %2897 = vmatprep.subr.bf16.mxu0 0
        %2898 = vmatpush1.bf16.xpose.msra.mxu0 0
        %2899 = vmatprep.subr.bf16.mxu0 0
        %2900 = vmatpush1.bf16.xpose.msra.mxu0 0
        %2901 = vmatprep.subr.bf16.mxu0 0
        %2902 = vmatpush1.bf16.xpose.msra.mxu0 0
        %2903 = vmatprep.subr.bf16.mxu0 0
        %2904 = vmatpush1.bf16.xpose.msra.mxu0 0
        %2905 = vmatprep.subr.bf16.mxu0 0
        %2906 = vmatpush1.bf16.xpose.msra.mxu0 0
        %2907 = vmatprep.subr.bf16.mxu0 0
        %2908 = vmatpush1.bf16.xpose.msra.mxu0 0
        %2909 = vmatprep.subr.bf16.mxu0 0
        %2910 = vmatpush1.bf16.xpose.msra.mxu0 0
        %2911 = vmatprep.mubr.bf16.mxu0 0
        %2912 = vmatmul.mubr.bf16.gmra.mrb[0].mxu0 %v2874
        %v2913 = vpop.f32.mrb[0].mxu0
        %v2914 = vadd.f32 0.0, %v2913
        %v2915 = vpop.f32.mrb[0].mxu0
        %v2916 = vpop.f32.mrb[0].mxu0
        %v2917 = vpop.f32.mrb[0].mxu0
        %2918 = vdwg.mxu0
        %v2919 = vmul.f32 %v2914, 0.125
        %v2920 = vadd.f32 %v2919, %v524
        %v2921 = vsel %vm702, %v2920, -inf
        %2922 = vmax.xlane.f32.xlu0 %v2921
        %v2923 = vpop.xlane.xlu0 %2922
        %v2924 = vsub.f32 %v2920, %v2923
        %v2925 = vmul.f32 %v2924, 1.442695
        %v2926 = vpow.pop %v2925
        %v2927 = vsel %vm702, %v2926, 0.0
        %2928 = vadd.xlane.f32.xlu0 %v2927
        %v2929 = vpop.xlane.xlu0 %2928
        %v2930 = vrcp.pop %v2929
        %v2931 = vmul.f32 %v2926, %v2930
        %v2932 = vpack.c.bf16 %v2931, %v2931
        %2933 = vrot.lane.b32.xlu0 %v2703, 96
        %v2934 = vpop.permute.xlu0 %2933
        %v2936 = vsel %vm702, %v2932, 0
        %v2939 = vsel %vm719, %v2934, 0
        %2941 = vmatprep.subr.bf16.mxu0 0
        %2942 = vmatpush1.bf16.msra.mxu0 %v2939
        %2943 = vmatprep.subr.bf16.mxu0 0
        %2944 = vmatpush1.bf16.msra.mxu0 0
        %2945 = vmatprep.subr.bf16.mxu0 0
        %2946 = vmatpush1.bf16.msra.mxu0 0
        %2947 = vmatprep.subr.bf16.mxu0 0
        %2948 = vmatpush1.bf16.msra.mxu0 0
        %2949 = vmatprep.subr.bf16.mxu0 0
        %2950 = vmatpush1.bf16.msra.mxu0 0
        %2951 = vmatprep.subr.bf16.mxu0 0
        %2952 = vmatpush1.bf16.msra.mxu0 0
        %2953 = vmatprep.subr.bf16.mxu0 0
        %2954 = vmatpush1.bf16.msra.mxu0 0
        %2955 = vmatprep.subr.bf16.mxu0 0
        %2956 = vmatpush1.bf16.msra.mxu0 0
        %2957 = vmatprep.subr.bf16.mxu0 0
        %2958 = vmatpush1.bf16.msra.mxu0 0
        %2959 = vmatprep.subr.bf16.mxu0 0
        %2960 = vmatpush1.bf16.msra.mxu0 0
        %2961 = vmatprep.subr.bf16.mxu0 0
        %2962 = vmatpush1.bf16.msra.mxu0 0
        %2963 = vmatprep.subr.bf16.mxu0 0
        %2964 = vmatpush1.bf16.msra.mxu0 0
        %2965 = vmatprep.subr.bf16.mxu0 0
        %2966 = vmatpush1.bf16.msra.mxu0 0
        %2967 = vmatprep.subr.bf16.mxu0 0
        %2968 = vmatpush1.bf16.msra.mxu0 0
        %2969 = vmatprep.subr.bf16.mxu0 0
        %2970 = vmatpush1.bf16.msra.mxu0 0
        %2971 = vmatprep.subr.bf16.mxu0 0
        %2972 = vmatpush1.bf16.msra.mxu0 0
        %2973 = vmatprep.mubr.bf16.mxu0 0
        %2974 = vmatmul.mubr.bf16.gmra.mrb[0].mxu0 %v2936
        %v2975 = vpop.f32.mrb[0].mxu0
        %v2976 = vadd.f32 0.0, %v2975
        %v2977 = vpop.f32.mrb[0].mxu0
        %v2978 = vpop.f32.mrb[0].mxu0
        %v2979 = vpop.f32.mrb[0].mxu0
        %2980 = vdwg.mxu0
        %2982 = vrot.lane.b32.xlu0 %v2976, 32
        %v2983 = vpop.permute.xlu0 %2982
        %2985 = vst.msk [vmem:[#allocation2] sm:$0xff] %vm999, %v2983
        %2986 = vrot.lane.b32.xlu0 %v2639, 80
        %v2987 = vpop.permute.xlu0 %2986
        %2988 = vrot.lane.b32.xlu0 %v2639, 16
        %v2989 = vpop.permute.xlu0 %2988
        %v2991 = vsel %vm653, %v2987, 0
        %v2994 = vsel %vm653, %v2989, 0
        %2996 = vmatprep.subr.bf16.mxu0 0
        %2997 = vmatpush1.bf16.xpose.msra.mxu0 %v2994
        %2998 = vmatprep.subr.bf16.mxu0 0
        %2999 = vmatpush1.bf16.xpose.msra.mxu0 0
        %3000 = vmatprep.subr.bf16.mxu0 0
        %3001 = vmatpush1.bf16.xpose.msra.mxu0 0
        %3002 = vmatprep.subr.bf16.mxu0 0
        %3003 = vmatpush1.bf16.xpose.msra.mxu0 0
        %3004 = vmatprep.subr.bf16.mxu0 0
        %3005 = vmatpush1.bf16.xpose.msra.mxu0 0
        %3006 = vmatprep.subr.bf16.mxu0 0
        %3007 = vmatpush1.bf16.xpose.msra.mxu0 0
        %3008 = vmatprep.subr.bf16.mxu0 0
        %3009 = vmatpush1.bf16.xpose.msra.mxu0 0
        %3010 = vmatprep.subr.bf16.mxu0 0
        %3011 = vmatpush1.bf16.xpose.msra.mxu0 0
        %3012 = vmatprep.subr.bf16.mxu0 0
        %3013 = vmatpush1.bf16.xpose.msra.mxu0 0
        %3014 = vmatprep.subr.bf16.mxu0 0
        %3015 = vmatpush1.bf16.xpose.msra.mxu0 0
        %3016 = vmatprep.subr.bf16.mxu0 0
        %3017 = vmatpush1.bf16.xpose.msra.mxu0 0
        %3018 = vmatprep.subr.bf16.mxu0 0
        %3019 = vmatpush1.bf16.xpose.msra.mxu0 0
        %3020 = vmatprep.subr.bf16.mxu0 0
        %3021 = vmatpush1.bf16.xpose.msra.mxu0 0
        %3022 = vmatprep.subr.bf16.mxu0 0
        %3023 = vmatpush1.bf16.xpose.msra.mxu0 0
        %3024 = vmatprep.subr.bf16.mxu0 0
        %3025 = vmatpush1.bf16.xpose.msra.mxu0 0
        %3026 = vmatprep.subr.bf16.mxu0 0
        %3027 = vmatpush1.bf16.xpose.msra.mxu0 0
        %3028 = vmatprep.mubr.bf16.mxu0 0
        %3029 = vmatmul.mubr.bf16.gmra.mrb[0].mxu0 %v2991
        %v3030 = vpop.f32.mrb[0].mxu0
        %v3031 = vadd.f32 0.0, %v3030
        %v3032 = vpop.f32.mrb[0].mxu0
        %v3033 = vpop.f32.mrb[0].mxu0
        %v3034 = vpop.f32.mrb[0].mxu0
        %3035 = vdwg.mxu0
        %v3036 = vmul.f32 %v3031, 0.125
        %v3037 = vadd.f32 %v3036, %v524
        %v3038 = vsel %vm702, %v3037, -inf
        %3039 = vmax.xlane.f32.xlu0 %v3038
        %v3040 = vpop.xlane.xlu0 %3039
        %v3041 = vsub.f32 %v3037, %v3040
        %v3042 = vmul.f32 %v3041, 1.442695
        %v3043 = vpow.pop %v3042
        %v3044 = vsel %vm702, %v3043, 0.0
        %3045 = vadd.xlane.f32.xlu0 %v3044
        %v3046 = vpop.xlane.xlu0 %3045
        %v3047 = vrcp.pop %v3046
        %v3048 = vmul.f32 %v3043, %v3047
        %v3049 = vpack.c.bf16 %v3048, %v3048
        %3050 = vrot.lane.b32.xlu0 %v2703, 80
        %v3051 = vpop.permute.xlu0 %3050
        %v3053 = vsel %vm702, %v3049, 0
        %v3056 = vsel %vm719, %v3051, 0
        %3058 = vmatprep.subr.bf16.mxu0 0
        %3059 = vmatpush1.bf16.msra.mxu0 %v3056
        %3060 = vmatprep.subr.bf16.mxu0 0
        %3061 = vmatpush1.bf16.msra.mxu0 0
        %3062 = vmatprep.subr.bf16.mxu0 0
        %3063 = vmatpush1.bf16.msra.mxu0 0
        %3064 = vmatprep.subr.bf16.mxu0 0
        %3065 = vmatpush1.bf16.msra.mxu0 0
        %3066 = vmatprep.subr.bf16.mxu0 0
        %3067 = vmatpush1.bf16.msra.mxu0 0
        %3068 = vmatprep.subr.bf16.mxu0 0
        %3069 = vmatpush1.bf16.msra.mxu0 0
        %3070 = vmatprep.subr.bf16.mxu0 0
        %3071 = vmatpush1.bf16.msra.mxu0 0
        %3072 = vmatprep.subr.bf16.mxu0 0
        %3073 = vmatpush1.bf16.msra.mxu0 0
        %3074 = vmatprep.subr.bf16.mxu0 0
        %3075 = vmatpush1.bf16.msra.mxu0 0
        %3076 = vmatprep.subr.bf16.mxu0 0
        %3077 = vmatpush1.bf16.msra.mxu0 0
        %3078 = vmatprep.subr.bf16.mxu0 0
        %3079 = vmatpush1.bf16.msra.mxu0 0
        %3080 = vmatprep.subr.bf16.mxu0 0
        %3081 = vmatpush1.bf16.msra.mxu0 0
        %3082 = vmatprep.subr.bf16.mxu0 0
        %3083 = vmatpush1.bf16.msra.mxu0 0
        %3084 = vmatprep.subr.bf16.mxu0 0
        %3085 = vmatpush1.bf16.msra.mxu0 0
        %3086 = vmatprep.subr.bf16.mxu0 0
        %3087 = vmatpush1.bf16.msra.mxu0 0
        %3088 = vmatprep.subr.bf16.mxu0 0
        %3089 = vmatpush1.bf16.msra.mxu0 0
        %3090 = vmatprep.mubr.bf16.mxu0 0
        %3091 = vmatmul.mubr.bf16.gmra.mrb[0].mxu0 %v3053
        %v3092 = vpop.f32.mrb[0].mxu0
        %v3093 = vadd.f32 0.0, %v3092
        %v3094 = vpop.f32.mrb[0].mxu0
        %v3095 = vpop.f32.mrb[0].mxu0
        %v3096 = vpop.f32.mrb[0].mxu0
        %3097 = vdwg.mxu0
        %3099 = vrot.lane.b32.xlu0 %v3093, 48
        %v3100 = vpop.permute.xlu0 %3099
        %3102 = vst.msk [vmem:[#allocation2] sm:$0xff] %vm1117, %v3100
        %v3103 = vld [vmem:[#allocation2] sm:$0xff]
        %v3104 = vpack.c.bf16 %v3103, %v3103
        %s3105 = scalar_lea.vmem %s4, 64
        %v3106 = vld [vmem:[%s3105] sm:$0xf]
        %v3107 = vld [vmem:[%s3105 + $0x4] sm:$0xf]
        %v3108 = vld [vmem:[%s3105 + $0x8] sm:$0xf]
        %v3109 = vld [vmem:[%s3105 + $0xc] sm:$0xf]
        %v3110 = vld [vmem:[%s3105 + $0x10] sm:$0xf]
        %v3111 = vld [vmem:[%s3105 + $0x14] sm:$0xf]
        %v3112 = vld [vmem:[%s3105 + $0x18] sm:$0xf]
        %v3113 = vld [vmem:[%s3105 + $0x1c] sm:$0xf]
        %s3114 = scalar_lea.vmem %s5, 2
        %v3115 = vld [vmem:[%s3114] sm:$0x1]
        %v3117 = vlaneseq
        %v3118 = vshrl.u32 %v3117, 7
        %v3119 = vsub.s32 0, %v3118
        %v3120 = vrot.slane %v3115, %v3119
        %v3130 = vunpack.c.l.b16 %v3106
        %v3131 = vunpack.c.l.b16 %v3107
        %v3132 = vunpack.c.l.b16 %v3108
        %v3133 = vunpack.c.l.b16 %v3109
        %v3134 = vunpack.c.l.b16 %v3110
        %v3135 = vunpack.c.l.b16 %v3111
        %v3136 = vunpack.c.l.b16 %v3112
        %v3137 = vunpack.c.l.b16 %v3113
        %v3138 = vpack.c.b16 %v3131, %v3130
        %v3139 = vpack.c.b16 %v3133, %v3132
        %v3140 = vpack.c.b16 %v3135, %v3134
        %v3141 = vpack.c.b16 %v3137, %v3136
        %v3147 = vsel %vm527, %v3104, 0
        %3149 = vmatprep.subr.bf16.mxu0 0
        %3150 = vmatpush1.bf16.msra.mxu0 %v3138
        %3151 = vmatprep.subr.bf16.mxu0 0
        %3152 = vmatpush1.bf16.msra.mxu0 %v3139
        %3153 = vmatprep.subr.bf16.mxu0 0
        %3154 = vmatpush1.bf16.msra.mxu0 %v3140
        %3155 = vmatprep.subr.bf16.mxu0 0
        %3156 = vmatpush1.bf16.msra.mxu0 %v3141
        %3157 = vmatprep.subr.bf16.mxu0 0
        %3158 = vmatpush1.bf16.msra.mxu0 0
        %3159 = vmatprep.subr.bf16.mxu0 0
        %3160 = vmatpush1.bf16.msra.mxu0 0
        %3161 = vmatprep.subr.bf16.mxu0 0
        %3162 = vmatpush1.bf16.msra.mxu0 0
        %3163 = vmatprep.subr.bf16.mxu0 0
        %3164 = vmatpush1.bf16.msra.mxu0 0
        %3165 = vmatprep.subr.bf16.mxu0 0
        %3166 = vmatpush1.bf16.msra.mxu0 0
        %3167 = vmatprep.subr.bf16.mxu0 0
        %3168 = vmatpush1.bf16.msra.mxu0 0
        %3169 = vmatprep.subr.bf16.mxu0 0
        %3170 = vmatpush1.bf16.msra.mxu0 0
        %3171 = vmatprep.subr.bf16.mxu0 0
        %3172 = vmatpush1.bf16.msra.mxu0 0
        %3173 = vmatprep.subr.bf16.mxu0 0
        %3174 = vmatpush1.bf16.msra.mxu0 0
        %3175 = vmatprep.subr.bf16.mxu0 0
        %3176 = vmatpush1.bf16.msra.mxu0 0
        %3177 = vmatprep.subr.bf16.mxu0 0
        %3178 = vmatpush1.bf16.msra.mxu0 0
        %3179 = vmatprep.subr.bf16.mxu0 0
        %3180 = vmatpush1.bf16.msra.mxu0 0
        %3181 = vmatprep.mubr.bf16.mxu0 0
        %3182 = vmatmul.mubr.bf16.gmra.mrb[0].mxu0 %v3147
        %v3183 = vpop.f32.mrb[0].mxu0
        %v3184 = vadd.f32 %v3120, %v3183
        %v3185 = vpop.f32.mrb[0].mxu0
        %v3186 = vpop.f32.mrb[0].mxu0
        %v3187 = vpop.f32.mrb[0].mxu0
        %3188 = vdwg.mxu0
        %v3189 = vadd.f32 %v2513, %v3184
        %s3190 = scalar_lea.vmem %s6, 2
        %v3191 = vld [vmem:[%s3190] sm:$0x1]
        %s3192 = scalar_lea.vmem %s7, 2
        %v3193 = vld [vmem:[%s3192] sm:$0x1]
        %v3194 = vsel %vm527, %v3189, 0.0
        %3195 = vadd.xlane.f32.xlu0 %v3194
        %v3196 = vpop.xlane.xlu0 %3195
        %v3197 = vmul.f32 %v3196, %v531
        %v3198 = vsub.f32 %v3189, %v3197
        %v3199 = vmul.f32 %v3198, %v3198
        %v3200 = vsel %vm527, %v3199, 0.0
        %3201 = vadd.xlane.f32.xlu0 %v3200
        %v3202 = vpop.xlane.xlu0 %3201
        %v3203 = vmul.f32 %v3202, %v531
        %v3204 = vadd.f32 %v3203, 1e-05
        %v3205 = vrsqrt.pop %v3204
        %v3206 = vmul.f32 %v3198, %v3205
        %v3208 = vlaneseq
        %v3209 = vshrl.u32 %v3208, 7
        %v3210 = vsub.s32 0, %v3209
        %v3211 = vrot.slane %v3191, %v3210
        %v3213 = vmul.f32 %v3206, %v3211
        %v3215 = vlaneseq
        %v3216 = vshrl.u32 %v3215, 7
        %v3217 = vsub.s32 0, %v3216
        %v3218 = vrot.slane %v3193, %v3217
        %v3220 = vadd.f32 %v3213, %v3218
        %v3221 = vpack.c.bf16 %v3220, %v3220
        %s3222 = scalar_lea.vmem %s8, 128
        %v3223 = vld [vmem:[%s3222] sm:$0xff]
        %v3224 = vld [vmem:[%s3222 + $0x8] sm:$0xff]
        %v3225 = vld [vmem:[%s3222 + $0x10] sm:$0xff]
        %v3226 = vld [vmem:[%s3222 + $0x18] sm:$0xff]
        %v3227 = vld [vmem:[%s3222 + $0x20] sm:$0xff]
        %v3228 = vld [vmem:[%s3222 + $0x28] sm:$0xff]
        %v3229 = vld [vmem:[%s3222 + $0x30] sm:$0xff]
        %v3230 = vld [vmem:[%s3222 + $0x38] sm:$0xff]
        %s3231 = scalar_lea.vmem %s9, 4
        %v3232 = vld [vmem:[%s3231] sm:$0x3]
        %v3234 = vlaneseq
        %v3235 = vshrl.u32 %v3234, 7
        %v3236 = vsub.s32 0, %v3235
        %v3237 = vrot.slane %v3232, %v3236
        %v3238 = vlaneseq
        %v3239 = vshrl.u32 %v3238, 7
        %v3240 = vsub.s32 1, %v3239
        %v3241 = vrot.slane %v3232, %v3240
        %v3252 = vunpack.c.l.b16 %v3223
        %v3253 = vunpack.c.h.b16 %v3223
        %v3254 = vunpack.c.l.b16 %v3224
        %v3255 = vunpack.c.h.b16 %v3224
        %v3256 = vunpack.c.l.b16 %v3225
        %v3257 = vunpack.c.h.b16 %v3225
        %v3258 = vunpack.c.l.b16 %v3226
        %v3259 = vunpack.c.h.b16 %v3226
        %v3260 = vunpack.c.l.b16 %v3227
        %v3261 = vunpack.c.h.b16 %v3227
        %v3262 = vunpack.c.l.b16 %v3228
        %v3263 = vunpack.c.h.b16 %v3228
        %v3264 = vunpack.c.l.b16 %v3229
        %v3265 = vunpack.c.h.b16 %v3229
        %v3266 = vunpack.c.l.b16 %v3230
        %v3267 = vunpack.c.h.b16 %v3230
        %v3268 = vpack.c.b16 %v3254, %v3252
        %v3269 = vpack.c.b16 %v3255, %v3253
        %v3270 = vpack.c.b16 %v3258, %v3256
        %v3271 = vpack.c.b16 %v3259, %v3257
        %v3272 = vpack.c.b16 %v3262, %v3260
        %v3273 = vpack.c.b16 %v3263, %v3261
        %v3274 = vpack.c.b16 %v3266, %v3264
        %v3275 = vpack.c.b16 %v3267, %v3265
        %v3285 = vsel %vm527, %v3221, 0
        %3287 = vmatprep.subr.bf16.mxu0 %v3269
        %3288 = vmatpush1.bf16.msra.mxu0 %v3268
        %3289 = vmatprep.subr.bf16.mxu0 %v3271
        %3290 = vmatpush1.bf16.msra.mxu0 %v3270
        %3291 = vmatprep.subr.bf16.mxu0 %v3273
        %3292 = vmatpush1.bf16.msra.mxu0 %v3272
        %3293 = vmatprep.subr.bf16.mxu0 %v3275
        %3294 = vmatpush1.bf16.msra.mxu0 %v3274
        %3295 = vmatprep.subr.bf16.mxu0 0
        %3296 = vmatpush1.bf16.msra.mxu0 0
        %3297 = vmatprep.subr.bf16.mxu0 0
        %3298 = vmatpush1.bf16.msra.mxu0 0
        %3299 = vmatprep.subr.bf16.mxu0 0
        %3300 = vmatpush1.bf16.msra.mxu0 0
        %3301 = vmatprep.subr.bf16.mxu0 0
        %3302 = vmatpush1.bf16.msra.mxu0 0
        %3303 = vmatprep.subr.bf16.mxu0 0
        %3304 = vmatpush1.bf16.msra.mxu0 0
        %3305 = vmatprep.subr.bf16.mxu0 0
        %3306 = vmatpush1.bf16.msra.mxu0 0
        %3307 = vmatprep.subr.bf16.mxu0 0
        %3308 = vmatpush1.bf16.msra.mxu0 0
        %3309 = vmatprep.subr.bf16.mxu0 0
        %3310 = vmatpush1.bf16.msra.mxu0 0
        %3311 = vmatprep.subr.bf16.mxu0 0
        %3312 = vmatpush1.bf16.msra.mxu0 0
        %3313 = vmatprep.subr.bf16.mxu0 0
        %3314 = vmatpush1.bf16.msra.mxu0 0
        %3315 = vmatprep.subr.bf16.mxu0 0
        %3316 = vmatpush1.bf16.msra.mxu0 0
        %3317 = vmatprep.subr.bf16.mxu0 0
        %3318 = vmatpush1.bf16.msra.mxu0 0
        %3319 = vmatprep.mubr.bf16.mxu0 0
        %3320 = vmatmul.mubr.bf16.gmra.mrb[0].mxu0 %v3285
        %v3321 = vpop.f32.mrb[0].mxu0
        %v3322 = vadd.f32 %v3237, %v3321
        %v3323 = vpop.f32.mrb[0].mxu0
        %v3324 = vadd.f32 %v3241, %v3323
        %v3325 = vpop.f32.mrb[0].mxu0
        %v3326 = vpop.f32.mrb[0].mxu0
        %3327 = vdwg.mxu0
        %v3328 = vmax.f32 %v3322, 0.0
        %v3329 = vmax.f32 %v3324, 0.0
        %v3330 = vpack.c.bf16 %v3328, %v3328
        %v3331 = vpack.c.bf16 %v3329, %v3329
        %s3332 = scalar_lea.vmem %s10, 256
        %v3333 = vld [vmem:[%s3332] sm:$0xf]
        %v3334 = vld [vmem:[%s3332 + $0x4] sm:$0xf]
        %v3335 = vld [vmem:[%s3332 + $0x8] sm:$0xf]
        %v3336 = vld [vmem:[%s3332 + $0xc] sm:$0xf]
        %v3337 = vld [vmem:[%s3332 + $0x10] sm:$0xf]
        %v3338 = vld [vmem:[%s3332 + $0x14] sm:$0xf]
        %v3339 = vld [vmem:[%s3332 + $0x18] sm:$0xf]
        %v3340 = vld [vmem:[%s3332 + $0x1c] sm:$0xf]
        %v3341 = vld [vmem:[%s3332 + $0x20] sm:$0xf]
        %v3342 = vld [vmem:[%s3332 + $0x24] sm:$0xf]
        %v3343 = vld [vmem:[%s3332 + $0x28] sm:$0xf]
        %v3344 = vld [vmem:[%s3332 + $0x2c] sm:$0xf]
        %v3345 = vld [vmem:[%s3332 + $0x30] sm:$0xf]
        %v3346 = vld [vmem:[%s3332 + $0x34] sm:$0xf]
        %v3347 = vld [vmem:[%s3332 + $0x38] sm:$0xf]
        %v3348 = vld [vmem:[%s3332 + $0x3c] sm:$0xf]
        %v3349 = vld [vmem:[%s3332 + $0x40] sm:$0xf]
        %v3350 = vld [vmem:[%s3332 + $0x44] sm:$0xf]
        %v3351 = vld [vmem:[%s3332 + $0x48] sm:$0xf]
        %v3352 = vld [vmem:[%s3332 + $0x4c] sm:$0xf]
        %v3353 = vld [vmem:[%s3332 + $0x50] sm:$0xf]
        %v3354 = vld [vmem:[%s3332 + $0x54] sm:$0xf]
        %v3355 = vld [vmem:[%s3332 + $0x58] sm:$0xf]
        %v3356 = vld [vmem:[%s3332 + $0x5c] sm:$0xf]
        %v3357 = vld [vmem:[%s3332 + $0x60] sm:$0xf]
        %v3358 = vld [vmem:[%s3332 + $0x64] sm:$0xf]
        %v3359 = vld [vmem:[%s3332 + $0x68] sm:$0xf]
        %v3360 = vld [vmem:[%s3332 + $0x6c] sm:$0xf]
        %v3361 = vld [vmem:[%s3332 + $0x70] sm:$0xf]
        %v3362 = vld [vmem:[%s3332 + $0x74] sm:$0xf]
        %v3363 = vld [vmem:[%s3332 + $0x78] sm:$0xf]
        %v3364 = vld [vmem:[%s3332 + $0x7c] sm:$0xf]
        %s3365 = scalar_lea.vmem %s11, 2
        %v3366 = vld [vmem:[%s3365] sm:$0x1]
        %v3368 = vlaneseq
        %v3369 = vshrl.u32 %v3368, 7
        %v3370 = vsub.s32 0, %v3369
        %v3371 = vrot.slane %v3366, %v3370
        %v3405 = vunpack.c.l.b16 %v3333
        %v3406 = vunpack.c.l.b16 %v3334
        %v3407 = vunpack.c.l.b16 %v3335
        %v3408 = vunpack.c.l.b16 %v3336
        %v3409 = vunpack.c.l.b16 %v3337
        %v3410 = vunpack.c.l.b16 %v3338
        %v3411 = vunpack.c.l.b16 %v3339
        %v3412 = vunpack.c.l.b16 %v3340
        %v3413 = vunpack.c.l.b16 %v3341
        %v3414 = vunpack.c.l.b16 %v3342
        %v3415 = vunpack.c.l.b16 %v3343
        %v3416 = vunpack.c.l.b16 %v3344
        %v3417 = vunpack.c.l.b16 %v3345
        %v3418 = vunpack.c.l.b16 %v3346
        %v3419 = vunpack.c.l.b16 %v3347
        %v3420 = vunpack.c.l.b16 %v3348
        %v3421 = vunpack.c.l.b16 %v3349
        %v3422 = vunpack.c.l.b16 %v3350
        %v3423 = vunpack.c.l.b16 %v3351
        %v3424 = vunpack.c.l.b16 %v3352
        %v3425 = vunpack.c.l.b16 %v3353
        %v3426 = vunpack.c.l.b16 %v3354
        %v3427 = vunpack.c.l.b16 %v3355
        %v3428 = vunpack.c.l.b16 %v3356
        %v3429 = vunpack.c.l.b16 %v3357
        %v3430 = vunpack.c.l.b16 %v3358
        %v3431 = vunpack.c.l.b16 %v3359
        %v3432 = vunpack.c.l.b16 %v3360
        %v3433 = vunpack.c.l.b16 %v3361
        %v3434 = vunpack.c.l.b16 %v3362
        %v3435 = vunpack.c.l.b16 %v3363
        %v3436 = vunpack.c.l.b16 %v3364
        %v3437 = vpack.c.b16 %v3406, %v3405
        %v3438 = vpack.c.b16 %v3408, %v3407
        %v3439 = vpack.c.b16 %v3410, %v3409
        %v3440 = vpack.c.b16 %v3412, %v3411
        %v3441 = vpack.c.b16 %v3414, %v3413
        %v3442 = vpack.c.b16 %v3416, %v3415
        %v3443 = vpack.c.b16 %v3418, %v3417
        %v3444 = vpack.c.b16 %v3420, %v3419
        %v3445 = vpack.c.b16 %v3422, %v3421
        %v3446 = vpack.c.b16 %v3424, %v3423
        %v3447 = vpack.c.b16 %v3426, %v3425
        %v3448 = vpack.c.b16 %v3428, %v3427
        %v3449 = vpack.c.b16 %v3430, %v3429
        %v3450 = vpack.c.b16 %v3432, %v3431
        %v3451 = vpack.c.b16 %v3434, %v3433
        %v3452 = vpack.c.b16 %v3436, %v3435
        %3469 = vmatprep.subr.bf16.mxu0 0
        %3470 = vmatpush1.bf16.msra.mxu0 %v3437
        %3471 = vmatprep.subr.bf16.mxu0 0
        %3472 = vmatpush1.bf16.msra.mxu0 %v3438
        %3473 = vmatprep.subr.bf16.mxu0 0
        %3474 = vmatpush1.bf16.msra.mxu0 %v3439
        %3475 = vmatprep.subr.bf16.mxu0 0
        %3476 = vmatpush1.bf16.msra.mxu0 %v3440
        %3477 = vmatprep.subr.bf16.mxu0 0
        %3478 = vmatpush1.bf16.msra.mxu0 %v3441
        %3479 = vmatprep.subr.bf16.mxu0 0
        %3480 = vmatpush1.bf16.msra.mxu0 %v3442
        %3481 = vmatprep.subr.bf16.mxu0 0
        %3482 = vmatpush1.bf16.msra.mxu0 %v3443
        %3483 = vmatprep.subr.bf16.mxu0 0
        %3484 = vmatpush1.bf16.msra.mxu0 %v3444
        %3485 = vmatprep.subr.bf16.mxu0 0
        %3486 = vmatpush1.bf16.msra.mxu0 %v3445
        %3487 = vmatprep.subr.bf16.mxu0 0
        %3488 = vmatpush1.bf16.msra.mxu0 %v3446
        %3489 = vmatprep.subr.bf16.mxu0 0
        %3490 = vmatpush1.bf16.msra.mxu0 %v3447
        %3491 = vmatprep.subr.bf16.mxu0 0
        %3492 = vmatpush1.bf16.msra.mxu0 %v3448
        %3493 = vmatprep.subr.bf16.mxu0 0
        %3494 = vmatpush1.bf16.msra.mxu0 %v3449
        %3495 = vmatprep.subr.bf16.mxu0 0
        %3496 = vmatpush1.bf16.msra.mxu0 %v3450
        %3497 = vmatprep.subr.bf16.mxu0 0
        %3498 = vmatpush1.bf16.msra.mxu0 %v3451
        %3499 = vmatprep.subr.bf16.mxu0 0
        %3500 = vmatpush1.bf16.msra.mxu0 %v3452
        %3501 = vmatprep.mubr.bf16.mxu0 %v3331
        %3502 = vmatmul.mubr.bf16.gmra.mrb[0].mxu0 %v3330
        %v3503 = vpop.f32.mrb[0].mxu0
        %v3504 = vadd.f32 %v3371, %v3503
        %v3505 = vpop.f32.mrb[0].mxu0
        %v3506 = vpop.f32.mrb[0].mxu0
        %v3507 = vpop.f32.mrb[0].mxu0
        %3508 = vdwg.mxu0
        %v3509 = vadd.f32 %v3189, %v3504
        %s3510 = scalar_lea.vmem %s1, 3
        %v3511 = vld [vmem:[%s3510] sm:$0x1]
        %s3512 = scalar_lea.vmem %s2, 3
        %v3513 = vld [vmem:[%s3512] sm:$0x1]
        %v3514 = vsel %vm527, %v3509, 0.0
        %3515 = vadd.xlane.f32.xlu0 %v3514
        %v3516 = vpop.xlane.xlu0 %3515
        %v3517 = vmul.f32 %v3516, %v531
        %v3518 = vsub.f32 %v3509, %v3517
        %v3519 = vmul.f32 %v3518, %v3518
        %v3520 = vsel %vm527, %v3519, 0.0
        %3521 = vadd.xlane.f32.xlu0 %v3520
        %v3522 = vpop.xlane.xlu0 %3521
        %v3523 = vmul.f32 %v3522, %v531
        %v3524 = vadd.f32 %v3523, 1e-05
        %v3525 = vrsqrt.pop %v3524
        %v3526 = vmul.f32 %v3518, %v3525
        %v3528 = vlaneseq
        %v3529 = vshrl.u32 %v3528, 7
        %v3530 = vsub.s32 0, %v3529
        %v3531 = vrot.slane %v3511, %v3530
        %v3533 = vmul.f32 %v3526, %v3531
        %v3535 = vlaneseq
        %v3536 = vshrl.u32 %v3535, 7
        %v3537 = vsub.s32 0, %v3536
        %v3538 = vrot.slane %v3513, %v3537
        %v3540 = vadd.f32 %v3533, %v3538
        %v3541 = vpack.c.bf16 %v3540, %v3540
        %s3542 = scalar_lea.vmem %s3, 192
        %v3543 = vld [vmem:[%s3542] sm:$0xff]
        %v3544 = vld [vmem:[%s3542 + $0x8] sm:$0xff]
        %v3545 = vld [vmem:[%s3542 + $0x10] sm:$0xff]
        %v3546 = vld [vmem:[%s3542 + $0x18] sm:$0xff]
        %v3547 = vld [vmem:[%s3542 + $0x20] sm:$0xff]
        %v3548 = vld [vmem:[%s3542 + $0x28] sm:$0xff]
        %v3549 = vld [vmem:[%s3542 + $0x30] sm:$0xff]
        %v3550 = vld [vmem:[%s3542 + $0x38] sm:$0xff]
        %v3559 = vunpack.c.l.b16 %v3543
        %v3560 = vunpack.c.h.b16 %v3543
        %v3561 = vunpack.c.l.b16 %v3544
        %v3562 = vunpack.c.h.b16 %v3544
        %v3563 = vunpack.c.l.b16 %v3545
        %v3564 = vunpack.c.h.b16 %v3545
        %v3565 = vunpack.c.l.b16 %v3546
        %v3566 = vunpack.c.h.b16 %v3546
        %v3567 = vunpack.c.l.b16 %v3547
        %v3568 = vunpack.c.h.b16 %v3547
        %v3569 = vunpack.c.l.b16 %v3548
        %v3570 = vunpack.c.h.b16 %v3548
        %v3571 = vunpack.c.l.b16 %v3549
        %v3572 = vunpack.c.h.b16 %v3549
        %v3573 = vunpack.c.l.b16 %v3550
        %v3574 = vunpack.c.h.b16 %v3550
        %v3575 = vpack.c.b16 %v3561, %v3559
        %v3576 = vpack.c.b16 %v3562, %v3560
        %v3577 = vpack.c.b16 %v3565, %v3563
        %v3578 = vpack.c.b16 %v3566, %v3564
        %v3579 = vpack.c.b16 %v3569, %v3567
        %v3580 = vpack.c.b16 %v3570, %v3568
        %v3581 = vpack.c.b16 %v3573, %v3571
        %v3582 = vpack.c.b16 %v3574, %v3572
        %v3592 = vsel %vm527, %v3541, 0
        %3594 = vmatprep.subr.bf16.mxu0 %v3576
        %3595 = vmatpush1.bf16.msra.mxu0 %v3575
        %3596 = vmatprep.subr.bf16.mxu0 %v3578
        %3597 = vmatpush1.bf16.msra.mxu0 %v3577
        %3598 = vmatprep.subr.bf16.mxu0 %v3580
        %3599 = vmatpush1.bf16.msra.mxu0 %v3579
        %3600 = vmatprep.subr.bf16.mxu0 %v3582
        %3601 = vmatpush1.bf16.msra.mxu0 %v3581
        %3602 = vmatprep.subr.bf16.mxu0 0
        %3603 = vmatpush1.bf16.msra.mxu0 0
        %3604 = vmatprep.subr.bf16.mxu0 0
        %3605 = vmatpush1.bf16.msra.mxu0 0
        %3606 = vmatprep.subr.bf16.mxu0 0
        %3607 = vmatpush1.bf16.msra.mxu0 0
        %3608 = vmatprep.subr.bf16.mxu0 0
        %3609 = vmatpush1.bf16.msra.mxu0 0
        %3610 = vmatprep.subr.bf16.mxu0 0
        %3611 = vmatpush1.bf16.msra.mxu0 0
        %3612 = vmatprep.subr.bf16.mxu0 0
        %3613 = vmatpush1.bf16.msra.mxu0 0
        %3614 = vmatprep.subr.bf16.mxu0 0
        %3615 = vmatpush1.bf16.msra.mxu0 0
        %3616 = vmatprep.subr.bf16.mxu0 0
        %3617 = vmatpush1.bf16.msra.mxu0 0
        %3618 = vmatprep.subr.bf16.mxu0 0
        %3619 = vmatpush1.bf16.msra.mxu0 0
        %3620 = vmatprep.subr.bf16.mxu0 0
        %3621 = vmatpush1.bf16.msra.mxu0 0
        %3622 = vmatprep.subr.bf16.mxu0 0
        %3623 = vmatpush1.bf16.msra.mxu0 0
        %3624 = vmatprep.subr.bf16.mxu0 0
        %3625 = vmatpush1.bf16.msra.mxu0 0
        %3626 = vmatprep.mubr.bf16.mxu0 0
        %3627 = vmatmul.mubr.bf16.gmra.mrb[0].mxu0 %v3592
        %v3628 = vpop.f32.mrb[0].mxu0
        %v3629 = vadd.f32 0.0, %v3628
        %v3630 = vpop.f32.mrb[0].mxu0
        %v3631 = vadd.f32 0.0, %v3630
        %v3632 = vpop.f32.mrb[0].mxu0
        %v3633 = vpop.f32.mrb[0].mxu0
        %3634 = vdwg.mxu0
        %v3635 = vpack.c.bf16 %v3629, %v3629
        %3637 = vrot.lane.b32.xlu0 %v3635, 64
        %v3638 = vpop.permute.xlu0 %3637
        %v3640 = vsel %vm653, %v3635, 0
        %v3643 = vsel %vm653, %v3638, 0
        %3645 = vmatprep.subr.bf16.mxu0 0
        %3646 = vmatpush1.bf16.xpose.msra.mxu0 %v3643
        %3647 = vmatprep.subr.bf16.mxu0 0
        %3648 = vmatpush1.bf16.xpose.msra.mxu0 0
        %3649 = vmatprep.subr.bf16.mxu0 0
        %3650 = vmatpush1.bf16.xpose.msra.mxu0 0
        %3651 = vmatprep.subr.bf16.mxu0 0
        %3652 = vmatpush1.bf16.xpose.msra.mxu0 0
        %3653 = vmatprep.subr.bf16.mxu0 0
        %3654 = vmatpush1.bf16.xpose.msra.mxu0 0
        %3655 = vmatprep.subr.bf16.mxu0 0
        %3656 = vmatpush1.bf16.xpose.msra.mxu0 0
        %3657 = vmatprep.subr.bf16.mxu0 0
        %3658 = vmatpush1.bf16.xpose.msra.mxu0 0
        %3659 = vmatprep.subr.bf16.mxu0 0
        %3660 = vmatpush1.bf16.xpose.msra.mxu0 0
        %3661 = vmatprep.subr.bf16.mxu0 0
        %3662 = vmatpush1.bf16.xpose.msra.mxu0 0
        %3663 = vmatprep.subr.bf16.mxu0 0
        %3664 = vmatpush1.bf16.xpose.msra.mxu0 0
        %3665 = vmatprep.subr.bf16.mxu0 0
        %3666 = vmatpush1.bf16.xpose.msra.mxu0 0
        %3667 = vmatprep.subr.bf16.mxu0 0
        %3668 = vmatpush1.bf16.xpose.msra.mxu0 0
        %3669 = vmatprep.subr.bf16.mxu0 0
        %3670 = vmatpush1.bf16.xpose.msra.mxu0 0
        %3671 = vmatprep.subr.bf16.mxu0 0
        %3672 = vmatpush1.bf16.xpose.msra.mxu0 0
        %3673 = vmatprep.subr.bf16.mxu0 0
        %3674 = vmatpush1.bf16.xpose.msra.mxu0 0
        %3675 = vmatprep.subr.bf16.mxu0 0
        %3676 = vmatpush1.bf16.xpose.msra.mxu0 0
        %3677 = vmatprep.mubr.bf16.mxu0 0
        %3678 = vmatmul.mubr.bf16.gmra.mrb[0].mxu0 %v3640
        %v3679 = vpop.f32.mrb[0].mxu0
        %v3680 = vadd.f32 0.0, %v3679
        %v3681 = vpop.f32.mrb[0].mxu0
        %v3682 = vpop.f32.mrb[0].mxu0
        %v3683 = vpop.f32.mrb[0].mxu0
        %3684 = vdwg.mxu0
        %v3685 = vmul.f32 %v3680, 0.125
        %v3686 = vadd.f32 %v3685, %v524
        %v3687 = vsel %vm702, %v3686, -inf
        %3688 = vmax.xlane.f32.xlu0 %v3687
        %v3689 = vpop.xlane.xlu0 %3688
        %v3690 = vsub.f32 %v3686, %v3689
        %v3691 = vmul.f32 %v3690, 1.442695
        %v3692 = vpow.pop %v3691
        %v3693 = vsel %vm702, %v3692, 0.0
        %3694 = vadd.xlane.f32.xlu0 %v3693
        %v3695 = vpop.xlane.xlu0 %3694
        %v3696 = vrcp.pop %v3695
        %v3697 = vmul.f32 %v3692, %v3696
        %v3698 = vpack.c.bf16 %v3697, %v3697
        %v3699 = vpack.c.bf16 %v3631, %v3631
        %v3701 = vsel %vm702, %v3698, 0
        %v3704 = vsel %vm719, %v3699, 0
        %3706 = vmatprep.subr.bf16.mxu0 0
        %3707 = vmatpush1.bf16.msra.mxu0 %v3704
        %3708 = vmatprep.subr.bf16.mxu0 0
        %3709 = vmatpush1.bf16.msra.mxu0 0
        %3710 = vmatprep.subr.bf16.mxu0 0
        %3711 = vmatpush1.bf16.msra.mxu0 0
        %3712 = vmatprep.subr.bf16.mxu0 0
        %3713 = vmatpush1.bf16.msra.mxu0 0
        %3714 = vmatprep.subr.bf16.mxu0 0
        %3715 = vmatpush1.bf16.msra.mxu0 0
        %3716 = vmatprep.subr.bf16.mxu0 0
        %3717 = vmatpush1.bf16.msra.mxu0 0
        %3718 = vmatprep.subr.bf16.mxu0 0
        %3719 = vmatpush1.bf16.msra.mxu0 0
        %3720 = vmatprep.subr.bf16.mxu0 0
        %3721 = vmatpush1.bf16.msra.mxu0 0
        %3722 = vmatprep.subr.bf16.mxu0 0
        %3723 = vmatpush1.bf16.msra.mxu0 0
        %3724 = vmatprep.subr.bf16.mxu0 0
        %3725 = vmatpush1.bf16.msra.mxu0 0
        %3726 = vmatprep.subr.bf16.mxu0 0
        %3727 = vmatpush1.bf16.msra.mxu0 0
        %3728 = vmatprep.subr.bf16.mxu0 0
        %3729 = vmatpush1.bf16.msra.mxu0 0
        %3730 = vmatprep.subr.bf16.mxu0 0
        %3731 = vmatpush1.bf16.msra.mxu0 0
        %3732 = vmatprep.subr.bf16.mxu0 0
        %3733 = vmatpush1.bf16.msra.mxu0 0
        %3734 = vmatprep.subr.bf16.mxu0 0
        %3735 = vmatpush1.bf16.msra.mxu0 0
        %3736 = vmatprep.subr.bf16.mxu0 0
        %3737 = vmatpush1.bf16.msra.mxu0 0
        %3738 = vmatprep.mubr.bf16.mxu0 0
        %3739 = vmatmul.mubr.bf16.gmra.mrb[0].mxu0 %v3701
        %v3740 = vpop.f32.mrb[0].mxu0
        %v3741 = vadd.f32 0.0, %v3740
        %v3742 = vpop.f32.mrb[0].mxu0
        %v3743 = vpop.f32.mrb[0].mxu0
        %v3744 = vpop.f32.mrb[0].mxu0
        %3745 = vdwg.mxu0
        %3746 = vst.msk [vmem:[#allocation2] sm:$0xff] %vm653, %v3741
        %3747 = vrot.lane.b32.xlu0 %v3635, 112
        %v3748 = vpop.permute.xlu0 %3747
        %3749 = vrot.lane.b32.xlu0 %v3635, 48
        %v3750 = vpop.permute.xlu0 %3749
        %v3752 = vsel %vm653, %v3748, 0
        %v3755 = vsel %vm653, %v3750, 0
        %3757 = vmatprep.subr.bf16.mxu0 0
        %3758 = vmatpush1.bf16.xpose.msra.mxu0 %v3755
        %3759 = vmatprep.subr.bf16.mxu0 0
        %3760 = vmatpush1.bf16.xpose.msra.mxu0 0
        %3761 = vmatprep.subr.bf16.mxu0 0
        %3762 = vmatpush1.bf16.xpose.msra.mxu0 0
        %3763 = vmatprep.subr.bf16.mxu0 0
        %3764 = vmatpush1.bf16.xpose.msra.mxu0 0
        %3765 = vmatprep.subr.bf16.mxu0 0
        %3766 = vmatpush1.bf16.xpose.msra.mxu0 0
        %3767 = vmatprep.subr.bf16.mxu0 0
        %3768 = vmatpush1.bf16.xpose.msra.mxu0 0
        %3769 = vmatprep.subr.bf16.mxu0 0
        %3770 = vmatpush1.bf16.xpose.msra.mxu0 0
        %3771 = vmatprep.subr.bf16.mxu0 0
        %3772 = vmatpush1.bf16.xpose.msra.mxu0 0
        %3773 = vmatprep.subr.bf16.mxu0 0
        %3774 = vmatpush1.bf16.xpose.msra.mxu0 0
        %3775 = vmatprep.subr.bf16.mxu0 0
        %3776 = vmatpush1.bf16.xpose.msra.mxu0 0
        %3777 = vmatprep.subr.bf16.mxu0 0
        %3778 = vmatpush1.bf16.xpose.msra.mxu0 0
        %3779 = vmatprep.subr.bf16.mxu0 0
        %3780 = vmatpush1.bf16.xpose.msra.mxu0 0
        %3781 = vmatprep.subr.bf16.mxu0 0
        %3782 = vmatpush1.bf16.xpose.msra.mxu0 0
        %3783 = vmatprep.subr.bf16.mxu0 0
        %3784 = vmatpush1.bf16.xpose.msra.mxu0 0
        %3785 = vmatprep.subr.bf16.mxu0 0
        %3786 = vmatpush1.bf16.xpose.msra.mxu0 0
        %3787 = vmatprep.subr.bf16.mxu0 0
        %3788 = vmatpush1.bf16.xpose.msra.mxu0 0
        %3789 = vmatprep.mubr.bf16.mxu0 0
        %3790 = vmatmul.mubr.bf16.gmra.mrb[0].mxu0 %v3752
        %v3791 = vpop.f32.mrb[0].mxu0
        %v3792 = vadd.f32 0.0, %v3791
        %v3793 = vpop.f32.mrb[0].mxu0
        %v3794 = vpop.f32.mrb[0].mxu0
        %v3795 = vpop.f32.mrb[0].mxu0
        %3796 = vdwg.mxu0
        %v3797 = vmul.f32 %v3792, 0.125
        %v3798 = vadd.f32 %v3797, %v524
        %v3799 = vsel %vm702, %v3798, -inf
        %3800 = vmax.xlane.f32.xlu0 %v3799
        %v3801 = vpop.xlane.xlu0 %3800
        %v3802 = vsub.f32 %v3798, %v3801
        %v3803 = vmul.f32 %v3802, 1.442695
        %v3804 = vpow.pop %v3803
        %v3805 = vsel %vm702, %v3804, 0.0
        %3806 = vadd.xlane.f32.xlu0 %v3805
        %v3807 = vpop.xlane.xlu0 %3806
        %v3808 = vrcp.pop %v3807
        %v3809 = vmul.f32 %v3804, %v3808
        %v3810 = vpack.c.bf16 %v3809, %v3809
        %3812 = vrot.lane.b32.xlu0 %v3699, 112
        %v3813 = vpop.permute.xlu0 %3812
        %v3815 = vsel %vm702, %v3810, 0
        %v3818 = vsel %vm719, %v3813, 0
        %3820 = vmatprep.subr.bf16.mxu0 0
        %3821 = vmatpush1.bf16.msra.mxu0 %v3818
        %3822 = vmatprep.subr.bf16.mxu0 0
        %3823 = vmatpush1.bf16.msra.mxu0 0
        %3824 = vmatprep.subr.bf16.mxu0 0
        %3825 = vmatpush1.bf16.msra.mxu0 0
        %3826 = vmatprep.subr.bf16.mxu0 0
        %3827 = vmatpush1.bf16.msra.mxu0 0
        %3828 = vmatprep.subr.bf16.mxu0 0
        %3829 = vmatpush1.bf16.msra.mxu0 0
        %3830 = vmatprep.subr.bf16.mxu0 0
        %3831 = vmatpush1.bf16.msra.mxu0 0
        %3832 = vmatprep.subr.bf16.mxu0 0
        %3833 = vmatpush1.bf16.msra.mxu0 0
        %3834 = vmatprep.subr.bf16.mxu0 0
        %3835 = vmatpush1.bf16.msra.mxu0 0
        %3836 = vmatprep.subr.bf16.mxu0 0
        %3837 = vmatpush1.bf16.msra.mxu0 0
        %3838 = vmatprep.subr.bf16.mxu0 0
        %3839 = vmatpush1.bf16.msra.mxu0 0
        %3840 = vmatprep.subr.bf16.mxu0 0
        %3841 = vmatpush1.bf16.msra.mxu0 0
        %3842 = vmatprep.subr.bf16.mxu0 0
        %3843 = vmatpush1.bf16.msra.mxu0 0
        %3844 = vmatprep.subr.bf16.mxu0 0
        %3845 = vmatpush1.bf16.msra.mxu0 0
        %3846 = vmatprep.subr.bf16.mxu0 0
        %3847 = vmatpush1.bf16.msra.mxu0 0
        %3848 = vmatprep.subr.bf16.mxu0 0
        %3849 = vmatpush1.bf16.msra.mxu0 0
        %3850 = vmatprep.subr.bf16.mxu0 0
        %3851 = vmatpush1.bf16.msra.mxu0 0
        %3852 = vmatprep.mubr.bf16.mxu0 0
        %3853 = vmatmul.mubr.bf16.gmra.mrb[0].mxu0 %v3815
        %v3854 = vpop.f32.mrb[0].mxu0
        %v3855 = vadd.f32 0.0, %v3854
        %v3856 = vpop.f32.mrb[0].mxu0
        %v3857 = vpop.f32.mrb[0].mxu0
        %v3858 = vpop.f32.mrb[0].mxu0
        %3859 = vdwg.mxu0
        %3861 = vrot.lane.b32.xlu0 %v3855, 16
        %v3862 = vpop.permute.xlu0 %3861
        %3864 = vst.msk [vmem:[#allocation2] sm:$0xff] %vm881, %v3862
        %3865 = vrot.lane.b32.xlu0 %v3635, 96
        %v3866 = vpop.permute.xlu0 %3865
        %3867 = vrot.lane.b32.xlu0 %v3635, 32
        %v3868 = vpop.permute.xlu0 %3867
        %v3870 = vsel %vm653, %v3866, 0
        %v3873 = vsel %vm653, %v3868, 0
        %3875 = vmatprep.subr.bf16.mxu0 0
        %3876 = vmatpush1.bf16.xpose.msra.mxu0 %v3873
        %3877 = vmatprep.subr.bf16.mxu0 0
        %3878 = vmatpush1.bf16.xpose.msra.mxu0 0
        %3879 = vmatprep.subr.bf16.mxu0 0
        %3880 = vmatpush1.bf16.xpose.msra.mxu0 0
        %3881 = vmatprep.subr.bf16.mxu0 0
        %3882 = vmatpush1.bf16.xpose.msra.mxu0 0
        %3883 = vmatprep.subr.bf16.mxu0 0
        %3884 = vmatpush1.bf16.xpose.msra.mxu0 0
        %3885 = vmatprep.subr.bf16.mxu0 0
        %3886 = vmatpush1.bf16.xpose.msra.mxu0 0
        %3887 = vmatprep.subr.bf16.mxu0 0
        %3888 = vmatpush1.bf16.xpose.msra.mxu0 0
        %3889 = vmatprep.subr.bf16.mxu0 0
        %3890 = vmatpush1.bf16.xpose.msra.mxu0 0
        %3891 = vmatprep.subr.bf16.mxu0 0
        %3892 = vmatpush1.bf16.xpose.msra.mxu0 0
        %3893 = vmatprep.subr.bf16.mxu0 0
        %3894 = vmatpush1.bf16.xpose.msra.mxu0 0
        %3895 = vmatprep.subr.bf16.mxu0 0
        %3896 = vmatpush1.bf16.xpose.msra.mxu0 0
        %3897 = vmatprep.subr.bf16.mxu0 0
        %3898 = vmatpush1.bf16.xpose.msra.mxu0 0
        %3899 = vmatprep.subr.bf16.mxu0 0
        %3900 = vmatpush1.bf16.xpose.msra.mxu0 0
        %3901 = vmatprep.subr.bf16.mxu0 0
        %3902 = vmatpush1.bf16.xpose.msra.mxu0 0
        %3903 = vmatprep.subr.bf16.mxu0 0
        %3904 = vmatpush1.bf16.xpose.msra.mxu0 0
        %3905 = vmatprep.subr.bf16.mxu0 0
        %3906 = vmatpush1.bf16.xpose.msra.mxu0 0
        %3907 = vmatprep.mubr.bf16.mxu0 0
        %3908 = vmatmul.mubr.bf16.gmra.mrb[0].mxu0 %v3870
        %v3909 = vpop.f32.mrb[0].mxu0
        %v3910 = vadd.f32 0.0, %v3909
        %v3911 = vpop.f32.mrb[0].mxu0
        %v3912 = vpop.f32.mrb[0].mxu0
        %v3913 = vpop.f32.mrb[0].mxu0
        %3914 = vdwg.mxu0
        %v3915 = vmul.f32 %v3910, 0.125
        %v3916 = vadd.f32 %v3915, %v524
        %v3917 = vsel %vm702, %v3916, -inf
        %3918 = vmax.xlane.f32.xlu0 %v3917
        %v3919 = vpop.xlane.xlu0 %3918
        %v3920 = vsub.f32 %v3916, %v3919
        %v3921 = vmul.f32 %v3920, 1.442695
        %v3922 = vpow.pop %v3921
        %v3923 = vsel %vm702, %v3922, 0.0
        %3924 = vadd.xlane.f32.xlu0 %v3923
        %v3925 = vpop.xlane.xlu0 %3924
        %v3926 = vrcp.pop %v3925
        %v3927 = vmul.f32 %v3922, %v3926
        %v3928 = vpack.c.bf16 %v3927, %v3927
        %3929 = vrot.lane.b32.xlu0 %v3699, 96
        %v3930 = vpop.permute.xlu0 %3929
        %v3932 = vsel %vm702, %v3928, 0
        %v3935 = vsel %vm719, %v3930, 0
        %3937 = vmatprep.subr.bf16.mxu0 0
        %3938 = vmatpush1.bf16.msra.mxu0 %v3935
        %3939 = vmatprep.subr.bf16.mxu0 0
        %3940 = vmatpush1.bf16.msra.mxu0 0
        %3941 = vmatprep.subr.bf16.mxu0 0
        %3942 = vmatpush1.bf16.msra.mxu0 0
        %3943 = vmatprep.subr.bf16.mxu0 0
        %3944 = vmatpush1.bf16.msra.mxu0 0
        %3945 = vmatprep.subr.bf16.mxu0 0
        %3946 = vmatpush1.bf16.msra.mxu0 0
        %3947 = vmatprep.subr.bf16.mxu0 0
        %3948 = vmatpush1.bf16.msra.mxu0 0
        %3949 = vmatprep.subr.bf16.mxu0 0
        %3950 = vmatpush1.bf16.msra.mxu0 0
        %3951 = vmatprep.subr.bf16.mxu0 0
        %3952 = vmatpush1.bf16.msra.mxu0 0
        %3953 = vmatprep.subr.bf16.mxu0 0
        %3954 = vmatpush1.bf16.msra.mxu0 0
        %3955 = vmatprep.subr.bf16.mxu0 0
        %3956 = vmatpush1.bf16.msra.mxu0 0
        %3957 = vmatprep.subr.bf16.mxu0 0
        %3958 = vmatpush1.bf16.msra.mxu0 0
        %3959 = vmatprep.subr.bf16.mxu0 0
        %3960 = vmatpush1.bf16.msra.mxu0 0
        %3961 = vmatprep.subr.bf16.mxu0 0
        %3962 = vmatpush1.bf16.msra.mxu0 0
        %3963 = vmatprep.subr.bf16.mxu0 0
        %3964 = vmatpush1.bf16.msra.mxu0 0
        %3965 = vmatprep.subr.bf16.mxu0 0
        %3966 = vmatpush1.bf16.msra.mxu0 0
        %3967 = vmatprep.subr.bf16.mxu0 0
        %3968 = vmatpush1.bf16.msra.mxu0 0
        %3969 = vmatprep.mubr.bf16.mxu0 0
        %3970 = vmatmul.mubr.bf16.gmra.mrb[0].mxu0 %v3932
        %v3971 = vpop.f32.mrb[0].mxu0
        %v3972 = vadd.f32 0.0, %v3971
        %v3973 = vpop.f32.mrb[0].mxu0
        %v3974 = vpop.f32.mrb[0].mxu0
        %v3975 = vpop.f32.mrb[0].mxu0
        %3976 = vdwg.mxu0
        %3978 = vrot.lane.b32.xlu0 %v3972, 32
        %v3979 = vpop.permute.xlu0 %3978
        %3981 = vst.msk [vmem:[#allocation2] sm:$0xff] %vm999, %v3979
        %3982 = vrot.lane.b32.xlu0 %v3635, 80
        %v3983 = vpop.permute.xlu0 %3982
        %3984 = vrot.lane.b32.xlu0 %v3635, 16
        %v3985 = vpop.permute.xlu0 %3984
        %v3987 = vsel %vm653, %v3983, 0
        %v3990 = vsel %vm653, %v3985, 0
        %3992 = vmatprep.subr.bf16.mxu0 0
        %3993 = vmatpush1.bf16.xpose.msra.mxu0 %v3990
        %3994 = vmatprep.subr.bf16.mxu0 0
        %3995 = vmatpush1.bf16.xpose.msra.mxu0 0
        %3996 = vmatprep.subr.bf16.mxu0 0
        %3997 = vmatpush1.bf16.xpose.msra.mxu0 0
        %3998 = vmatprep.subr.bf16.mxu0 0
        %3999 = vmatpush1.bf16.xpose.msra.mxu0 0
        %4000 = vmatprep.subr.bf16.mxu0 0
        %4001 = vmatpush1.bf16.xpose.msra.mxu0 0
        %4002 = vmatprep.subr.bf16.mxu0 0
        %4003 = vmatpush1.bf16.xpose.msra.mxu0 0
        %4004 = vmatprep.subr.bf16.mxu0 0
        %4005 = vmatpush1.bf16.xpose.msra.mxu0 0
        %4006 = vmatprep.subr.bf16.mxu0 0
        %4007 = vmatpush1.bf16.xpose.msra.mxu0 0
        %4008 = vmatprep.subr.bf16.mxu0 0
        %4009 = vmatpush1.bf16.xpose.msra.mxu0 0
        %4010 = vmatprep.subr.bf16.mxu0 0
        %4011 = vmatpush1.bf16.xpose.msra.mxu0 0
        %4012 = vmatprep.subr.bf16.mxu0 0
        %4013 = vmatpush1.bf16.xpose.msra.mxu0 0
        %4014 = vmatprep.subr.bf16.mxu0 0
        %4015 = vmatpush1.bf16.xpose.msra.mxu0 0
        %4016 = vmatprep.subr.bf16.mxu0 0
        %4017 = vmatpush1.bf16.xpose.msra.mxu0 0
        %4018 = vmatprep.subr.bf16.mxu0 0
        %4019 = vmatpush1.bf16.xpose.msra.mxu0 0
        %4020 = vmatprep.subr.bf16.mxu0 0
        %4021 = vmatpush1.bf16.xpose.msra.mxu0 0
        %4022 = vmatprep.subr.bf16.mxu0 0
        %4023 = vmatpush1.bf16.xpose.msra.mxu0 0
        %4024 = vmatprep.mubr.bf16.mxu0 0
        %4025 = vmatmul.mubr.bf16.gmra.mrb[0].mxu0 %v3987
        %v4026 = vpop.f32.mrb[0].mxu0
        %v4027 = vadd.f32 0.0, %v4026
        %v4028 = vpop.f32.mrb[0].mxu0
        %v4029 = vpop.f32.mrb[0].mxu0
        %v4030 = vpop.f32.mrb[0].mxu0
        %4031 = vdwg.mxu0
        %v4032 = vmul.f32 %v4027, 0.125
        %v4033 = vadd.f32 %v4032, %v524
        %v4034 = vsel %vm702, %v4033, -inf
        %4035 = vmax.xlane.f32.xlu0 %v4034
        %v4036 = vpop.xlane.xlu0 %4035
        %v4037 = vsub.f32 %v4033, %v4036
        %v4038 = vmul.f32 %v4037, 1.442695
        %v4039 = vpow.pop %v4038
        %v4040 = vsel %vm702, %v4039, 0.0
        %4041 = vadd.xlane.f32.xlu0 %v4040
        %v4042 = vpop.xlane.xlu0 %4041
        %v4043 = vrcp.pop %v4042
        %v4044 = vmul.f32 %v4039, %v4043
        %v4045 = vpack.c.bf16 %v4044, %v4044
        %4046 = vrot.lane.b32.xlu0 %v3699, 80
        %v4047 = vpop.permute.xlu0 %4046
        %v4049 = vsel %vm702, %v4045, 0
        %v4052 = vsel %vm719, %v4047, 0
        %4054 = vmatprep.subr.bf16.mxu0 0
        %4055 = vmatpush1.bf16.msra.mxu0 %v4052
        %4056 = vmatprep.subr.bf16.mxu0 0
        %4057 = vmatpush1.bf16.msra.mxu0 0
        %4058 = vmatprep.subr.bf16.mxu0 0
        %4059 = vmatpush1.bf16.msra.mxu0 0
        %4060 = vmatprep.subr.bf16.mxu0 0
        %4061 = vmatpush1.bf16.msra.mxu0 0
        %4062 = vmatprep.subr.bf16.mxu0 0
        %4063 = vmatpush1.bf16.msra.mxu0 0
        %4064 = vmatprep.subr.bf16.mxu0 0
        %4065 = vmatpush1.bf16.msra.mxu0 0
        %4066 = vmatprep.subr.bf16.mxu0 0
        %4067 = vmatpush1.bf16.msra.mxu0 0
        %4068 = vmatprep.subr.bf16.mxu0 0
        %4069 = vmatpush1.bf16.msra.mxu0 0
        %4070 = vmatprep.subr.bf16.mxu0 0
        %4071 = vmatpush1.bf16.msra.mxu0 0
        %4072 = vmatprep.subr.bf16.mxu0 0
        %4073 = vmatpush1.bf16.msra.mxu0 0
        %4074 = vmatprep.subr.bf16.mxu0 0
        %4075 = vmatpush1.bf16.msra.mxu0 0
        %4076 = vmatprep.subr.bf16.mxu0 0
        %4077 = vmatpush1.bf16.msra.mxu0 0
        %4078 = vmatprep.subr.bf16.mxu0 0
        %4079 = vmatpush1.bf16.msra.mxu0 0
        %4080 = vmatprep.subr.bf16.mxu0 0
        %4081 = vmatpush1.bf16.msra.mxu0 0
        %4082 = vmatprep.subr.bf16.mxu0 0
        %4083 = vmatpush1.bf16.msra.mxu0 0
        %4084 = vmatprep.subr.bf16.mxu0 0
        %4085 = vmatpush1.bf16.msra.mxu0 0
        %4086 = vmatprep.mubr.bf16.mxu0 0
        %4087 = vmatmul.mubr.bf16.gmra.mrb[0].mxu0 %v4049
        %v4088 = vpop.f32.mrb[0].mxu0
        %v4089 = vadd.f32 0.0, %v4088
        %v4090 = vpop.f32.mrb[0].mxu0
        %v4091 = vpop.f32.mrb[0].mxu0
        %v4092 = vpop.f32.mrb[0].mxu0
        %4093 = vdwg.mxu0
        %4095 = vrot.lane.b32.xlu0 %v4089, 48
        %v4096 = vpop.permute.xlu0 %4095
        %4098 = vst.msk [vmem:[#allocation2] sm:$0xff] %vm1117, %v4096
        %v4099 = vld [vmem:[#allocation2] sm:$0xff]
        %v4100 = vpack.c.bf16 %v4099, %v4099
        %s4101 = scalar_lea.vmem %s4, 96
        %v4102 = vld [vmem:[%s4101] sm:$0xf]
        %v4103 = vld [vmem:[%s4101 + $0x4] sm:$0xf]
        %v4104 = vld [vmem:[%s4101 + $0x8] sm:$0xf]
        %v4105 = vld [vmem:[%s4101 + $0xc] sm:$0xf]
        %v4106 = vld [vmem:[%s4101 + $0x10] sm:$0xf]
        %v4107 = vld [vmem:[%s4101 + $0x14] sm:$0xf]
        %v4108 = vld [vmem:[%s4101 + $0x18] sm:$0xf]
        %v4109 = vld [vmem:[%s4101 + $0x1c] sm:$0xf]
        %s4110 = scalar_lea.vmem %s5, 3
        %v4111 = vld [vmem:[%s4110] sm:$0x1]
        %v4113 = vlaneseq
        %v4114 = vshrl.u32 %v4113, 7
        %v4115 = vsub.s32 0, %v4114
        %v4116 = vrot.slane %v4111, %v4115
        %v4126 = vunpack.c.l.b16 %v4102
        %v4127 = vunpack.c.l.b16 %v4103
        %v4128 = vunpack.c.l.b16 %v4104
        %v4129 = vunpack.c.l.b16 %v4105
        %v4130 = vunpack.c.l.b16 %v4106
        %v4131 = vunpack.c.l.b16 %v4107
        %v4132 = vunpack.c.l.b16 %v4108
        %v4133 = vunpack.c.l.b16 %v4109
        %v4134 = vpack.c.b16 %v4127, %v4126
        %v4135 = vpack.c.b16 %v4129, %v4128
        %v4136 = vpack.c.b16 %v4131, %v4130
        %v4137 = vpack.c.b16 %v4133, %v4132
        %v4143 = vsel %vm527, %v4100, 0
        %4145 = vmatprep.subr.bf16.mxu0 0
        %4146 = vmatpush1.bf16.msra.mxu0 %v4134
        %4147 = vmatprep.subr.bf16.mxu0 0
        %4148 = vmatpush1.bf16.msra.mxu0 %v4135
        %4149 = vmatprep.subr.bf16.mxu0 0
        %4150 = vmatpush1.bf16.msra.mxu0 %v4136
        %4151 = vmatprep.subr.bf16.mxu0 0
        %4152 = vmatpush1.bf16.msra.mxu0 %v4137
        %4153 = vmatprep.subr.bf16.mxu0 0
        %4154 = vmatpush1.bf16.msra.mxu0 0
        %4155 = vmatprep.subr.bf16.mxu0 0
        %4156 = vmatpush1.bf16.msra.mxu0 0
        %4157 = vmatprep.subr.bf16.mxu0 0
        %4158 = vmatpush1.bf16.msra.mxu0 0
        %4159 = vmatprep.subr.bf16.mxu0 0
        %4160 = vmatpush1.bf16.msra.mxu0 0
        %4161 = vmatprep.subr.bf16.mxu0 0
        %4162 = vmatpush1.bf16.msra.mxu0 0
        %4163 = vmatprep.subr.bf16.mxu0 0
        %4164 = vmatpush1.bf16.msra.mxu0 0
        %4165 = vmatprep.subr.bf16.mxu0 0
        %4166 = vmatpush1.bf16.msra.mxu0 0
        %4167 = vmatprep.subr.bf16.mxu0 0
        %4168 = vmatpush1.bf16.msra.mxu0 0
        %4169 = vmatprep.subr.bf16.mxu0 0
        %4170 = vmatpush1.bf16.msra.mxu0 0
        %4171 = vmatprep.subr.bf16.mxu0 0
        %4172 = vmatpush1.bf16.msra.mxu0 0
        %4173 = vmatprep.subr.bf16.mxu0 0
        %4174 = vmatpush1.bf16.msra.mxu0 0
        %4175 = vmatprep.subr.bf16.mxu0 0
        %4176 = vmatpush1.bf16.msra.mxu0 0
        %4177 = vmatprep.mubr.bf16.mxu0 0
        %4178 = vmatmul.mubr.bf16.gmra.mrb[0].mxu0 %v4143
        %v4179 = vpop.f32.mrb[0].mxu0
        %v4180 = vadd.f32 %v4116, %v4179
        %v4181 = vpop.f32.mrb[0].mxu0
        %v4182 = vpop.f32.mrb[0].mxu0
        %v4183 = vpop.f32.mrb[0].mxu0
        %4184 = vdwg.mxu0
        %v4185 = vadd.f32 %v3509, %v4180
        %s4186 = scalar_lea.vmem %s6, 3
        %v4187 = vld [vmem:[%s4186] sm:$0x1]
        %s4188 = scalar_lea.vmem %s7, 3
        %v4189 = vld [vmem:[%s4188] sm:$0x1]
        %v4190 = vsel %vm527, %v4185, 0.0
        %4191 = vadd.xlane.f32.xlu0 %v4190
        %v4192 = vpop.xlane.xlu0 %4191
        %v4193 = vmul.f32 %v4192, %v531
        %v4194 = vsub.f32 %v4185, %v4193
        %v4195 = vmul.f32 %v4194, %v4194
        %v4196 = vsel %vm527, %v4195, 0.0
        %4197 = vadd.xlane.f32.xlu0 %v4196
        %v4198 = vpop.xlane.xlu0 %4197
        %v4199 = vmul.f32 %v4198, %v531
        %v4200 = vadd.f32 %v4199, 1e-05
        %v4201 = vrsqrt.pop %v4200
        %v4202 = vmul.f32 %v4194, %v4201
        %v4204 = vlaneseq
        %v4205 = vshrl.u32 %v4204, 7
        %v4206 = vsub.s32 0, %v4205
        %v4207 = vrot.slane %v4187, %v4206
        %v4209 = vmul.f32 %v4202, %v4207
        %v4211 = vlaneseq
        %v4212 = vshrl.u32 %v4211, 7
        %v4213 = vsub.s32 0, %v4212
        %v4214 = vrot.slane %v4189, %v4213
        %v4216 = vadd.f32 %v4209, %v4214
        %v4217 = vpack.c.bf16 %v4216, %v4216
        %s4218 = scalar_lea.vmem %s8, 192
        %v4219 = vld [vmem:[%s4218] sm:$0xff]
        %v4220 = vld [vmem:[%s4218 + $0x8] sm:$0xff]
        %v4221 = vld [vmem:[%s4218 + $0x10] sm:$0xff]
        %v4222 = vld [vmem:[%s4218 + $0x18] sm:$0xff]
        %v4223 = vld [vmem:[%s4218 + $0x20] sm:$0xff]
        %v4224 = vld [vmem:[%s4218 + $0x28] sm:$0xff]
        %v4225 = vld [vmem:[%s4218 + $0x30] sm:$0xff]
        %v4226 = vld [vmem:[%s4218 + $0x38] sm:$0xff]
        %s4227 = scalar_lea.vmem %s9, 6
        %v4228 = vld [vmem:[%s4227] sm:$0x3]
        %v4230 = vlaneseq
        %v4231 = vshrl.u32 %v4230, 7
        %v4232 = vsub.s32 0, %v4231
        %v4233 = vrot.slane %v4228, %v4232
        %v4234 = vlaneseq
        %v4235 = vshrl.u32 %v4234, 7
        %v4236 = vsub.s32 1, %v4235
        %v4237 = vrot.slane %v4228, %v4236
        %v4248 = vunpack.c.l.b16 %v4219
        %v4249 = vunpack.c.h.b16 %v4219
        %v4250 = vunpack.c.l.b16 %v4220
        %v4251 = vunpack.c.h.b16 %v4220
        %v4252 = vunpack.c.l.b16 %v4221
        %v4253 = vunpack.c.h.b16 %v4221
        %v4254 = vunpack.c.l.b16 %v4222
        %v4255 = vunpack.c.h.b16 %v4222
        %v4256 = vunpack.c.l.b16 %v4223
        %v4257 = vunpack.c.h.b16 %v4223
        %v4258 = vunpack.c.l.b16 %v4224
        %v4259 = vunpack.c.h.b16 %v4224
        %v4260 = vunpack.c.l.b16 %v4225
        %v4261 = vunpack.c.h.b16 %v4225
        %v4262 = vunpack.c.l.b16 %v4226
        %v4263 = vunpack.c.h.b16 %v4226
        %v4264 = vpack.c.b16 %v4250, %v4248
        %v4265 = vpack.c.b16 %v4251, %v4249
        %v4266 = vpack.c.b16 %v4254, %v4252
        %v4267 = vpack.c.b16 %v4255, %v4253
        %v4268 = vpack.c.b16 %v4258, %v4256
        %v4269 = vpack.c.b16 %v4259, %v4257
        %v4270 = vpack.c.b16 %v4262, %v4260
        %v4271 = vpack.c.b16 %v4263, %v4261
        %v4281 = vsel %vm527, %v4217, 0
        %4283 = vmatprep.subr.bf16.mxu0 %v4265
        %4284 = vmatpush1.bf16.msra.mxu0 %v4264
        %4285 = vmatprep.subr.bf16.mxu0 %v4267
        %4286 = vmatpush1.bf16.msra.mxu0 %v4266
        %4287 = vmatprep.subr.bf16.mxu0 %v4269
        %4288 = vmatpush1.bf16.msra.mxu0 %v4268
        %4289 = vmatprep.subr.bf16.mxu0 %v4271
        %4290 = vmatpush1.bf16.msra.mxu0 %v4270
        %4291 = vmatprep.subr.bf16.mxu0 0
        %4292 = vmatpush1.bf16.msra.mxu0 0
        %4293 = vmatprep.subr.bf16.mxu0 0
        %4294 = vmatpush1.bf16.msra.mxu0 0
        %4295 = vmatprep.subr.bf16.mxu0 0
        %4296 = vmatpush1.bf16.msra.mxu0 0
        %4297 = vmatprep.subr.bf16.mxu0 0
        %4298 = vmatpush1.bf16.msra.mxu0 0
        %4299 = vmatprep.subr.bf16.mxu0 0
        %4300 = vmatpush1.bf16.msra.mxu0 0
        %4301 = vmatprep.subr.bf16.mxu0 0
        %4302 = vmatpush1.bf16.msra.mxu0 0
        %4303 = vmatprep.subr.bf16.mxu0 0
        %4304 = vmatpush1.bf16.msra.mxu0 0
        %4305 = vmatprep.subr.bf16.mxu0 0
        %4306 = vmatpush1.bf16.msra.mxu0 0
        %4307 = vmatprep.subr.bf16.mxu0 0
        %4308 = vmatpush1.bf16.msra.mxu0 0
        %4309 = vmatprep.subr.bf16.mxu0 0
        %4310 = vmatpush1.bf16.msra.mxu0 0
        %4311 = vmatprep.subr.bf16.mxu0 0
        %4312 = vmatpush1.bf16.msra.mxu0 0
        %4313 = vmatprep.subr.bf16.mxu0 0
        %4314 = vmatpush1.bf16.msra.mxu0 0
        %4315 = vmatprep.mubr.bf16.mxu0 0
        %4316 = vmatmul.mubr.bf16.gmra.mrb[0].mxu0 %v4281
        %v4317 = vpop.f32.mrb[0].mxu0
        %v4318 = vadd.f32 %v4233, %v4317
        %v4319 = vpop.f32.mrb[0].mxu0
        %v4320 = vadd.f32 %v4237, %v4319
        %v4321 = vpop.f32.mrb[0].mxu0
        %v4322 = vpop.f32.mrb[0].mxu0
        %4323 = vdwg.mxu0
        %v4324 = vmax.f32 %v4318, 0.0
        %v4325 = vmax.f32 %v4320, 0.0
        %v4326 = vpack.c.bf16 %v4324, %v4324
        %v4327 = vpack.c.bf16 %v4325, %v4325
        %s4328 = scalar_lea.vmem %s10, 384
        %v4329 = vld [vmem:[%s4328] sm:$0xf]
        %v4330 = vld [vmem:[%s4328 + $0x4] sm:$0xf]
        %v4331 = vld [vmem:[%s4328 + $0x8] sm:$0xf]
        %v4332 = vld [vmem:[%s4328 + $0xc] sm:$0xf]
        %v4333 = vld [vmem:[%s4328 + $0x10] sm:$0xf]
        %v4334 = vld [vmem:[%s4328 + $0x14] sm:$0xf]
        %v4335 = vld [vmem:[%s4328 + $0x18] sm:$0xf]
        %v4336 = vld [vmem:[%s4328 + $0x1c] sm:$0xf]
        %v4337 = vld [vmem:[%s4328 + $0x20] sm:$0xf]
        %v4338 = vld [vmem:[%s4328 + $0x24] sm:$0xf]
        %v4339 = vld [vmem:[%s4328 + $0x28] sm:$0xf]
        %v4340 = vld [vmem:[%s4328 + $0x2c] sm:$0xf]
        %v4341 = vld [vmem:[%s4328 + $0x30] sm:$0xf]
        %v4342 = vld [vmem:[%s4328 + $0x34] sm:$0xf]
        %v4343 = vld [vmem:[%s4328 + $0x38] sm:$0xf]
        %v4344 = vld [vmem:[%s4328 + $0x3c] sm:$0xf]
        %v4345 = vld [vmem:[%s4328 + $0x40] sm:$0xf]
        %v4346 = vld [vmem:[%s4328 + $0x44] sm:$0xf]
        %v4347 = vld [vmem:[%s4328 + $0x48] sm:$0xf]
        %v4348 = vld [vmem:[%s4328 + $0x4c] sm:$0xf]
        %v4349 = vld [vmem:[%s4328 + $0x50] sm:$0xf]
        %v4350 = vld [vmem:[%s4328 + $0x54] sm:$0xf]
        %v4351 = vld [vmem:[%s4328 + $0x58] sm:$0xf]
        %v4352 = vld [vmem:[%s4328 + $0x5c] sm:$0xf]
        %v4353 = vld [vmem:[%s4328 + $0x60] sm:$0xf]
        %v4354 = vld [vmem:[%s4328 + $0x64] sm:$0xf]
        %v4355 = vld [vmem:[%s4328 + $0x68] sm:$0xf]
        %v4356 = vld [vmem:[%s4328 + $0x6c] sm:$0xf]
        %v4357 = vld [vmem:[%s4328 + $0x70] sm:$0xf]
        %v4358 = vld [vmem:[%s4328 + $0x74] sm:$0xf]
        %v4359 = vld [vmem:[%s4328 + $0x78] sm:$0xf]
        %v4360 = vld [vmem:[%s4328 + $0x7c] sm:$0xf]
        %s4361 = scalar_lea.vmem %s11, 3
        %v4362 = vld [vmem:[%s4361] sm:$0x1]
        %v4364 = vlaneseq
        %v4365 = vshrl.u32 %v4364, 7
        %v4366 = vsub.s32 0, %v4365
        %v4367 = vrot.slane %v4362, %v4366
        %v4401 = vunpack.c.l.b16 %v4329
        %v4402 = vunpack.c.l.b16 %v4330
        %v4403 = vunpack.c.l.b16 %v4331
        %v4404 = vunpack.c.l.b16 %v4332
        %v4405 = vunpack.c.l.b16 %v4333
        %v4406 = vunpack.c.l.b16 %v4334
        %v4407 = vunpack.c.l.b16 %v4335
        %v4408 = vunpack.c.l.b16 %v4336
        %v4409 = vunpack.c.l.b16 %v4337
        %v4410 = vunpack.c.l.b16 %v4338
        %v4411 = vunpack.c.l.b16 %v4339
        %v4412 = vunpack.c.l.b16 %v4340
        %v4413 = vunpack.c.l.b16 %v4341
        %v4414 = vunpack.c.l.b16 %v4342
        %v4415 = vunpack.c.l.b16 %v4343
        %v4416 = vunpack.c.l.b16 %v4344
        %v4417 = vunpack.c.l.b16 %v4345
        %v4418 = vunpack.c.l.b16 %v4346
        %v4419 = vunpack.c.l.b16 %v4347
        %v4420 = vunpack.c.l.b16 %v4348
        %v4421 = vunpack.c.l.b16 %v4349
        %v4422 = vunpack.c.l.b16 %v4350
        %v4423 = vunpack.c.l.b16 %v4351
        %v4424 = vunpack.c.l.b16 %v4352
        %v4425 = vunpack.c.l.b16 %v4353
        %v4426 = vunpack.c.l.b16 %v4354
        %v4427 = vunpack.c.l.b16 %v4355
        %v4428 = vunpack.c.l.b16 %v4356
        %v4429 = vunpack.c.l.b16 %v4357
        %v4430 = vunpack.c.l.b16 %v4358
        %v4431 = vunpack.c.l.b16 %v4359
        %v4432 = vunpack.c.l.b16 %v4360
        %v4433 = vpack.c.b16 %v4402, %v4401
        %v4434 = vpack.c.b16 %v4404, %v4403
        %v4435 = vpack.c.b16 %v4406, %v4405
        %v4436 = vpack.c.b16 %v4408, %v4407
        %v4437 = vpack.c.b16 %v4410, %v4409
        %v4438 = vpack.c.b16 %v4412, %v4411
        %v4439 = vpack.c.b16 %v4414, %v4413
        %v4440 = vpack.c.b16 %v4416, %v4415
        %v4441 = vpack.c.b16 %v4418, %v4417
        %v4442 = vpack.c.b16 %v4420, %v4419
        %v4443 = vpack.c.b16 %v4422, %v4421
        %v4444 = vpack.c.b16 %v4424, %v4423
        %v4445 = vpack.c.b16 %v4426, %v4425
        %v4446 = vpack.c.b16 %v4428, %v4427
        %v4447 = vpack.c.b16 %v4430, %v4429
        %v4448 = vpack.c.b16 %v4432, %v4431
        %4465 = vmatprep.subr.bf16.mxu0 0
        %4466 = vmatpush1.bf16.msra.mxu0 %v4433
        %4467 = vmatprep.subr.bf16.mxu0 0
        %4468 = vmatpush1.bf16.msra.mxu0 %v4434
        %4469 = vmatprep.subr.bf16.mxu0 0
        %4470 = vmatpush1.bf16.msra.mxu0 %v4435
        %4471 = vmatprep.subr.bf16.mxu0 0
        %4472 = vmatpush1.bf16.msra.mxu0 %v4436
        %4473 = vmatprep.subr.bf16.mxu0 0
        %4474 = vmatpush1.bf16.msra.mxu0 %v4437
        %4475 = vmatprep.subr.bf16.mxu0 0
        %4476 = vmatpush1.bf16.msra.mxu0 %v4438
        %4477 = vmatprep.subr.bf16.mxu0 0
        %4478 = vmatpush1.bf16.msra.mxu0 %v4439
        %4479 = vmatprep.subr.bf16.mxu0 0
        %4480 = vmatpush1.bf16.msra.mxu0 %v4440
        %4481 = vmatprep.subr.bf16.mxu0 0
        %4482 = vmatpush1.bf16.msra.mxu0 %v4441
        %4483 = vmatprep.subr.bf16.mxu0 0
        %4484 = vmatpush1.bf16.msra.mxu0 %v4442
        %4485 = vmatprep.subr.bf16.mxu0 0
        %4486 = vmatpush1.bf16.msra.mxu0 %v4443
        %4487 = vmatprep.subr.bf16.mxu0 0
        %4488 = vmatpush1.bf16.msra.mxu0 %v4444
        %4489 = vmatprep.subr.bf16.mxu0 0
        %4490 = vmatpush1.bf16.msra.mxu0 %v4445
        %4491 = vmatprep.subr.bf16.mxu0 0
        %4492 = vmatpush1.bf16.msra.mxu0 %v4446
        %4493 = vmatprep.subr.bf16.mxu0 0
        %4494 = vmatpush1.bf16.msra.mxu0 %v4447
        %4495 = vmatprep.subr.bf16.mxu0 0
        %4496 = vmatpush1.bf16.msra.mxu0 %v4448
        %4497 = vmatprep.mubr.bf16.mxu0 %v4327
        %4498 = vmatmul.mubr.bf16.gmra.mrb[0].mxu0 %v4326
        %v4499 = vpop.f32.mrb[0].mxu0
        %v4500 = vadd.f32 %v4367, %v4499
        %v4501 = vpop.f32.mrb[0].mxu0
        %v4502 = vpop.f32.mrb[0].mxu0
        %v4503 = vpop.f32.mrb[0].mxu0
        %4504 = vdwg.mxu0
        %v4505 = vadd.f32 %v4185, %v4500
        %v4506 = vld [vmem:[%s12] sm:$0x1]
        %v4507 = vld [vmem:[%s13] sm:$0x1]
        %v4508 = vsel %vm527, %v4505, 0.0
        %4509 = vadd.xlane.f32.xlu0 %v4508
        %v4510 = vpop.xlane.xlu0 %4509
        %v4511 = vmul.f32 %v4510, %v531
        %v4512 = vsub.f32 %v4505, %v4511
        %v4513 = vmul.f32 %v4512, %v4512
        %v4514 = vsel %vm527, %v4513, 0.0
        %4515 = vadd.xlane.f32.xlu0 %v4514
        %v4516 = vpop.xlane.xlu0 %4515
        %v4517 = vmul.f32 %v4516, %v531
        %v4518 = vadd.f32 %v4517, 1e-05
        %v4519 = vrsqrt.pop %v4518
        %v4520 = vmul.f32 %v4512, %v4519
        %v4522 = vlaneseq
        %v4523 = vshrl.u32 %v4522, 7
        %v4524 = vsub.s32 0, %v4523
        %v4525 = vrot.slane %v4506, %v4524
        %v4527 = vmul.f32 %v4520, %v4525
        %v4529 = vlaneseq
        %v4530 = vshrl.u32 %v4529, 7
        %v4531 = vsub.s32 0, %v4530
        %v4532 = vrot.slane %v4507, %v4531
        %v4534 = vadd.f32 %v4527, %v4532
        %v4535 = vpack.c.bf16 %v4534, %v4534
        %v4536 = vld [vmem:[%s14] sm:$0xf]
        %v4537 = vld [vmem:[%s14 + $0x4] sm:$0xf]
        %v4538 = vld [vmem:[%s14 + $0x8] sm:$0xf]
        %v4539 = vld [vmem:[%s14 + $0xc] sm:$0xf]
        %v4540 = vld [vmem:[%s14 + $0x10] sm:$0xf]
        %v4541 = vld [vmem:[%s14 + $0x14] sm:$0xf]
        %v4542 = vld [vmem:[%s14 + $0x18] sm:$0xf]
        %v4543 = vld [vmem:[%s14 + $0x1c] sm:$0xf]
        %v4544 = vld [vmem:[%s15] sm:$0x1]
        %v4546 = vlaneseq
        %v4547 = vshrl.u32 %v4546, 7
        %v4548 = vsub.s32 0, %v4547
        %v4549 = vrot.slane %v4544, %v4548
        %v4559 = vunpack.c.l.b16 %v4536
        %v4560 = vunpack.c.l.b16 %v4537
        %v4561 = vunpack.c.l.b16 %v4538
        %v4562 = vunpack.c.l.b16 %v4539
        %v4563 = vunpack.c.l.b16 %v4540
        %v4564 = vunpack.c.l.b16 %v4541
        %v4565 = vunpack.c.l.b16 %v4542
        %v4566 = vunpack.c.l.b16 %v4543
        %v4567 = vpack.c.b16 %v4560, %v4559
        %v4568 = vpack.c.b16 %v4562, %v4561
        %v4569 = vpack.c.b16 %v4564, %v4563
        %v4570 = vpack.c.b16 %v4566, %v4565
        %v4576 = vsel %vm527, %v4535, 0
        %4578 = vmatprep.subr.bf16.mxu0 0
        %4579 = vmatpush1.bf16.msra.mxu0 %v4567
        %4580 = vmatprep.subr.bf16.mxu0 0
        %4581 = vmatpush1.bf16.msra.mxu0 %v4568
        %4582 = vmatprep.subr.bf16.mxu0 0
        %4583 = vmatpush1.bf16.msra.mxu0 %v4569
        %4584 = vmatprep.subr.bf16.mxu0 0
        %4585 = vmatpush1.bf16.msra.mxu0 %v4570
        %4586 = vmatprep.subr.bf16.mxu0 0
        %4587 = vmatpush1.bf16.msra.mxu0 0
        %4588 = vmatprep.subr.bf16.mxu0 0
        %4589 = vmatpush1.bf16.msra.mxu0 0
        %4590 = vmatprep.subr.bf16.mxu0 0
        %4591 = vmatpush1.bf16.msra.mxu0 0
        %4592 = vmatprep.subr.bf16.mxu0 0
        %4593 = vmatpush1.bf16.msra.mxu0 0
        %4594 = vmatprep.subr.bf16.mxu0 0
        %4595 = vmatpush1.bf16.msra.mxu0 0
        %4596 = vmatprep.subr.bf16.mxu0 0
        %4597 = vmatpush1.bf16.msra.mxu0 0
        %4598 = vmatprep.subr.bf16.mxu0 0
        %4599 = vmatpush1.bf16.msra.mxu0 0
        %4600 = vmatprep.subr.bf16.mxu0 0
        %4601 = vmatpush1.bf16.msra.mxu0 0
        %4602 = vmatprep.subr.bf16.mxu0 0
        %4603 = vmatpush1.bf16.msra.mxu0 0
        %4604 = vmatprep.subr.bf16.mxu0 0
        %4605 = vmatpush1.bf16.msra.mxu0 0
        %4606 = vmatprep.subr.bf16.mxu0 0
        %4607 = vmatpush1.bf16.msra.mxu0 0
        %4608 = vmatprep.subr.bf16.mxu0 0
        %4609 = vmatpush1.bf16.msra.mxu0 0
        %4610 = vmatprep.mubr.bf16.mxu0 0
        %4611 = vmatmul.mubr.bf16.gmra.mrb[0].mxu0 %v4576
        %v4612 = vpop.f32.mrb[0].mxu0
        %v4613 = vadd.f32 %v4549, %v4612
        %v4614 = vpop.f32.mrb[0].mxu0
        %v4615 = vpop.f32.mrb[0].mxu0
        %v4616 = vpop.f32.mrb[0].mxu0
        %4617 = vdwg.mxu0
        %4618 = vst [vmem:[%s512] sm:$0xff] %v4613
        %s4619 = sand.u32 %s379, 1
        %s4620 = scalar_lea.sflag [#allocation4], %s4619
        %s4621 = sand.u32 %s379, 1
        %s4622 = smul.addr %s4621, 8
        %s4623 = scalar_lea.vmem [#allocation3], %s4622
        // Predicated region
        $region85: #{tpu_custom_call.1} parent=83 // pred_check
          %p4624 = pneg %p389
        $region86: #{tpu_custom_call.1} parent=83 // pred_check_branch
          %4626 = sbr.rel (%p4624) target = $region88
        $region87: #{tpu_custom_call.1} parent=83 // pred_region
          %s4628 = ssub.s32 128, 128
          %4629 = vsyncadd %s4620, %s4628
          %s4630 = smul.addr %s30, 128
          %s4631 = scalar_lea.hbm %s16, %s4630
          %s4633 = sshll.u32 %s4623, 4
          %s4634 = int_to_ptr.vmem [resolvable:$true] %s4633
          %4636 = dma.vmem_to_hbm [thread:$0]  %s4634, 128, %s4631, %s4620
        $region88: #{tpu_custom_call.1} parent=83 // pred_fallthru
          _
      $region84: #{tpu_custom_call.1} parent=5 // pred_fallthru
        _
      %p4637 = scmp.le.s32.totalorder 2, %s25
      // Predicated region
      $region89: #{tpu_custom_call.1} parent=5 // pred_check
        %p4638 = pneg %p4637
      $region90: #{tpu_custom_call.1} parent=5 // pred_check_branch
        %4640 = sbr.rel (%p4638) target = $region92
      $region91: #{tpu_custom_call.1} parent=5 // pred_region
        %s4641 = ssub.s32 %s25, 2
        // Predicated region
        $region93: #{tpu_custom_call.1} parent=91 // pred_check
          %p4642 = pneg %p395
        $region94: #{tpu_custom_call.1} parent=91 // pred_check_branch
          %4644 = sbr.rel (%p4642) target = $region96
        $region95: #{tpu_custom_call.1} parent=91 // pred_region
          %s4645 = sand.u32 %s380, 1
          %s4646 = scalar_lea.sflag [#allocation4], %s4645
          %s4647 = sand.u32 %s380, 1
          %s4648 = smul.addr %s4647, 8
          %s4649 = scalar_lea.vmem [#allocation3], %s4648
          %4650 = dma.done %s4646, 128
        $region96: #{tpu_custom_call.1} parent=91 // pred_fallthru
          _
      $region92: #{tpu_custom_call.1} parent=5 // pred_fallthru
        _
    $region6: #{tpu_custom_call.1} parent=1 // loop_footer
      %s29 = sadd.s32 1, %s25
    $region7: #{tpu_custom_call.1} parent=1 // loop_footer_branch
      %24 = sbr.rel target = $region3
    $region8: #{tpu_custom_call.1} parent=1 // loop_exit
      _
    %4651 = vsyncpa [#allocation4], 1
    %s4652 = scalar_lea.sflag [#allocation4], 1
    %4653 = vsyncpa %s4652, 1

</llo_original>
